<compile_context>
chip_gen: v7x
topology: tpu7x:2x2x1
jax: 0.10.0
libtpu: 0.0.40
codegen_flags: <defaults>
</compile_context>

<pallas_src>
import math
import jax
import jax.numpy as jnp
from jax.experimental import pallas as pl
from jax.experimental.pallas import tpu as pltpu


_LANE = 128
_SUBLANE = 16                # bf16 packs 16 rows per vreg sublane group
_TB_MAX = 1024               # hard ceiling on the batch tile
_VMEM_BUDGET = 44 << 20      # tile-derivation budget (v7x: 64 MiB physical)
_VMEM_LIMIT_CAP = 48 << 20   # never ask Mosaic for more than this


def _round_up(n, m):
    return ((n + m - 1) // m) * m


def _pad_to(a, shape):
    return jnp.pad(a, [(0, t - s) for s, t in zip(a.shape, shape)])


# ----------------------------------------------------------------------------
# Kernel
# ----------------------------------------------------------------------------
def _sae_kernel(x_ref,
                e1w, e1b, e2w, e2b, e3w, e3b,
                d1w, d1b, d2w, d2b, d3w, d3b,
                p1w, p1b, p2w, p2b,
                recon_ref, logits_ref):
    f32, bf16 = jnp.float32, jnp.bfloat16

    def lin(a, w_ref, b_ref):
        # bf16 operands on the MXU, f32 accumulation, f32 bias add.
        return jnp.dot(a, w_ref[...], preferred_element_type=f32) + b_ref[...]

    # x arrives either f32 (no-pad fast path) or bf16 (padded path); the MXU
    # path is bf16 either way.
    x = x_ref[...].astype(bf16)                               # (TB, Din_p)

    # ---- encoder: Linear -> ReLU -> Linear -> ReLU -> Linear ----
    h = jnp.maximum(lin(x, e1w, e1b), 0.0).astype(bf16)
    h = jnp.maximum(lin(h, e2w, e2b), 0.0).astype(bf16)
    z = lin(h, e3w, e3b)                                      # f32 latent (no ReLU)
    z_b = z.astype(bf16)

    # ---- decoder: ReLU -> Linear -> ReLU -> Linear -> ReLU -> Linear ----
    d = jnp.maximum(z, 0.0).astype(bf16)
    d = jnp.maximum(lin(d, d1w, d1b), 0.0).astype(bf16)
    d = jnp.maximum(lin(d, d2w, d2b), 0.0).astype(bf16)
    recon = lin(d, d3w, d3b)

    # ---- prediction head (raw latent z): Linear -> ReLU -> Linear ----
    p = jnp.maximum(lin(z_b, p1w, p1b), 0.0).astype(bf16)
    logits = lin(p, p2w, p2b)

    recon_ref[...] = recon.astype(recon_ref.dtype)            # bf16 store
    logits_ref[...] = logits.astype(logits_ref.dtype)         # f32 store


# ----------------------------------------------------------------------------
# Batch-tile selection (VMEM-budget driven)
# ----------------------------------------------------------------------------
def _tile_cap_from_vmem(weight_bytes, input_dim_p, max_feat_p, nclass_p):
    """Largest batch tile (rows) that keeps the working set under the budget."""
    # Resident weights/biases are held in 2 pipeline buffers (constant index
    # map => DMA'd only once, but both buffers are allocated).
    fixed = 2 * weight_bytes
    per_row = (2 * input_dim_p * 4      # x tile (f32), double-buffered
               + 2 * input_dim_p * 2    # recon tile (bf16), double-buffered
               + 2 * nclass_p * 4       # logits tile (f32), double-buffered
               + 4 * input_dim_p        # f32 recon accumulator temporary
               + 8 * max_feat_p)        # headroom for bf16/f32 hidden activations
    avail = max(_VMEM_BUDGET - fixed, per_row * _SUBLANE)
    cap = (avail // per_row // _SUBLANE) * _SUBLANE
    cap = max(_SUBLANE, min(cap, _TB_MAX))
    return cap, fixed, per_row


def _choose_batch_tile(batch, cap):
    """Largest tile <= cap giving >=2 grid steps (feeds both v7x TensorCores)
    with bounded padding waste (<= tile/4); graceful fallback for tiny batches."""
    if batch <= _SUBLANE:
        return _SUBLANE
    single_step = None
    tb = cap
    while tb >= _SUBLANE:
        steps = -(-batch // tb)          # cdiv
        waste = steps * tb - batch
        if waste <= tb // 4:
            if steps >= 2:
                return tb
            if single_step is None:
                single_step = tb
        tb -= _SUBLANE
    return single_step if single_step is not None else _SUBLANE


# ----------------------------------------------------------------------------
# Wrapper
# ----------------------------------------------------------------------------
def supervised_autoencoder_forward(x, params):
    """x: (batch, input_dim) float; params: list of 8 (W, b), W (in, out), b (1, out)."""
    batch, input_dim = x.shape
    num_classes = params[7][0].shape[1]

    # Pad every feature dim to a multiple of 128 (lane width) and cast weights
    # to bf16 (MXU-native); biases stay f32 (added to the f32 accumulator).
    padded = []
    for w, b in params:
        din, dout = w.shape
        wp = _pad_to(w.astype(jnp.bfloat16),
                     (_round_up(din, _LANE), _round_up(dout, _LANE)))
        bp = _pad_to(b.astype(jnp.float32), (1, _round_up(dout, _LANE)))
        padded.append((wp, bp))

    input_dim_p = padded[0][0].shape[0]          # encoder-1 in dim (padded)
    nclass_p = padded[7][0].shape[1]             # pred-2 out dim (padded)
    max_feat_p = max(max(w.shape) for w, _ in padded)
    weight_bytes = sum(w.size * w.dtype.itemsize + b.size * b.dtype.itemsize
                       for w, b in padded)

    # Batch tile from the VMEM budget; prefer >=2 grid steps (v7x megacore).
    cap, fixed_vmem, per_row_vmem = _tile_cap_from_vmem(
        weight_bytes, input_dim_p, max_feat_p, nclass_p)
    tb = _choose_batch_tile(batch, cap)
    batch_p = _round_up(batch, tb)
    grid = (batch_p // tb,)

    # Skip the wrapper-side pad+cast HBM round trip when shapes already line up:
    # pass x in its original dtype and cast to bf16 inside the kernel.
    if batch_p == batch and input_dim_p == input_dim:
        xp = x
    else:
        xp = _pad_to(x.astype(jnp.bfloat16), (batch_p, input_dim_p))

    flat = [t for wb in padded for t in wb]

    # Resident weights/biases: whole-array blocks with a constant index map, so
    # each is DMA'd exactly once for the whole grid and stays in VMEM.
    def _resident_spec(a):
        return pl.BlockSpec(a.shape, lambda i, _nd=a.ndim: (0,) * _nd)

    in_specs = ([pl.BlockSpec((tb, input_dim_p), lambda i: (i, 0))]
                + [_resident_spec(a) for a in flat])
    out_specs = [
        pl.BlockSpec((tb, input_dim_p), lambda i: (i, 0)),
        pl.BlockSpec((tb, nclass_p), lambda i: (i, 0)),
    ]
    out_shape = (
        jax.ShapeDtypeStruct((batch_p, input_dim_p), jnp.bfloat16),  # recon (bf16)
        jax.ShapeDtypeStruct((batch_p, nclass_p), jnp.float32),      # logits (f32)
    )

    # VMEM limit from the actual working set, clamped for v7x (64 MiB physical).
    vmem_limit = int(min(_VMEM_LIMIT_CAP,
                         max(32 << 20,
                             fixed_vmem + tb * per_row_vmem + (2 << 20))))

    # Advisory cost estimate for the XLA scheduler.
    flops = 2 * batch_p * sum(w.shape[0] * w.shape[1] for w, _ in padded)
    bytes_accessed = (weight_bytes
                      + xp.size * xp.dtype.itemsize
                      + batch_p * input_dim_p * 2          # bf16 recon writeback
                      + batch_p * nclass_p * 4)            # f32 logits writeback
    cost = pl.CostEstimate(flops=flops, transcendentals=0,
                           bytes_accessed=bytes_accessed)

    recon_p, logits_p = pl.pallas_call(
        _sae_kernel,
        out_shape=out_shape,
        grid_spec=pltpu.PrefetchScalarGridSpec(
            num_scalar_prefetch=0,
            grid=grid,
            in_specs=in_specs,
            out_specs=out_specs,
        ),
        compiler_params=pltpu.CompilerParams(
            dimension_semantics=("parallel",),
            vmem_limit_bytes=vmem_limit,
        ),
        cost_estimate=cost,
    )(xp, *flat)

    # Slice the logical (unpadded) results back out; restore f32 for callers.
    recon = recon_p[:batch, :input_dim].astype(jnp.float32)
    logits = logits_p[:batch, :num_classes]
    return recon, logits


# ----------------------------------------------------------------------------
# Params / reference
# ----------------------------------------------------------------------------
def _init_linear(key, in_dim, out_dim):
    """PyTorch nn.Linear default init (uniform +-1/sqrt(in)); W returned as (in, out)."""
    kw, kb = jax.random.split(key)
    bound = 1.0 / math.sqrt(in_dim)
    w = jax.random.uniform(kw, (in_dim, out_dim), jnp.float32, -bound, bound)
    b = jax.random.uniform(kb, (1, out_dim), jnp.float32, -bound, bound)
    return w, b


def make_params(key, input_dim, latent_dim, hidden_layer_dim, pred_layer_dim,
                num_classes):
    dims = [
        # encoder
        (input_dim, hidden_layer_dim),
        (hidden_layer_dim, 600),
        (600, latent_dim),
        # decoder
        (latent_dim, 600),
        (600, hidden_layer_dim),
        (hidden_layer_dim, input_dim),
        # prediction head
        (latent_dim, pred_layer_dim),
        (pred_layer_dim, num_classes),
    ]
    keys = jax.random.split(key, len(dims))
    return [_init_linear(k, i, o) for k, (i, o) in zip(keys, dims)]


def _reference_forward(x, params):
    """JAX reference with the same bf16-weights / f32-accumulation numerics."""
    bf16, f32 = jnp.bfloat16, jnp.float32

    def lin(a, wb):
        w, b = wb
        return jnp.dot(a.astype(bf16), w.astype(bf16),
                       preferred_element_type=f32) + b.astype(f32)

    h = jnp.maximum(lin(x, params[0]), 0.0)
    h = jnp.maximum(lin(h, params[1]), 0.0)
    z = lin(h, params[2])
    d = jnp.maximum(z, 0.0)
    d = jnp.maximum(lin(d, params[3]), 0.0)
    d = jnp.maximum(lin(d, params[4]), 0.0)
    recon = lin(d, params[5])
    p = jnp.maximum(lin(z, params[6]), 0.0)
    logits = lin(p, params[7])
    return recon, logits


if __name__ == "__main__":
    # Small, module-consistent dims (600 inner width is hard-coded in the module).
    # batch=32, input_dim=512 exercise the no-pad x fast path and a >=2-step grid.
    batch = 32
    input_dim = 512
    latent_dim = 100
    hidden_layer_dim = 256
    pred_layer_dim = 50
    num_classes = 10

    key = jax.random.PRNGKey(0)
    k_x, k_p = jax.random.split(key)

    x = jax.random.normal(k_x, (batch, input_dim), jnp.float32)
    params = make_params(k_p, input_dim, latent_dim, hidden_layer_dim,
                         pred_layer_dim, num_classes)

    recon, logits = supervised_autoencoder_forward(x, params)
    jax.block_until_ready((recon, logits))

    ref_recon, ref_logits = _reference_forward(x, params)
    assert recon.shape == (batch, input_dim)
    assert logits.shape == (batch, num_classes)
    # recon additionally passes through a bf16 store (intentional); tolerance
    # covers the ~0.4% relative rounding on top of the shared bf16 matmul path.
    assert jnp.allclose(recon, ref_recon, rtol=1e-2, atol=2e-2), \
        float(jnp.max(jnp.abs(recon - ref_recon)))
    assert jnp.allclose(logits, ref_logits, rtol=1e-2, atol=1e-2), \
        float(jnp.max(jnp.abs(logits - ref_logits)))

    print("KERNEL_OK")
</pallas_src>

<mosaic_0001>
module attributes {stable_mosaic.version = 11 : i64} {
  func.func @_sae_kernel(%arg0: i32, %arg1: memref<16x512xf32, #tpu.memory_space<vmem>>, %arg2: memref<512x256xbf16, #tpu.memory_space<vmem>>, %arg3: memref<1x256xf32, #tpu.memory_space<vmem>>, %arg4: memref<256x640xbf16, #tpu.memory_space<vmem>>, %arg5: memref<1x640xf32, #tpu.memory_space<vmem>>, %arg6: memref<640x128xbf16, #tpu.memory_space<vmem>>, %arg7: memref<1x128xf32, #tpu.memory_space<vmem>>, %arg8: memref<128x640xbf16, #tpu.memory_space<vmem>>, %arg9: memref<1x640xf32, #tpu.memory_space<vmem>>, %arg10: memref<640x256xbf16, #tpu.memory_space<vmem>>, %arg11: memref<1x256xf32, #tpu.memory_space<vmem>>, %arg12: memref<256x512xbf16, #tpu.memory_space<vmem>>, %arg13: memref<1x512xf32, #tpu.memory_space<vmem>>, %arg14: memref<128x128xbf16, #tpu.memory_space<vmem>>, %arg15: memref<1x128xf32, #tpu.memory_space<vmem>>, %arg16: memref<128x128xbf16, #tpu.memory_space<vmem>>, %arg17: memref<1x128xf32, #tpu.memory_space<vmem>>, %arg18: memref<16x512xbf16, #tpu.memory_space<vmem>>, %arg19: memref<16x128xf32, #tpu.memory_space<vmem>>) attributes {dimension_semantics = [#tpu.dimension_semantics<parallel>], iteration_bounds = array<i64: 2>, scalar_prefetch = 0 : i64, scratch_operands = 0 : i64, tpu.core_type = #tpu.core_type<tc>, window_params = [{transform_indices = @transform_0, window_bounds = array<i64: 16, 512>}, {pipeline_mode = #tpu.pipeline_mode<synchronous>, transform_indices = @transform_1, window_bounds = array<i64: 512, 256>}, {pipeline_mode = #tpu.pipeline_mode<synchronous>, transform_indices = @transform_2, window_bounds = array<i64: 1, 256>}, {pipeline_mode = #tpu.pipeline_mode<synchronous>, transform_indices = @transform_3, window_bounds = array<i64: 256, 640>}, {pipeline_mode = #tpu.pipeline_mode<synchronous>, transform_indices = @transform_4, window_bounds = array<i64: 1, 640>}, {pipeline_mode = #tpu.pipeline_mode<synchronous>, transform_indices = @transform_5, window_bounds = array<i64: 640, 128>}, {pipeline_mode = #tpu.pipeline_mode<synchronous>, transform_indices = @transform_6, window_bounds = array<i64: 1, 128>}, {pipeline_mode = #tpu.pipeline_mode<synchronous>, transform_indices = @transform_7, window_bounds = array<i64: 128, 640>}, {pipeline_mode = #tpu.pipeline_mode<synchronous>, transform_indices = @transform_8, window_bounds = array<i64: 1, 640>}, {pipeline_mode = #tpu.pipeline_mode<synchronous>, transform_indices = @transform_9, window_bounds = array<i64: 640, 256>}, {pipeline_mode = #tpu.pipeline_mode<synchronous>, transform_indices = @transform_10, window_bounds = array<i64: 1, 256>}, {pipeline_mode = #tpu.pipeline_mode<synchronous>, transform_indices = @transform_11, window_bounds = array<i64: 256, 512>}, {pipeline_mode = #tpu.pipeline_mode<synchronous>, transform_indices = @transform_12, window_bounds = array<i64: 1, 512>}, {pipeline_mode = #tpu.pipeline_mode<synchronous>, transform_indices = @transform_13, window_bounds = array<i64: 128, 128>}, {pipeline_mode = #tpu.pipeline_mode<synchronous>, transform_indices = @transform_14, window_bounds = array<i64: 1, 128>}, {pipeline_mode = #tpu.pipeline_mode<synchronous>, transform_indices = @transform_15, window_bounds = array<i64: 128, 128>}, {pipeline_mode = #tpu.pipeline_mode<synchronous>, transform_indices = @transform_16, window_bounds = array<i64: 1, 128>}, {transform_indices = @transform_17, window_bounds = array<i64: 16, 512>}, {transform_indices = @transform_18, window_bounds = array<i64: 16, 128>}]} {
    %c0 = arith.constant 0 : index
    %c0_0 = arith.constant 0 : index
    %0 = vector.load %arg1[%c0, %c0_0] : memref<16x512xf32, #tpu.memory_space<vmem>>, vector<16x512xf32>
    %1 = arith.truncf %0 : vector<16x512xf32> to vector<16x512xbf16>
    %c0_1 = arith.constant 0 : index
    %c0_2 = arith.constant 0 : index
    %2 = vector.load %arg2[%c0_1, %c0_2] : memref<512x256xbf16, #tpu.memory_space<vmem>>, vector<512x256xbf16>
    %cst = arith.constant dense<0.000000e+00> : vector<16x256xf32>
    %3 = tpu.matmul %1, %2, %cst {dimension_numbers = #tpu.dot_dimension_numbers<[1], [0], [0], [1], [0, 0, 1, 1], [], []>} : vector<16x512xbf16>, vector<512x256xbf16>, vector<16x256xf32> -> vector<16x256xf32>
    %c0_3 = arith.constant 0 : index
    %c0_4 = arith.constant 0 : index
    %4 = vector.load %arg3[%c0_3, %c0_4] : memref<1x256xf32, #tpu.memory_space<vmem>>, vector<1x256xf32>
    %5 = vector.broadcast %4 : vector<1x256xf32> to vector<16x256xf32>
    %6 = arith.addf %3, %5 : vector<16x256xf32>
    %cst_5 = arith.constant 0.000000e+00 : f32
    %7 = vector.broadcast %cst_5 : f32 to vector<16x256xf32>
    %8 = arith.maximumf %6, %7 : vector<16x256xf32>
    %9 = arith.truncf %8 : vector<16x256xf32> to vector<16x256xbf16>
    %c0_6 = arith.constant 0 : index
    %c0_7 = arith.constant 0 : index
    %10 = vector.load %arg4[%c0_6, %c0_7] : memref<256x640xbf16, #tpu.memory_space<vmem>>, vector<256x640xbf16>
    %cst_8 = arith.constant dense<0.000000e+00> : vector<16x640xf32>
    %11 = tpu.matmul %9, %10, %cst_8 {dimension_numbers = #tpu.dot_dimension_numbers<[1], [0], [0], [1], [0, 0, 1, 1], [], []>} : vector<16x256xbf16>, vector<256x640xbf16>, vector<16x640xf32> -> vector<16x640xf32>
    %c0_9 = arith.constant 0 : index
    %c0_10 = arith.constant 0 : index
    %12 = vector.load %arg5[%c0_9, %c0_10] : memref<1x640xf32, #tpu.memory_space<vmem>>, vector<1x640xf32>
    %13 = vector.broadcast %12 : vector<1x640xf32> to vector<16x640xf32>
    %14 = arith.addf %11, %13 : vector<16x640xf32>
    %cst_11 = arith.constant 0.000000e+00 : f32
    %15 = vector.broadcast %cst_11 : f32 to vector<16x640xf32>
    %16 = arith.maximumf %14, %15 : vector<16x640xf32>
    %17 = arith.truncf %16 : vector<16x640xf32> to vector<16x640xbf16>
    %c0_12 = arith.constant 0 : index
    %c0_13 = arith.constant 0 : index
    %18 = vector.load %arg6[%c0_12, %c0_13] : memref<640x128xbf16, #tpu.memory_space<vmem>>, vector<640x128xbf16>
    %cst_14 = arith.constant dense<0.000000e+00> : vector<16x128xf32>
    %19 = tpu.matmul %17, %18, %cst_14 {dimension_numbers = #tpu.dot_dimension_numbers<[1], [0], [0], [1], [0, 0, 1, 1], [], []>} : vector<16x640xbf16>, vector<640x128xbf16>, vector<16x128xf32> -> vector<16x128xf32>
    %c0_15 = arith.constant 0 : index
    %c0_16 = arith.constant 0 : index
    %20 = vector.load %arg7[%c0_15, %c0_16] : memref<1x128xf32, #tpu.memory_space<vmem>>, vector<1x128xf32>
    %21 = vector.broadcast %20 : vector<1x128xf32> to vector<16x128xf32>
    %22 = arith.addf %19, %21 : vector<16x128xf32>
    %23 = arith.truncf %22 : vector<16x128xf32> to vector<16x128xbf16>
    %cst_17 = arith.constant 0.000000e+00 : f32
    %24 = vector.broadcast %cst_17 : f32 to vector<16x128xf32>
    %25 = arith.maximumf %22, %24 : vector<16x128xf32>
    %26 = arith.truncf %25 : vector<16x128xf32> to vector<16x128xbf16>
    %c0_18 = arith.constant 0 : index
    %c0_19 = arith.constant 0 : index
    %27 = vector.load %arg8[%c0_18, %c0_19] : memref<128x640xbf16, #tpu.memory_space<vmem>>, vector<128x640xbf16>
    %cst_20 = arith.constant dense<0.000000e+00> : vector<16x640xf32>
    %28 = tpu.matmul %26, %27, %cst_20 {dimension_numbers = #tpu.dot_dimension_numbers<[1], [0], [0], [1], [0, 0, 1, 1], [], []>} : vector<16x128xbf16>, vector<128x640xbf16>, vector<16x640xf32> -> vector<16x640xf32>
    %c0_21 = arith.constant 0 : index
    %c0_22 = arith.constant 0 : index
    %29 = vector.load %arg9[%c0_21, %c0_22] : memref<1x640xf32, #tpu.memory_space<vmem>>, vector<1x640xf32>
    %30 = vector.broadcast %29 : vector<1x640xf32> to vector<16x640xf32>
    %31 = arith.addf %28, %30 : vector<16x640xf32>
    %cst_23 = arith.constant 0.000000e+00 : f32
    %32 = vector.broadcast %cst_23 : f32 to vector<16x640xf32>
    %33 = arith.maximumf %31, %32 : vector<16x640xf32>
    %34 = arith.truncf %33 : vector<16x640xf32> to vector<16x640xbf16>
    %c0_24 = arith.constant 0 : index
    %c0_25 = arith.constant 0 : index
    %35 = vector.load %arg10[%c0_24, %c0_25] : memref<640x256xbf16, #tpu.memory_space<vmem>>, vector<640x256xbf16>
    %cst_26 = arith.constant dense<0.000000e+00> : vector<16x256xf32>
    %36 = tpu.matmul %34, %35, %cst_26 {dimension_numbers = #tpu.dot_dimension_numbers<[1], [0], [0], [1], [0, 0, 1, 1], [], []>} : vector<16x640xbf16>, vector<640x256xbf16>, vector<16x256xf32> -> vector<16x256xf32>
    %c0_27 = arith.constant 0 : index
    %c0_28 = arith.constant 0 : index
    %37 = vector.load %arg11[%c0_27, %c0_28] : memref<1x256xf32, #tpu.memory_space<vmem>>, vector<1x256xf32>
    %38 = vector.broadcast %37 : vector<1x256xf32> to vector<16x256xf32>
    %39 = arith.addf %36, %38 : vector<16x256xf32>
    %cst_29 = arith.constant 0.000000e+00 : f32
    %40 = vector.broadcast %cst_29 : f32 to vector<16x256xf32>
    %41 = arith.maximumf %39, %40 : vector<16x256xf32>
    %42 = arith.truncf %41 : vector<16x256xf32> to vector<16x256xbf16>
    %c0_30 = arith.constant 0 : index
    %c0_31 = arith.constant 0 : index
    %43 = vector.load %arg12[%c0_30, %c0_31] : memref<256x512xbf16, #tpu.memory_space<vmem>>, vector<256x512xbf16>
    %cst_32 = arith.constant dense<0.000000e+00> : vector<16x512xf32>
    %44 = tpu.matmul %42, %43, %cst_32 {dimension_numbers = #tpu.dot_dimension_numbers<[1], [0], [0], [1], [0, 0, 1, 1], [], []>} : vector<16x256xbf16>, vector<256x512xbf16>, vector<16x512xf32> -> vector<16x512xf32>
    %c0_33 = arith.constant 0 : index
    %c0_34 = arith.constant 0 : index
    %45 = vector.load %arg13[%c0_33, %c0_34] : memref<1x512xf32, #tpu.memory_space<vmem>>, vector<1x512xf32>
    %46 = vector.broadcast %45 : vector<1x512xf32> to vector<16x512xf32>
    %47 = arith.addf %44, %46 : vector<16x512xf32>
    %c0_35 = arith.constant 0 : index
    %c0_36 = arith.constant 0 : index
    %48 = vector.load %arg14[%c0_35, %c0_36] : memref<128x128xbf16, #tpu.memory_space<vmem>>, vector<128x128xbf16>
    %cst_37 = arith.constant dense<0.000000e+00> : vector<16x128xf32>
    %49 = tpu.matmul %23, %48, %cst_37 {dimension_numbers = #tpu.dot_dimension_numbers<[1], [0], [0], [1], [0, 0, 1, 1], [], []>} : vector<16x128xbf16>, vector<128x128xbf16>, vector<16x128xf32> -> vector<16x128xf32>
    %c0_38 = arith.constant 0 : index
    %c0_39 = arith.constant 0 : index
    %50 = vector.load %arg15[%c0_38, %c0_39] : memref<1x128xf32, #tpu.memory_space<vmem>>, vector<1x128xf32>
    %51 = vector.broadcast %50 : vector<1x128xf32> to vector<16x128xf32>
    %52 = arith.addf %49, %51 : vector<16x128xf32>
    %cst_40 = arith.constant 0.000000e+00 : f32
    %53 = vector.broadcast %cst_40 : f32 to vector<16x128xf32>
    %54 = arith.maximumf %52, %53 : vector<16x128xf32>
    %55 = arith.truncf %54 : vector<16x128xf32> to vector<16x128xbf16>
    %c0_41 = arith.constant 0 : index
    %c0_42 = arith.constant 0 : index
    %56 = vector.load %arg16[%c0_41, %c0_42] : memref<128x128xbf16, #tpu.memory_space<vmem>>, vector<128x128xbf16>
    %cst_43 = arith.constant dense<0.000000e+00> : vector<16x128xf32>
    %57 = tpu.matmul %55, %56, %cst_43 {dimension_numbers = #tpu.dot_dimension_numbers<[1], [0], [0], [1], [0, 0, 1, 1], [], []>} : vector<16x128xbf16>, vector<128x128xbf16>, vector<16x128xf32> -> vector<16x128xf32>
    %c0_44 = arith.constant 0 : index
    %c0_45 = arith.constant 0 : index
    %58 = vector.load %arg17[%c0_44, %c0_45] : memref<1x128xf32, #tpu.memory_space<vmem>>, vector<1x128xf32>
    %59 = vector.broadcast %58 : vector<1x128xf32> to vector<16x128xf32>
    %60 = arith.addf %57, %59 : vector<16x128xf32>
    %61 = arith.truncf %47 : vector<16x512xf32> to vector<16x512xbf16>
    %c0_46 = arith.constant 0 : index
    %c0_47 = arith.constant 0 : index
    %62 = vector.load %arg18[%c0_46, %c0_47] : memref<16x512xbf16, #tpu.memory_space<vmem>>, vector<16x512xbf16>
    tpu.vector_store %arg18[%c0_46, %c0_47], %61 {strides = array<i32>} : memref<16x512xbf16, #tpu.memory_space<vmem>>, vector<16x512xbf16>,
    %c0_48 = arith.constant 0 : index
    %c0_49 = arith.constant 0 : index
    %63 = vector.load %arg19[%c0_48, %c0_49] : memref<16x128xf32, #tpu.memory_space<vmem>>, vector<16x128xf32>
    tpu.vector_store %arg19[%c0_48, %c0_49], %60 {strides = array<i32>} : memref<16x128xf32, #tpu.memory_space<vmem>>, vector<16x128xf32>,
    return
  }
  func.func @transform_0(%arg0: i32) -> (i32, i32) {
    %c0_i32 = arith.constant 0 : i32
    %c0_i32_0 = arith.constant 0 : i32
    return %arg0, %c0_i32 : i32, i32
  }
  func.func @transform_1(%arg0: i32) -> (i32, i32) {
    %c0_i32 = arith.constant 0 : i32
    %c0_i32_0 = arith.constant 0 : i32
    %c0_i32_1 = arith.constant 0 : i32
    return %c0_i32, %c0_i32_0 : i32, i32
  }
  func.func @transform_2(%arg0: i32) -> (i32, i32) {
    %c0_i32 = arith.constant 0 : i32
    %c0_i32_0 = arith.constant 0 : i32
    %c0_i32_1 = arith.constant 0 : i32
    return %c0_i32, %c0_i32_0 : i32, i32
  }
  func.func @transform_3(%arg0: i32) -> (i32, i32) {
    %c0_i32 = arith.constant 0 : i32
    %c0_i32_0 = arith.constant 0 : i32
    %c0_i32_1 = arith.constant 0 : i32
    return %c0_i32, %c0_i32_0 : i32, i32
  }
  func.func @transform_4(%arg0: i32) -> (i32, i32) {
    %c0_i32 = arith.constant 0 : i32
    %c0_i32_0 = arith.constant 0 : i32
    %c0_i32_1 = arith.constant 0 : i32
    return %c0_i32, %c0_i32_0 : i32, i32
  }
  func.func @transform_5(%arg0: i32) -> (i32, i32) {
    %c0_i32 = arith.constant 0 : i32
    %c0_i32_0 = arith.constant 0 : i32
    %c0_i32_1 = arith.constant 0 : i32
    return %c0_i32, %c0_i32_0 : i32, i32
  }
  func.func @transform_6(%arg0: i32) -> (i32, i32) {
    %c0_i32 = arith.constant 0 : i32
    %c0_i32_0 = arith.constant 0 : i32
    %c0_i32_1 = arith.constant 0 : i32
    return %c0_i32, %c0_i32_0 : i32, i32
  }
  func.func @transform_7(%arg0: i32) -> (i32, i32) {
    %c0_i32 = arith.constant 0 : i32
    %c0_i32_0 = arith.constant 0 : i32
    %c0_i32_1 = arith.constant 0 : i32
    return %c0_i32, %c0_i32_0 : i32, i32
  }
  func.func @transform_8(%arg0: i32) -> (i32, i32) {
    %c0_i32 = arith.constant 0 : i32
    %c0_i32_0 = arith.constant 0 : i32
    %c0_i32_1 = arith.constant 0 : i32
    return %c0_i32, %c0_i32_0 : i32, i32
  }
  func.func @transform_9(%arg0: i32) -> (i32, i32) {
    %c0_i32 = arith.constant 0 : i32
    %c0_i32_0 = arith.constant 0 : i32
    %c0_i32_1 = arith.constant 0 : i32
    return %c0_i32, %c0_i32_0 : i32, i32
  }
  func.func @transform_10(%arg0: i32) -> (i32, i32) {
    %c0_i32 = arith.constant 0 : i32
    %c0_i32_0 = arith.constant 0 : i32
    %c0_i32_1 = arith.constant 0 : i32
    return %c0_i32, %c0_i32_0 : i32, i32
  }
  func.func @transform_11(%arg0: i32) -> (i32, i32) {
    %c0_i32 = arith.constant 0 : i32
    %c0_i32_0 = arith.constant 0 : i32
    %c0_i32_1 = arith.constant 0 : i32
    return %c0_i32, %c0_i32_0 : i32, i32
  }
  func.func @transform_12(%arg0: i32) -> (i32, i32) {
    %c0_i32 = arith.constant 0 : i32
    %c0_i32_0 = arith.constant 0 : i32
    %c0_i32_1 = arith.constant 0 : i32
    return %c0_i32, %c0_i32_0 : i32, i32
  }
  func.func @transform_13(%arg0: i32) -> (i32, i32) {
    %c0_i32 = arith.constant 0 : i32
    %c0_i32_0 = arith.constant 0 : i32
    %c0_i32_1 = arith.constant 0 : i32
    return %c0_i32, %c0_i32_0 : i32, i32
  }
  func.func @transform_14(%arg0: i32) -> (i32, i32) {
    %c0_i32 = arith.constant 0 : i32
    %c0_i32_0 = arith.constant 0 : i32
    %c0_i32_1 = arith.constant 0 : i32
    return %c0_i32, %c0_i32_0 : i32, i32
  }
  func.func @transform_15(%arg0: i32) -> (i32, i32) {
    %c0_i32 = arith.constant 0 : i32
    %c0_i32_0 = arith.constant 0 : i32
    %c0_i32_1 = arith.constant 0 : i32
    return %c0_i32, %c0_i32_0 : i32, i32
  }
  func.func @transform_16(%arg0: i32) -> (i32, i32) {
    %c0_i32 = arith.constant 0 : i32
    %c0_i32_0 = arith.constant 0 : i32
    %c0_i32_1 = arith.constant 0 : i32
    return %c0_i32, %c0_i32_0 : i32, i32
  }
  func.func @transform_17(%arg0: i32) -> (i32, i32) {
    %c0_i32 = arith.constant 0 : i32
    %c0_i32_0 = arith.constant 0 : i32
    return %arg0, %c0_i32 : i32, i32
  }
  func.func @transform_18(%arg0: i32) -> (i32, i32) {
    %c0_i32 = arith.constant 0 : i32
    %c0_i32_0 = arith.constant 0 : i32
    return %arg0, %c0_i32 : i32, i32
  }
}

</mosaic_0001>

<llo_original>
// kernel: tpu_custom_call.1
$region0: #{tpu_custom_call.1}
  #allocation0 [shape = 'u32[]', space=smem, size = 0x4, offset = 0x4, fixed_abs, tag = 'smem constant byte address 0x4 - core index']
  #allocation1 [shape = 'u32[144,128]{1,0:T(1,128)}', space=vmem, size = 0x12000, scoped, tag = 'internal scratch']
  %s0 = inlined_call_operand.hbm [shape: f32[32,512], index: 0, kind: input, shape index: {}]
  %s1 = inlined_call_operand.hbm [shape: bf16[512,256], index: 1, kind: input, shape index: {}]
  %s2 = inlined_call_operand.hbm [shape: f32[1,256], index: 2, kind: input, shape index: {}]
  %s3 = inlined_call_operand.hbm [shape: bf16[256,640], index: 3, kind: input, shape index: {}]
  %s4 = inlined_call_operand.vmem [shape: f32[1,640], index: 4, kind: input, shape index: {}]
  %s5 = inlined_call_operand.hbm [shape: bf16[640,128], index: 5, kind: input, shape index: {}]
  %s6 = inlined_call_operand.vmem [shape: f32[1,128], index: 6, kind: input, shape index: {}]
  %s7 = inlined_call_operand.hbm [shape: bf16[128,640], index: 7, kind: input, shape index: {}]
  %s8 = inlined_call_operand.vmem [shape: f32[1,640], index: 8, kind: input, shape index: {}]
  %s9 = inlined_call_operand.hbm [shape: bf16[640,256], index: 9, kind: input, shape index: {}]
  %s10 = inlined_call_operand.vmem [shape: f32[1,256], index: 10, kind: input, shape index: {}]
  %s11 = inlined_call_operand.hbm [shape: bf16[256,512], index: 11, kind: input, shape index: {}]
  %s12 = inlined_call_operand.vmem [shape: f32[1,512], index: 12, kind: input, shape index: {}]
  %s13 = inlined_call_operand.hbm [shape: bf16[128,128], index: 13, kind: input, shape index: {}]
  %s14 = inlined_call_operand.vmem [shape: f32[1,128], index: 14, kind: input, shape index: {}]
  %s15 = inlined_call_operand.hbm [shape: bf16[128,128], index: 15, kind: input, shape index: {}]
  %s16 = inlined_call_operand.vmem [shape: f32[1,128], index: 16, kind: input, shape index: {}]
  %s17 = inlined_call_operand.hbm [shape: bf16[32,512], index: 17, kind: output, shape index: {0}]
  %s18 = inlined_call_operand.hbm [shape: f32[32,128], index: 18, kind: output, shape index: {1}]
  %19 = xla_tuple %s17, %s18
  %s20 = sld [smem:[#allocation0]]
  $region149: #{tpu_custom_call.1} parent=0
    _
  %s22 = ssub.s32 1, %s20
  %s23 = scalar_select 0, %s22, %s20
  $region1: #{tpu_custom_call.1} parent=0
    #allocation2 [shape = 'u8[65536]{0}', space=vmem, size = 0x10000, scoped, tag = 'input window, operand 0']
    #allocation3 [shape = 's32[2]{0}', space=sflag, size = 0x8, scoped, tag = 'scoped memory for tpu_custom_call.1']
    #allocation4 [shape = 's32[2]{0}', space=sflag, size = 0x8, scoped, tag = 'scoped memory for tpu_custom_call.1']
    #allocation5 [shape = 'u8[262144]{0}', space=vmem, size = 0x40000, scoped, tag = 'input window, operand 1, single buffered']
    #allocation6 [shape = 's32[1]{0}', space=sflag, size = 0x4, scoped, tag = 'scoped memory for tpu_custom_call.1']
    #allocation7 [shape = 'u8[1024]{0}', space=vmem, size = 0x400, scoped, tag = 'input window, operand 2, single buffered']
    #allocation8 [shape = 'u8[327680]{0}', space=vmem, size = 0x50000, scoped, tag = 'input window, operand 3, single buffered']
    #allocation9 [shape = 's32[1]{0}', space=sflag, size = 0x4, scoped, tag = 'scoped memory for tpu_custom_call.1']
    #allocation10 [shape = 'u8[163840]{0}', space=vmem, size = 0x28000, scoped, tag = 'input window, operand 5, single buffered']
    #allocation11 [shape = 'u8[163840]{0}', space=vmem, size = 0x28000, scoped, tag = 'input window, operand 7, single buffered']
    #allocation12 [shape = 's32[1]{0}', space=sflag, size = 0x4, scoped, tag = 'scoped memory for tpu_custom_call.1']
    #allocation13 [shape = 'u8[327680]{0}', space=vmem, size = 0x50000, scoped, tag = 'input window, operand 9, single buffered']
    #allocation14 [shape = 'u8[262144]{0}', space=vmem, size = 0x40000, scoped, tag = 'input window, operand 11, single buffered']
    #allocation15 [shape = 's32[1]{0}', space=sflag, size = 0x4, scoped, tag = 'scoped memory for tpu_custom_call.1']
    #allocation16 [shape = 'u8[32768]{0}', space=vmem, size = 0x8000, scoped, tag = 'input window, operand 13, single buffered']
    #allocation17 [shape = 'u8[32768]{0}', space=vmem, size = 0x8000, scoped, tag = 'input window, operand 15, single buffered']
    #allocation18 [shape = 's32[1]{0}', space=sflag, size = 0x4, scoped, tag = 'scoped memory for tpu_custom_call.1']
    #allocation19 [shape = 'u8[32768]{0}', space=vmem, size = 0x8000, scoped, tag = 'output window, operand 0']
    #allocation20 [shape = 'u8[16384]{0}', space=vmem, size = 0x4000, scoped, tag = 'output window, operand 1']
    #allocation21 [shape = 's32[2]{0}', space=sflag, size = 0x8, scoped, tag = 'scoped memory for tpu_custom_call.1']
    %24 = vsyncpa [#allocation3], 0
    %s25 = scalar_lea.sflag [#allocation3], 1
    %26 = vsyncpa %s25, 0
    %27 = vsyncpa [#allocation6], 0
    %28 = vsyncpa [#allocation9], 0
    %29 = vsyncpa [#allocation12], 0
    %30 = vsyncpa [#allocation15], 0
    %31 = vsyncpa [#allocation18], 0
    %32 = vsyncpa [#allocation4], 0
    %s33 = scalar_lea.sflag [#allocation4], 1
    %34 = vsyncpa %s33, 0
    %35 = vsyncpa [#allocation21], 0
    %s36 = scalar_lea.sflag [#allocation21], 1
    %37 = vsyncpa %s36, 0
    loop: start=0, step=1, limit=4
    $region2: #{tpu_custom_call.1} parent=1 // loop_pre_header
      _
    $region3: #{tpu_custom_call.1} parent=1 // loop_header
      %s39 = sphi 0, %s43
      %p40 = scmp.ge.s32.totalorder %s39, 4
      %s49 = sphi 0, %s51
      %s52 = sphi 0, %s49
      %s53 = sphi 0, %s52
      %s69 = sphi 0, %s53
      %s73 = sphi 0, %s73
      %s75 = sphi 0, %s73
      %s76 = sphi 0, %s75
      %s90 = sphi 0, %s76
      %s94 = sphi 0, %s94
      %s96 = sphi 0, %s94
      %s97 = sphi 0, %s96
      %s111 = sphi 0, %s97
      %s115 = sphi 0, %s115
      %s117 = sphi 0, %s115
      %s118 = sphi 0, %s117
      %s132 = sphi 0, %s118
      %s136 = sphi 0, %s136
      %s138 = sphi 0, %s136
      %s139 = sphi 0, %s138
      %s153 = sphi 0, %s139
      %s157 = sphi 0, %s157
      %s159 = sphi 0, %s157
      %s160 = sphi 0, %s159
      %s174 = sphi 0, %s160
      %s178 = sphi 0, %s178
      %s180 = sphi 0, %s178
      %s181 = sphi 0, %s180
      %s195 = sphi 0, %s181
      %s199 = sphi 0, %s199
      %s201 = sphi 0, %s199
      %s202 = sphi 0, %s201
      %s216 = sphi 0, %s202
      %s220 = sphi 0, %s220
      %s222 = sphi 0, %s220
      %s223 = sphi 0, %s222
      %s237 = sphi 0, %s223
      %s241 = sphi 0, %s241
      %s243 = sphi 0, %s241
      %s244 = sphi 0, %s243
      %s258 = sphi 0, %s244
      %s262 = sphi 0, %s262
      %s264 = sphi 0, %s262
      %s265 = sphi 0, %s264
      %s279 = sphi 0, %s265
      %s283 = sphi 0, %s283
      %s285 = sphi 0, %s283
      %s286 = sphi 0, %s285
      %s300 = sphi 0, %s286
      %s304 = sphi 0, %s304
      %s306 = sphi 0, %s304
      %s307 = sphi 0, %s306
      %s321 = sphi 0, %s307
      %s325 = sphi 0, %s325
      %s327 = sphi 0, %s325
      %s328 = sphi 0, %s327
      %s342 = sphi 0, %s328
      %s346 = sphi 0, %s346
      %s348 = sphi 0, %s346
      %s349 = sphi 0, %s348
      %s363 = sphi 0, %s349
      %s367 = sphi 0, %s367
      %s369 = sphi 0, %s367
      %s370 = sphi 0, %s369
      %s384 = sphi 0, %s370
      %s388 = sphi 0, %s388
      %s390 = sphi 0, %s388
      %s391 = sphi 0, %s390
      %s405 = sphi 0, %s391
      %s411 = sphi 0, %s413
      %s414 = sphi 0, %s411
      %s415 = sphi 0, %s414
      %s431 = sphi 0, %s415
      %s437 = sphi 0, %s439
      %s440 = sphi 0, %s437
      %s441 = sphi 0, %s440
      %s457 = sphi 0, %s441
    $region4: #{tpu_custom_call.1} parent=1 // loop_header_branch
      %42 = sbr.rel (%p40) target = $region8
    $region5: #{tpu_custom_call.1} parent=1 // loop_body
      %s44 = ssub.s32 %s39, 1
      %s45 = ssub.s32 %s39, 2
      %s46 = sadd.s32 %s39, 1
      %s47 = ssub.s32 %s39, %s46
      %p48 = scmp.eq.s32.totalorder %s47, 0
      %s50 = sadd.s32 %s49, 1
      %s51 = scalar_select %p48, %s49, %s50
      %p54 = pneg %p48
      %p55 = scmp.eq.s32.totalorder %s39, 1
      %p56 = por %p54, %p55
      %p57 = scmp.ne.s32.totalorder %s49, %s52
      %p58 = scmp.eq.s32.totalorder %s39, 0
      %p59 = por %p57, %p58
      %p60 = scmp.ne.s32.totalorder %s49, %s52
      %p61 = scmp.eq.s32.totalorder %s44, 1
      %p62 = por %p60, %p61
      %p63 = scmp.ne.s32.totalorder %s52, %s53
      %p64 = scmp.eq.s32.totalorder %s44, 0
      %p65 = por %p63, %p64
      %p66 = scmp.ne.s32.totalorder %s52, %s53
      %p67 = scmp.eq.s32.totalorder %s45, 1
      %p68 = por %p66, %p67
      %p70 = scmp.ne.s32.totalorder %s53, %s69
      %p71 = scmp.eq.s32.totalorder %s45, 0
      %p72 = por %p70, %p71
      %s74 = sadd.s32 %s73, 1
      %p77 = scmp.eq.s32.totalorder %s39, 1
      %p78 = scmp.ne.s32.totalorder %s73, %s75
      %p79 = scmp.eq.s32.totalorder %s39, 0
      %p80 = por %p78, %p79
      %p81 = scmp.ne.s32.totalorder %s73, %s75
      %p82 = scmp.eq.s32.totalorder %s44, 1
      %p83 = por %p81, %p82
      %p84 = scmp.ne.s32.totalorder %s75, %s76
      %p85 = scmp.eq.s32.totalorder %s44, 0
      %p86 = por %p84, %p85
      %p87 = scmp.ne.s32.totalorder %s75, %s76
      %p88 = scmp.eq.s32.totalorder %s45, 1
      %p89 = por %p87, %p88
      %p91 = scmp.ne.s32.totalorder %s76, %s90
      %p92 = scmp.eq.s32.totalorder %s45, 0
      %p93 = por %p91, %p92
      %s95 = sadd.s32 %s94, 1
      %p98 = scmp.eq.s32.totalorder %s39, 1
      %p99 = scmp.ne.s32.totalorder %s94, %s96
      %p100 = scmp.eq.s32.totalorder %s39, 0
      %p101 = por %p99, %p100
      %p102 = scmp.ne.s32.totalorder %s94, %s96
      %p103 = scmp.eq.s32.totalorder %s44, 1
      %p104 = por %p102, %p103
      %p105 = scmp.ne.s32.totalorder %s96, %s97
      %p106 = scmp.eq.s32.totalorder %s44, 0
      %p107 = por %p105, %p106
      %p108 = scmp.ne.s32.totalorder %s96, %s97
      %p109 = scmp.eq.s32.totalorder %s45, 1
      %p110 = por %p108, %p109
      %p112 = scmp.ne.s32.totalorder %s97, %s111
      %p113 = scmp.eq.s32.totalorder %s45, 0
      %p114 = por %p112, %p113
      %s116 = sadd.s32 %s115, 1
      %p119 = scmp.eq.s32.totalorder %s39, 1
      %p120 = scmp.ne.s32.totalorder %s115, %s117
      %p121 = scmp.eq.s32.totalorder %s39, 0
      %p122 = por %p120, %p121
      %p123 = scmp.ne.s32.totalorder %s115, %s117
      %p124 = scmp.eq.s32.totalorder %s44, 1
      %p125 = por %p123, %p124
      %p126 = scmp.ne.s32.totalorder %s117, %s118
      %p127 = scmp.eq.s32.totalorder %s44, 0
      %p128 = por %p126, %p127
      %p129 = scmp.ne.s32.totalorder %s117, %s118
      %p130 = scmp.eq.s32.totalorder %s45, 1
      %p131 = por %p129, %p130
      %p133 = scmp.ne.s32.totalorder %s118, %s132
      %p134 = scmp.eq.s32.totalorder %s45, 0
      %p135 = por %p133, %p134
      %s137 = sadd.s32 %s136, 1
      %p140 = scmp.eq.s32.totalorder %s39, 1
      %p141 = scmp.ne.s32.totalorder %s136, %s138
      %p142 = scmp.eq.s32.totalorder %s39, 0
      %p143 = por %p141, %p142
      %p144 = scmp.ne.s32.totalorder %s136, %s138
      %p145 = scmp.eq.s32.totalorder %s44, 1
      %p146 = por %p144, %p145
      %p147 = scmp.ne.s32.totalorder %s138, %s139
      %p148 = scmp.eq.s32.totalorder %s44, 0
      %p149 = por %p147, %p148
      %p150 = scmp.ne.s32.totalorder %s138, %s139
      %p151 = scmp.eq.s32.totalorder %s45, 1
      %p152 = por %p150, %p151
      %p154 = scmp.ne.s32.totalorder %s139, %s153
      %p155 = scmp.eq.s32.totalorder %s45, 0
      %p156 = por %p154, %p155
      %s158 = sadd.s32 %s157, 1
      %p161 = scmp.eq.s32.totalorder %s39, 1
      %p162 = scmp.ne.s32.totalorder %s157, %s159
      %p163 = scmp.eq.s32.totalorder %s39, 0
      %p164 = por %p162, %p163
      %p165 = scmp.ne.s32.totalorder %s157, %s159
      %p166 = scmp.eq.s32.totalorder %s44, 1
      %p167 = por %p165, %p166
      %p168 = scmp.ne.s32.totalorder %s159, %s160
      %p169 = scmp.eq.s32.totalorder %s44, 0
      %p170 = por %p168, %p169
      %p171 = scmp.ne.s32.totalorder %s159, %s160
      %p172 = scmp.eq.s32.totalorder %s45, 1
      %p173 = por %p171, %p172
      %p175 = scmp.ne.s32.totalorder %s160, %s174
      %p176 = scmp.eq.s32.totalorder %s45, 0
      %p177 = por %p175, %p176
      %s179 = sadd.s32 %s178, 1
      %p182 = scmp.eq.s32.totalorder %s39, 1
      %p183 = scmp.ne.s32.totalorder %s178, %s180
      %p184 = scmp.eq.s32.totalorder %s39, 0
      %p185 = por %p183, %p184
      %p186 = scmp.ne.s32.totalorder %s178, %s180
      %p187 = scmp.eq.s32.totalorder %s44, 1
      %p188 = por %p186, %p187
      %p189 = scmp.ne.s32.totalorder %s180, %s181
      %p190 = scmp.eq.s32.totalorder %s44, 0
      %p191 = por %p189, %p190
      %p192 = scmp.ne.s32.totalorder %s180, %s181
      %p193 = scmp.eq.s32.totalorder %s45, 1
      %p194 = por %p192, %p193
      %p196 = scmp.ne.s32.totalorder %s181, %s195
      %p197 = scmp.eq.s32.totalorder %s45, 0
      %p198 = por %p196, %p197
      %s200 = sadd.s32 %s199, 1
      %p203 = scmp.eq.s32.totalorder %s39, 1
      %p204 = scmp.ne.s32.totalorder %s199, %s201
      %p205 = scmp.eq.s32.totalorder %s39, 0
      %p206 = por %p204, %p205
      %p207 = scmp.ne.s32.totalorder %s199, %s201
      %p208 = scmp.eq.s32.totalorder %s44, 1
      %p209 = por %p207, %p208
      %p210 = scmp.ne.s32.totalorder %s201, %s202
      %p211 = scmp.eq.s32.totalorder %s44, 0
      %p212 = por %p210, %p211
      %p213 = scmp.ne.s32.totalorder %s201, %s202
      %p214 = scmp.eq.s32.totalorder %s45, 1
      %p215 = por %p213, %p214
      %p217 = scmp.ne.s32.totalorder %s202, %s216
      %p218 = scmp.eq.s32.totalorder %s45, 0
      %p219 = por %p217, %p218
      %s221 = sadd.s32 %s220, 1
      %p224 = scmp.eq.s32.totalorder %s39, 1
      %p225 = scmp.ne.s32.totalorder %s220, %s222
      %p226 = scmp.eq.s32.totalorder %s39, 0
      %p227 = por %p225, %p226
      %p228 = scmp.ne.s32.totalorder %s220, %s222
      %p229 = scmp.eq.s32.totalorder %s44, 1
      %p230 = por %p228, %p229
      %p231 = scmp.ne.s32.totalorder %s222, %s223
      %p232 = scmp.eq.s32.totalorder %s44, 0
      %p233 = por %p231, %p232
      %p234 = scmp.ne.s32.totalorder %s222, %s223
      %p235 = scmp.eq.s32.totalorder %s45, 1
      %p236 = por %p234, %p235
      %p238 = scmp.ne.s32.totalorder %s223, %s237
      %p239 = scmp.eq.s32.totalorder %s45, 0
      %p240 = por %p238, %p239
      %s242 = sadd.s32 %s241, 1
      %p245 = scmp.eq.s32.totalorder %s39, 1
      %p246 = scmp.ne.s32.totalorder %s241, %s243
      %p247 = scmp.eq.s32.totalorder %s39, 0
      %p248 = por %p246, %p247
      %p249 = scmp.ne.s32.totalorder %s241, %s243
      %p250 = scmp.eq.s32.totalorder %s44, 1
      %p251 = por %p249, %p250
      %p252 = scmp.ne.s32.totalorder %s243, %s244
      %p253 = scmp.eq.s32.totalorder %s44, 0
      %p254 = por %p252, %p253
      %p255 = scmp.ne.s32.totalorder %s243, %s244
      %p256 = scmp.eq.s32.totalorder %s45, 1
      %p257 = por %p255, %p256
      %p259 = scmp.ne.s32.totalorder %s244, %s258
      %p260 = scmp.eq.s32.totalorder %s45, 0
      %p261 = por %p259, %p260
      %s263 = sadd.s32 %s262, 1
      %p266 = scmp.eq.s32.totalorder %s39, 1
      %p267 = scmp.ne.s32.totalorder %s262, %s264
      %p268 = scmp.eq.s32.totalorder %s39, 0
      %p269 = por %p267, %p268
      %p270 = scmp.ne.s32.totalorder %s262, %s264
      %p271 = scmp.eq.s32.totalorder %s44, 1
      %p272 = por %p270, %p271
      %p273 = scmp.ne.s32.totalorder %s264, %s265
      %p274 = scmp.eq.s32.totalorder %s44, 0
      %p275 = por %p273, %p274
      %p276 = scmp.ne.s32.totalorder %s264, %s265
      %p277 = scmp.eq.s32.totalorder %s45, 1
      %p278 = por %p276, %p277
      %p280 = scmp.ne.s32.totalorder %s265, %s279
      %p281 = scmp.eq.s32.totalorder %s45, 0
      %p282 = por %p280, %p281
      %s284 = sadd.s32 %s283, 1
      %p287 = scmp.eq.s32.totalorder %s39, 1
      %p288 = scmp.ne.s32.totalorder %s283, %s285
      %p289 = scmp.eq.s32.totalorder %s39, 0
      %p290 = por %p288, %p289
      %p291 = scmp.ne.s32.totalorder %s283, %s285
      %p292 = scmp.eq.s32.totalorder %s44, 1
      %p293 = por %p291, %p292
      %p294 = scmp.ne.s32.totalorder %s285, %s286
      %p295 = scmp.eq.s32.totalorder %s44, 0
      %p296 = por %p294, %p295
      %p297 = scmp.ne.s32.totalorder %s285, %s286
      %p298 = scmp.eq.s32.totalorder %s45, 1
      %p299 = por %p297, %p298
      %p301 = scmp.ne.s32.totalorder %s286, %s300
      %p302 = scmp.eq.s32.totalorder %s45, 0
      %p303 = por %p301, %p302
      %s305 = sadd.s32 %s304, 1
      %p308 = scmp.eq.s32.totalorder %s39, 1
      %p309 = scmp.ne.s32.totalorder %s304, %s306
      %p310 = scmp.eq.s32.totalorder %s39, 0
      %p311 = por %p309, %p310
      %p312 = scmp.ne.s32.totalorder %s304, %s306
      %p313 = scmp.eq.s32.totalorder %s44, 1
      %p314 = por %p312, %p313
      %p315 = scmp.ne.s32.totalorder %s306, %s307
      %p316 = scmp.eq.s32.totalorder %s44, 0
      %p317 = por %p315, %p316
      %p318 = scmp.ne.s32.totalorder %s306, %s307
      %p319 = scmp.eq.s32.totalorder %s45, 1
      %p320 = por %p318, %p319
      %p322 = scmp.ne.s32.totalorder %s307, %s321
      %p323 = scmp.eq.s32.totalorder %s45, 0
      %p324 = por %p322, %p323
      %s326 = sadd.s32 %s325, 1
      %p329 = scmp.eq.s32.totalorder %s39, 1
      %p330 = scmp.ne.s32.totalorder %s325, %s327
      %p331 = scmp.eq.s32.totalorder %s39, 0
      %p332 = por %p330, %p331
      %p333 = scmp.ne.s32.totalorder %s325, %s327
      %p334 = scmp.eq.s32.totalorder %s44, 1
      %p335 = por %p333, %p334
      %p336 = scmp.ne.s32.totalorder %s327, %s328
      %p337 = scmp.eq.s32.totalorder %s44, 0
      %p338 = por %p336, %p337
      %p339 = scmp.ne.s32.totalorder %s327, %s328
      %p340 = scmp.eq.s32.totalorder %s45, 1
      %p341 = por %p339, %p340
      %p343 = scmp.ne.s32.totalorder %s328, %s342
      %p344 = scmp.eq.s32.totalorder %s45, 0
      %p345 = por %p343, %p344
      %s347 = sadd.s32 %s346, 1
      %p350 = scmp.eq.s32.totalorder %s39, 1
      %p351 = scmp.ne.s32.totalorder %s346, %s348
      %p352 = scmp.eq.s32.totalorder %s39, 0
      %p353 = por %p351, %p352
      %p354 = scmp.ne.s32.totalorder %s346, %s348
      %p355 = scmp.eq.s32.totalorder %s44, 1
      %p356 = por %p354, %p355
      %p357 = scmp.ne.s32.totalorder %s348, %s349
      %p358 = scmp.eq.s32.totalorder %s44, 0
      %p359 = por %p357, %p358
      %p360 = scmp.ne.s32.totalorder %s348, %s349
      %p361 = scmp.eq.s32.totalorder %s45, 1
      %p362 = por %p360, %p361
      %p364 = scmp.ne.s32.totalorder %s349, %s363
      %p365 = scmp.eq.s32.totalorder %s45, 0
      %p366 = por %p364, %p365
      %s368 = sadd.s32 %s367, 1
      %p371 = scmp.eq.s32.totalorder %s39, 1
      %p372 = scmp.ne.s32.totalorder %s367, %s369
      %p373 = scmp.eq.s32.totalorder %s39, 0
      %p374 = por %p372, %p373
      %p375 = scmp.ne.s32.totalorder %s367, %s369
      %p376 = scmp.eq.s32.totalorder %s44, 1
      %p377 = por %p375, %p376
      %p378 = scmp.ne.s32.totalorder %s369, %s370
      %p379 = scmp.eq.s32.totalorder %s44, 0
      %p380 = por %p378, %p379
      %p381 = scmp.ne.s32.totalorder %s369, %s370
      %p382 = scmp.eq.s32.totalorder %s45, 1
      %p383 = por %p381, %p382
      %p385 = scmp.ne.s32.totalorder %s370, %s384
      %p386 = scmp.eq.s32.totalorder %s45, 0
      %p387 = por %p385, %p386
      %s389 = sadd.s32 %s388, 1
      %p392 = scmp.eq.s32.totalorder %s39, 1
      %p393 = scmp.ne.s32.totalorder %s388, %s390
      %p394 = scmp.eq.s32.totalorder %s39, 0
      %p395 = por %p393, %p394
      %p396 = scmp.ne.s32.totalorder %s388, %s390
      %p397 = scmp.eq.s32.totalorder %s44, 1
      %p398 = por %p396, %p397
      %p399 = scmp.ne.s32.totalorder %s390, %s391
      %p400 = scmp.eq.s32.totalorder %s44, 0
      %p401 = por %p399, %p400
      %p402 = scmp.ne.s32.totalorder %s390, %s391
      %p403 = scmp.eq.s32.totalorder %s45, 1
      %p404 = por %p402, %p403
      %p406 = scmp.ne.s32.totalorder %s391, %s405
      %p407 = scmp.eq.s32.totalorder %s45, 0
      %p408 = por %p406, %p407
      %s409 = ssub.s32 %s39, %s46
      %p410 = scmp.eq.s32.totalorder %s409, 0
      %s412 = sadd.s32 %s411, 1
      %s413 = scalar_select %p410, %s411, %s412
      %p416 = pneg %p410
      %p417 = scmp.eq.s32.totalorder %s39, 1
      %p418 = por %p416, %p417
      %p419 = scmp.ne.s32.totalorder %s411, %s414
      %p420 = scmp.eq.s32.totalorder %s39, 0
      %p421 = por %p419, %p420
      %p422 = scmp.ne.s32.totalorder %s411, %s414
      %p423 = scmp.eq.s32.totalorder %s44, 1
      %p424 = por %p422, %p423
      %p425 = scmp.ne.s32.totalorder %s414, %s415
      %p426 = scmp.eq.s32.totalorder %s44, 0
      %p427 = por %p425, %p426
      %p428 = scmp.ne.s32.totalorder %s414, %s415
      %p429 = scmp.eq.s32.totalorder %s45, 1
      %p430 = por %p428, %p429
      %p432 = scmp.ne.s32.totalorder %s415, %s431
      %p433 = scmp.eq.s32.totalorder %s45, 0
      %p434 = por %p432, %p433
      %s435 = ssub.s32 %s39, %s46
      %p436 = scmp.eq.s32.totalorder %s435, 0
      %s438 = sadd.s32 %s437, 1
      %s439 = scalar_select %p436, %s437, %s438
      %p442 = pneg %p436
      %p443 = scmp.eq.s32.totalorder %s39, 1
      %p444 = por %p442, %p443
      %p445 = scmp.ne.s32.totalorder %s437, %s440
      %p446 = scmp.eq.s32.totalorder %s39, 0
      %p447 = por %p445, %p446
      %p448 = scmp.ne.s32.totalorder %s437, %s440
      %p449 = scmp.eq.s32.totalorder %s44, 1
      %p450 = por %p448, %p449
      %p451 = scmp.ne.s32.totalorder %s440, %s441
      %p452 = scmp.eq.s32.totalorder %s44, 0
      %p453 = por %p451, %p452
      %p454 = scmp.ne.s32.totalorder %s440, %s441
      %p455 = scmp.eq.s32.totalorder %s45, 1
      %p456 = por %p454, %p455
      %p458 = scmp.ne.s32.totalorder %s441, %s457
      %p459 = scmp.eq.s32.totalorder %s45, 0
      %p460 = por %p458, %p459
      %p461 = scmp.le.s32.totalorder 1, %s39
      %p462 = scmp.lt.s32.totalorder %s39, 3
      %p463 = pnand %p461, %p462
      %p464 = pneg %p463
      // Predicated region
      $region9: #{tpu_custom_call.1} parent=5 // pred_check
        _
      $region10: #{tpu_custom_call.1} parent=5 // pred_check_branch
        %466 = sbr.rel (%p463) target = $region12
      $region11: #{tpu_custom_call.1} parent=5 // pred_region
        %s467 = ssub.s32 %s39, 1
        // Predicated region
        $region13: #{tpu_custom_call.1} parent=11 // pred_check
          %p468 = pneg %p86
        $region14: #{tpu_custom_call.1} parent=11 // pred_check_branch
          %470 = sbr.rel (%p468) target = $region16
        $region15: #{tpu_custom_call.1} parent=11 // pred_region
          %s472 = ssub.s32 8192, 8192
          %473 = vsyncadd [#allocation6], %s472
          %s474 = sshll.u32 [#allocation5], 4
          %s475 = int_to_ptr.vmem [resolvable:$true] %s474
          %480 = dma.hbm_to_vmem [thread:$0]  %s1, 8192, %s475, [#allocation6], 128, 128, 8
        $region16: #{tpu_custom_call.1} parent=11 // pred_fallthru
          _
        // Predicated region
        $region17: #{tpu_custom_call.1} parent=11 // pred_check
          %p481 = pneg %p107
        $region18: #{tpu_custom_call.1} parent=11 // pred_check_branch
          %483 = sbr.rel (%p481) target = $region20
        $region19: #{tpu_custom_call.1} parent=11 // pred_region
          %s485 = ssub.s32 32, 32
          %486 = vsyncadd [#allocation6], %s485
          %s488 = sshll.u32 [#allocation7], 4
          %s489 = int_to_ptr.vmem [resolvable:$true] %s488
          %491 = dma.hbm_to_vmem [thread:$0]  %s2, 32, %s489, [#allocation6]
        $region20: #{tpu_custom_call.1} parent=11 // pred_fallthru
          _
        // Predicated region
        $region21: #{tpu_custom_call.1} parent=11 // pred_check
          %p492 = pneg %p128
        $region22: #{tpu_custom_call.1} parent=11 // pred_check_branch
          %494 = sbr.rel (%p492) target = $region24
        $region23: #{tpu_custom_call.1} parent=11 // pred_region
          %s496 = ssub.s32 10240, 10240
          %497 = vsyncadd [#allocation9], %s496
          %s498 = sshll.u32 [#allocation8], 4
          %s499 = int_to_ptr.vmem [resolvable:$true] %s498
          %504 = dma.hbm_to_vmem [thread:$0]  %s3, 10240, %s499, [#allocation9], 320, 320, 20
        $region24: #{tpu_custom_call.1} parent=11 // pred_fallthru
          _
        // Predicated region
        $region25: #{tpu_custom_call.1} parent=11 // pred_check
          %p505 = pneg %p149
        $region26: #{tpu_custom_call.1} parent=11 // pred_check_branch
          %507 = sbr.rel (%p505) target = $region28
        $region27: #{tpu_custom_call.1} parent=11 // pred_region
          _
        $region28: #{tpu_custom_call.1} parent=11 // pred_fallthru
          _
        // Predicated region
        $region29: #{tpu_custom_call.1} parent=11 // pred_check
          %p508 = pneg %p170
        $region30: #{tpu_custom_call.1} parent=11 // pred_check_branch
          %510 = sbr.rel (%p508) target = $region32
        $region31: #{tpu_custom_call.1} parent=11 // pred_region
          %s512 = ssub.s32 5120, 5120
          %513 = vsyncadd [#allocation9], %s512
          %s514 = sshll.u32 [#allocation10], 4
          %s515 = int_to_ptr.vmem [resolvable:$true] %s514
          %520 = dma.hbm_to_vmem [thread:$0]  %s5, 5120, %s515, [#allocation9], 64, 64, 4
        $region32: #{tpu_custom_call.1} parent=11 // pred_fallthru
          _
        // Predicated region
        $region33: #{tpu_custom_call.1} parent=11 // pred_check
          %p521 = pneg %p191
        $region34: #{tpu_custom_call.1} parent=11 // pred_check_branch
          %523 = sbr.rel (%p521) target = $region36
        $region35: #{tpu_custom_call.1} parent=11 // pred_region
          _
        $region36: #{tpu_custom_call.1} parent=11 // pred_fallthru
          _
        // Predicated region
        $region37: #{tpu_custom_call.1} parent=11 // pred_check
          %p524 = pneg %p212
        $region38: #{tpu_custom_call.1} parent=11 // pred_check_branch
          %526 = sbr.rel (%p524) target = $region40
        $region39: #{tpu_custom_call.1} parent=11 // pred_region
          %s528 = ssub.s32 5120, 5120
          %529 = vsyncadd [#allocation12], %s528
          %s530 = sshll.u32 [#allocation11], 4
          %s531 = int_to_ptr.vmem [resolvable:$true] %s530
          %536 = dma.hbm_to_vmem [thread:$0]  %s7, 5120, %s531, [#allocation12], 320, 320, 20
        $region40: #{tpu_custom_call.1} parent=11 // pred_fallthru
          _
        // Predicated region
        $region41: #{tpu_custom_call.1} parent=11 // pred_check
          %p537 = pneg %p233
        $region42: #{tpu_custom_call.1} parent=11 // pred_check_branch
          %539 = sbr.rel (%p537) target = $region44
        $region43: #{tpu_custom_call.1} parent=11 // pred_region
          _
        $region44: #{tpu_custom_call.1} parent=11 // pred_fallthru
          _
        // Predicated region
        $region45: #{tpu_custom_call.1} parent=11 // pred_check
          %p540 = pneg %p254
        $region46: #{tpu_custom_call.1} parent=11 // pred_check_branch
          %542 = sbr.rel (%p540) target = $region48
        $region47: #{tpu_custom_call.1} parent=11 // pred_region
          %s544 = ssub.s32 10240, 10240
          %545 = vsyncadd [#allocation12], %s544
          %s546 = sshll.u32 [#allocation13], 4
          %s547 = int_to_ptr.vmem [resolvable:$true] %s546
          %552 = dma.hbm_to_vmem [thread:$0]  %s9, 10240, %s547, [#allocation12], 128, 128, 8
        $region48: #{tpu_custom_call.1} parent=11 // pred_fallthru
          _
        // Predicated region
        $region49: #{tpu_custom_call.1} parent=11 // pred_check
          %p553 = pneg %p275
        $region50: #{tpu_custom_call.1} parent=11 // pred_check_branch
          %555 = sbr.rel (%p553) target = $region52
        $region51: #{tpu_custom_call.1} parent=11 // pred_region
          _
        $region52: #{tpu_custom_call.1} parent=11 // pred_fallthru
          _
        // Predicated region
        $region53: #{tpu_custom_call.1} parent=11 // pred_check
          %p556 = pneg %p296
        $region54: #{tpu_custom_call.1} parent=11 // pred_check_branch
          %558 = sbr.rel (%p556) target = $region56
        $region55: #{tpu_custom_call.1} parent=11 // pred_region
          %s560 = ssub.s32 8192, 8192
          %561 = vsyncadd [#allocation15], %s560
          %s562 = sshll.u32 [#allocation14], 4
          %s563 = int_to_ptr.vmem [resolvable:$true] %s562
          %568 = dma.hbm_to_vmem [thread:$0]  %s11, 8192, %s563, [#allocation15], 256, 256, 16
        $region56: #{tpu_custom_call.1} parent=11 // pred_fallthru
          _
        // Predicated region
        $region57: #{tpu_custom_call.1} parent=11 // pred_check
          %p569 = pneg %p317
        $region58: #{tpu_custom_call.1} parent=11 // pred_check_branch
          %571 = sbr.rel (%p569) target = $region60
        $region59: #{tpu_custom_call.1} parent=11 // pred_region
          _
        $region60: #{tpu_custom_call.1} parent=11 // pred_fallthru
          _
        // Predicated region
        $region61: #{tpu_custom_call.1} parent=11 // pred_check
          %p572 = pneg %p338
        $region62: #{tpu_custom_call.1} parent=11 // pred_check_branch
          %574 = sbr.rel (%p572) target = $region64
        $region63: #{tpu_custom_call.1} parent=11 // pred_region
          %s576 = ssub.s32 1024, 1024
          %577 = vsyncadd [#allocation15], %s576
          %s578 = sshll.u32 [#allocation16], 4
          %s579 = int_to_ptr.vmem [resolvable:$true] %s578
          %584 = dma.hbm_to_vmem [thread:$0]  %s13, 1024, %s579, [#allocation15], 64, 64, 4
        $region64: #{tpu_custom_call.1} parent=11 // pred_fallthru
          _
        // Predicated region
        $region65: #{tpu_custom_call.1} parent=11 // pred_check
          %p585 = pneg %p359
        $region66: #{tpu_custom_call.1} parent=11 // pred_check_branch
          %587 = sbr.rel (%p585) target = $region68
        $region67: #{tpu_custom_call.1} parent=11 // pred_region
          _
        $region68: #{tpu_custom_call.1} parent=11 // pred_fallthru
          _
        // Predicated region
        $region69: #{tpu_custom_call.1} parent=11 // pred_check
          %p588 = pneg %p380
        $region70: #{tpu_custom_call.1} parent=11 // pred_check_branch
          %590 = sbr.rel (%p588) target = $region72
        $region71: #{tpu_custom_call.1} parent=11 // pred_region
          %s592 = ssub.s32 1024, 1024
          %593 = vsyncadd [#allocation18], %s592
          %s594 = sshll.u32 [#allocation17], 4
          %s595 = int_to_ptr.vmem [resolvable:$true] %s594
          %600 = dma.hbm_to_vmem [thread:$0]  %s15, 1024, %s595, [#allocation18], 64, 64, 4
        $region72: #{tpu_custom_call.1} parent=11 // pred_fallthru
          _
        // Predicated region
        $region73: #{tpu_custom_call.1} parent=11 // pred_check
          %p601 = pneg %p401
        $region74: #{tpu_custom_call.1} parent=11 // pred_check_branch
          %603 = sbr.rel (%p601) target = $region76
        $region75: #{tpu_custom_call.1} parent=11 // pred_region
          _
        $region76: #{tpu_custom_call.1} parent=11 // pred_fallthru
          _
      $region12: #{tpu_custom_call.1} parent=5 // pred_fallthru
        _
      %p604 = scmp.lt.s32.totalorder %s39, 2
      // Predicated region
      $region77: #{tpu_custom_call.1} parent=5 // pred_check
        %p605 = pneg %p604
      $region78: #{tpu_custom_call.1} parent=5 // pred_check_branch
        %607 = sbr.rel (%p605) target = $region80
      $region79: #{tpu_custom_call.1} parent=5 // pred_region
        // Predicated region
        $region81: #{tpu_custom_call.1} parent=79 // pred_check
          %p608 = pneg %p59
        $region82: #{tpu_custom_call.1} parent=79 // pred_check_branch
          %610 = sbr.rel (%p608) target = $region84
        $region83: #{tpu_custom_call.1} parent=79 // pred_region
          %s611 = sand.u32 %s49, 1
          %s612 = scalar_lea.sflag [#allocation3], %s611
          %s613 = sand.u32 %s49, 1
          %s614 = smul.addr %s613, 64
          %s615 = scalar_lea.vmem [#allocation2], %s614
          %s616 = smul.u32 2, %s39
          %s618 = ssub.s32 1024, 1024
          %619 = vsyncadd %s612, %s618
          %s620 = smul.addr %s616, 4
          %s621 = smul.addr %s620, 128
          %s622 = scalar_lea.hbm %s0, %s621
          %s623 = sshll.u32 %s615, 4
          %s624 = int_to_ptr.vmem [resolvable:$true] %s623
          %629 = dma.hbm_to_vmem [thread:$0]  %s622, 1024, %s624, %s612, 512, 512, 32
        $region84: #{tpu_custom_call.1} parent=79 // pred_fallthru
          _
      $region80: #{tpu_custom_call.1} parent=5 // pred_fallthru
        _
      %p630 = scmp.le.s32.totalorder 1, %s39
      %p631 = scmp.lt.s32.totalorder %s39, 3
      %p632 = pnand %p630, %p631
      %p633 = pneg %p632
      // Predicated region
      $region85: #{tpu_custom_call.1} parent=5 // pred_check
        _
      $region86: #{tpu_custom_call.1} parent=5 // pred_check_branch
        %635 = sbr.rel (%p632) target = $region88
      $region87: #{tpu_custom_call.1} parent=5 // pred_region
        %s636 = ssub.s32 %s39, 1
        %s637 = sand.u32 %s52, 1
        %s638 = scalar_lea.sflag [#allocation3], %s637
        %s639 = sand.u32 %s52, 1
        %s640 = smul.addr %s639, 64
        %s641 = scalar_lea.vmem [#allocation2], %s640
        // Predicated region
        $region89: #{tpu_custom_call.1} parent=87 // pred_check
          %p642 = pneg %p65
        $region90: #{tpu_custom_call.1} parent=87 // pred_check_branch
          %644 = sbr.rel (%p642) target = $region92
        $region91: #{tpu_custom_call.1} parent=87 // pred_region
          %645 = dma.done %s638, 1024
        $region92: #{tpu_custom_call.1} parent=87 // pred_fallthru
          _
        // Predicated region
        $region93: #{tpu_custom_call.1} parent=87 // pred_check
          %p646 = pneg %p86
        $region94: #{tpu_custom_call.1} parent=87 // pred_check_branch
          %648 = sbr.rel (%p646) target = $region96
        $region95: #{tpu_custom_call.1} parent=87 // pred_region
          %649 = dma.done [#allocation6], 8192
        $region96: #{tpu_custom_call.1} parent=87 // pred_fallthru
          _
        // Predicated region
        $region97: #{tpu_custom_call.1} parent=87 // pred_check
          %p650 = pneg %p107
        $region98: #{tpu_custom_call.1} parent=87 // pred_check_branch
          %652 = sbr.rel (%p650) target = $region100
        $region99: #{tpu_custom_call.1} parent=87 // pred_region
          %653 = dma.done [#allocation6], 32
        $region100: #{tpu_custom_call.1} parent=87 // pred_fallthru
          _
        // Predicated region
        $region101: #{tpu_custom_call.1} parent=87 // pred_check
          %p654 = pneg %p128
        $region102: #{tpu_custom_call.1} parent=87 // pred_check_branch
          %656 = sbr.rel (%p654) target = $region104
        $region103: #{tpu_custom_call.1} parent=87 // pred_region
          %657 = dma.done [#allocation9], 10240
        $region104: #{tpu_custom_call.1} parent=87 // pred_fallthru
          _
        // Predicated region
        $region105: #{tpu_custom_call.1} parent=87 // pred_check
          %p658 = pneg %p170
        $region106: #{tpu_custom_call.1} parent=87 // pred_check_branch
          %660 = sbr.rel (%p658) target = $region108
        $region107: #{tpu_custom_call.1} parent=87 // pred_region
          %661 = dma.done [#allocation9], 5120
        $region108: #{tpu_custom_call.1} parent=87 // pred_fallthru
          _
        // Predicated region
        $region109: #{tpu_custom_call.1} parent=87 // pred_check
          %p662 = pneg %p212
        $region110: #{tpu_custom_call.1} parent=87 // pred_check_branch
          %664 = sbr.rel (%p662) target = $region112
        $region111: #{tpu_custom_call.1} parent=87 // pred_region
          %665 = dma.done [#allocation12], 5120
        $region112: #{tpu_custom_call.1} parent=87 // pred_fallthru
          _
        // Predicated region
        $region113: #{tpu_custom_call.1} parent=87 // pred_check
          %p666 = pneg %p254
        $region114: #{tpu_custom_call.1} parent=87 // pred_check_branch
          %668 = sbr.rel (%p666) target = $region116
        $region115: #{tpu_custom_call.1} parent=87 // pred_region
          %669 = dma.done [#allocation12], 10240
        $region116: #{tpu_custom_call.1} parent=87 // pred_fallthru
          _
        // Predicated region
        $region117: #{tpu_custom_call.1} parent=87 // pred_check
          %p670 = pneg %p296
        $region118: #{tpu_custom_call.1} parent=87 // pred_check_branch
          %672 = sbr.rel (%p670) target = $region120
        $region119: #{tpu_custom_call.1} parent=87 // pred_region
          %673 = dma.done [#allocation15], 8192
        $region120: #{tpu_custom_call.1} parent=87 // pred_fallthru
          _
        // Predicated region
        $region121: #{tpu_custom_call.1} parent=87 // pred_check
          %p674 = pneg %p338
        $region122: #{tpu_custom_call.1} parent=87 // pred_check_branch
          %676 = sbr.rel (%p674) target = $region124
        $region123: #{tpu_custom_call.1} parent=87 // pred_region
          %677 = dma.done [#allocation15], 1024
        $region124: #{tpu_custom_call.1} parent=87 // pred_fallthru
          _
        // Predicated region
        $region125: #{tpu_custom_call.1} parent=87 // pred_check
          %p678 = pneg %p380
        $region126: #{tpu_custom_call.1} parent=87 // pred_check_branch
          %680 = sbr.rel (%p678) target = $region128
        $region127: #{tpu_custom_call.1} parent=87 // pred_region
          %681 = dma.done [#allocation18], 1024
        $region128: #{tpu_custom_call.1} parent=87 // pred_fallthru
          _
        %s682 = sand.u32 %s52, 1
        %s683 = scalar_lea.sflag [#allocation3], %s682
        %s684 = sand.u32 %s52, 1
        %s685 = smul.addr %s684, 64
        %s686 = scalar_lea.vmem [#allocation2], %s685
        %p687 = pneg %p65
        %p688 = pneg %p62
        %p689 = pneg %p86
        %p690 = pneg %p83
        %p691 = pneg %p107
        %p692 = pneg %p104
        %p693 = pneg %p128
        %p694 = pneg %p125
        %p695 = pneg %p149
        %p696 = pneg %p146
        %p697 = pneg %p170
        %p698 = pneg %p167
        %p699 = pneg %p191
        %p700 = pneg %p188
        %p701 = pneg %p212
        %p702 = pneg %p209
        %p703 = pneg %p233
        %p704 = pneg %p230
        %p705 = pneg %p254
        %p706 = pneg %p251
        %p707 = pneg %p275
        %p708 = pneg %p272
        %p709 = pneg %p296
        %p710 = pneg %p293
        %p711 = pneg %p317
        %p712 = pneg %p314
        %p713 = pneg %p338
        %p714 = pneg %p335
        %p715 = pneg %p359
        %p716 = pneg %p356
        %p717 = pneg %p380
        %p718 = pneg %p377
        %p719 = pneg %p401
        %p720 = pneg %p398
        %p721 = pneg %p427
        %p722 = pneg %p424
        %s723 = sand.u32 %s414, 1
        %s724 = scalar_lea.sflag [#allocation4], %s723
        %s725 = sand.u32 %s414, 1
        %s726 = smul.addr %s725, 32
        %s727 = scalar_lea.vmem [#allocation19], %s726
        %p728 = pneg %p453
        %p729 = pneg %p450
        %s730 = sand.u32 %s440, 1
        %s731 = scalar_lea.sflag [#allocation21], %s730
        %s732 = sand.u32 %s440, 1
        %s733 = smul.addr %s732, 16
        %s734 = scalar_lea.vmem [#allocation20], %s733
        %s735 = smul.u32 2, %s44
        %s736 = smul.u32 2, %s44
        %s737 = smul.u32 2, %s44
        %v739 = vld [vmem:[%s641] sm:$0xff]
        %v740 = vld [vmem:[%s641 + $0x8] sm:$0xff]
        %v741 = vld [vmem:[%s641 + $0x10] sm:$0xff]
        %v742 = vld [vmem:[%s641 + $0x18] sm:$0xff]
        %v743 = vld [vmem:[%s641 + $0x20] sm:$0xff]
        %v744 = vld [vmem:[%s641 + $0x28] sm:$0xff]
        %v745 = vld [vmem:[%s641 + $0x30] sm:$0xff]
        %v746 = vld [vmem:[%s641 + $0x38] sm:$0xff]
        %v747 = vpack.c.bf16 %v743, %v739
        %v748 = vpack.c.bf16 %v744, %v740
        %v749 = vpack.c.bf16 %v745, %v741
        %v750 = vpack.c.bf16 %v746, %v742
        %v751 = vld [vmem:[#allocation5] sm:$0xff]
        %v752 = vld [vmem:[#allocation5 + $0x8] sm:$0xff]
        %v753 = vld [vmem:[#allocation5 + $0x10] sm:$0xff]
        %v754 = vld [vmem:[#allocation5 + $0x18] sm:$0xff]
        %v755 = vld [vmem:[#allocation5 + $0x20] sm:$0xff]
        %v756 = vld [vmem:[#allocation5 + $0x28] sm:$0xff]
        %v757 = vld [vmem:[#allocation5 + $0x30] sm:$0xff]
        %v758 = vld [vmem:[#allocation5 + $0x38] sm:$0xff]
        %v759 = vld [vmem:[#allocation5 + $0x40] sm:$0xff]
        %v760 = vld [vmem:[#allocation5 + $0x48] sm:$0xff]
        %v761 = vld [vmem:[#allocation5 + $0x50] sm:$0xff]
        %v762 = vld [vmem:[#allocation5 + $0x58] sm:$0xff]
        %v763 = vld [vmem:[#allocation5 + $0x60] sm:$0xff]
        %v764 = vld [vmem:[#allocation5 + $0x68] sm:$0xff]
        %v765 = vld [vmem:[#allocation5 + $0x70] sm:$0xff]
        %v766 = vld [vmem:[#allocation5 + $0x78] sm:$0xff]
        %v767 = vld [vmem:[#allocation5 + $0x80] sm:$0xff]
        %v768 = vld [vmem:[#allocation5 + $0x88] sm:$0xff]
        %v769 = vld [vmem:[#allocation5 + $0x90] sm:$0xff]
        %v770 = vld [vmem:[#allocation5 + $0x98] sm:$0xff]
        %v771 = vld [vmem:[#allocation5 + $0xa0] sm:$0xff]
        %v772 = vld [vmem:[#allocation5 + $0xa8] sm:$0xff]
        %v773 = vld [vmem:[#allocation5 + $0xb0] sm:$0xff]
        %v774 = vld [vmem:[#allocation5 + $0xb8] sm:$0xff]
        %v775 = vld [vmem:[#allocation5 + $0xc0] sm:$0xff]
        %v776 = vld [vmem:[#allocation5 + $0xc8] sm:$0xff]
        %v777 = vld [vmem:[#allocation5 + $0xd0] sm:$0xff]
        %v778 = vld [vmem:[#allocation5 + $0xd8] sm:$0xff]
        %v779 = vld [vmem:[#allocation5 + $0xe0] sm:$0xff]
        %v780 = vld [vmem:[#allocation5 + $0xe8] sm:$0xff]
        %v781 = vld [vmem:[#allocation5 + $0xf0] sm:$0xff]
        %v782 = vld [vmem:[#allocation5 + $0xf8] sm:$0xff]
        %v783 = vld [vmem:[#allocation5 + $0x100] sm:$0xff]
        %v784 = vld [vmem:[#allocation5 + $0x108] sm:$0xff]
        %v785 = vld [vmem:[#allocation5 + $0x110] sm:$0xff]
        %v786 = vld [vmem:[#allocation5 + $0x118] sm:$0xff]
        %v787 = vld [vmem:[#allocation5 + $0x120] sm:$0xff]
        %v788 = vld [vmem:[#allocation5 + $0x128] sm:$0xff]
        %v789 = vld [vmem:[#allocation5 + $0x130] sm:$0xff]
        %v790 = vld [vmem:[#allocation5 + $0x138] sm:$0xff]
        %v791 = vld [vmem:[#allocation5 + $0x140] sm:$0xff]
        %v792 = vld [vmem:[#allocation5 + $0x148] sm:$0xff]
        %v793 = vld [vmem:[#allocation5 + $0x150] sm:$0xff]
        %v794 = vld [vmem:[#allocation5 + $0x158] sm:$0xff]
        %v795 = vld [vmem:[#allocation5 + $0x160] sm:$0xff]
        %v796 = vld [vmem:[#allocation5 + $0x168] sm:$0xff]
        %v797 = vld [vmem:[#allocation5 + $0x170] sm:$0xff]
        %v798 = vld [vmem:[#allocation5 + $0x178] sm:$0xff]
        %v799 = vld [vmem:[#allocation5 + $0x180] sm:$0xff]
        %v800 = vld [vmem:[#allocation5 + $0x188] sm:$0xff]
        %v801 = vld [vmem:[#allocation5 + $0x190] sm:$0xff]
        %v802 = vld [vmem:[#allocation5 + $0x198] sm:$0xff]
        %v803 = vld [vmem:[#allocation5 + $0x1a0] sm:$0xff]
        %v804 = vld [vmem:[#allocation5 + $0x1a8] sm:$0xff]
        %v805 = vld [vmem:[#allocation5 + $0x1b0] sm:$0xff]
        %v806 = vld [vmem:[#allocation5 + $0x1b8] sm:$0xff]
        %v807 = vld [vmem:[#allocation5 + $0x1c0] sm:$0xff]
        %v808 = vld [vmem:[#allocation5 + $0x1c8] sm:$0xff]
        %v809 = vld [vmem:[#allocation5 + $0x1d0] sm:$0xff]
        %v810 = vld [vmem:[#allocation5 + $0x1d8] sm:$0xff]
        %v811 = vld [vmem:[#allocation5 + $0x1e0] sm:$0xff]
        %v812 = vld [vmem:[#allocation5 + $0x1e8] sm:$0xff]
        %v813 = vld [vmem:[#allocation5 + $0x1f0] sm:$0xff]
        %v814 = vld [vmem:[#allocation5 + $0x1f8] sm:$0xff]
        %v815 = vld [vmem:[#allocation7] sm:$0x3]
        %v817 = vlaneseq
        %v818 = vshrl.u32 %v817, 7
        %v819 = vsub.s32 0, %v818
        %v820 = vrot.slane %v815, %v819
        %v821 = vlaneseq
        %v822 = vshrl.u32 %v821, 7
        %v823 = vsub.s32 1, %v822
        %v824 = vrot.slane %v815, %v823
        %v891 = vunpack.c.l.b16 %v751
        %v892 = vunpack.c.h.b16 %v751
        %v893 = vunpack.c.l.b16 %v752
        %v894 = vunpack.c.h.b16 %v752
        %v895 = vunpack.c.l.b16 %v753
        %v896 = vunpack.c.h.b16 %v753
        %v897 = vunpack.c.l.b16 %v754
        %v898 = vunpack.c.h.b16 %v754
        %v899 = vunpack.c.l.b16 %v755
        %v900 = vunpack.c.h.b16 %v755
        %v901 = vunpack.c.l.b16 %v756
        %v902 = vunpack.c.h.b16 %v756
        %v903 = vunpack.c.l.b16 %v757
        %v904 = vunpack.c.h.b16 %v757
        %v905 = vunpack.c.l.b16 %v758
        %v906 = vunpack.c.h.b16 %v758
        %v907 = vunpack.c.l.b16 %v759
        %v908 = vunpack.c.h.b16 %v759
        %v909 = vunpack.c.l.b16 %v760
        %v910 = vunpack.c.h.b16 %v760
        %v911 = vunpack.c.l.b16 %v761
        %v912 = vunpack.c.h.b16 %v761
        %v913 = vunpack.c.l.b16 %v762
        %v914 = vunpack.c.h.b16 %v762
        %v915 = vunpack.c.l.b16 %v763
        %v916 = vunpack.c.h.b16 %v763
        %v917 = vunpack.c.l.b16 %v764
        %v918 = vunpack.c.h.b16 %v764
        %v919 = vunpack.c.l.b16 %v765
        %v920 = vunpack.c.h.b16 %v765
        %v921 = vunpack.c.l.b16 %v766
        %v922 = vunpack.c.h.b16 %v766
        %v923 = vunpack.c.l.b16 %v767
        %v924 = vunpack.c.h.b16 %v767
        %v925 = vunpack.c.l.b16 %v768
        %v926 = vunpack.c.h.b16 %v768
        %v927 = vunpack.c.l.b16 %v769
        %v928 = vunpack.c.h.b16 %v769
        %v929 = vunpack.c.l.b16 %v770
        %v930 = vunpack.c.h.b16 %v770
        %v931 = vunpack.c.l.b16 %v771
        %v932 = vunpack.c.h.b16 %v771
        %v933 = vunpack.c.l.b16 %v772
        %v934 = vunpack.c.h.b16 %v772
        %v935 = vunpack.c.l.b16 %v773
        %v936 = vunpack.c.h.b16 %v773
        %v937 = vunpack.c.l.b16 %v774
        %v938 = vunpack.c.h.b16 %v774
        %v939 = vunpack.c.l.b16 %v775
        %v940 = vunpack.c.h.b16 %v775
        %v941 = vunpack.c.l.b16 %v776
        %v942 = vunpack.c.h.b16 %v776
        %v943 = vunpack.c.l.b16 %v777
        %v944 = vunpack.c.h.b16 %v777
        %v945 = vunpack.c.l.b16 %v778
        %v946 = vunpack.c.h.b16 %v778
        %v947 = vunpack.c.l.b16 %v779
        %v948 = vunpack.c.h.b16 %v779
        %v949 = vunpack.c.l.b16 %v780
        %v950 = vunpack.c.h.b16 %v780
        %v951 = vunpack.c.l.b16 %v781
        %v952 = vunpack.c.h.b16 %v781
        %v953 = vunpack.c.l.b16 %v782
        %v954 = vunpack.c.h.b16 %v782
        %v955 = vunpack.c.l.b16 %v783
        %v956 = vunpack.c.h.b16 %v783
        %v957 = vunpack.c.l.b16 %v784
        %v958 = vunpack.c.h.b16 %v784
        %v959 = vunpack.c.l.b16 %v785
        %v960 = vunpack.c.h.b16 %v785
        %v961 = vunpack.c.l.b16 %v786
        %v962 = vunpack.c.h.b16 %v786
        %v963 = vunpack.c.l.b16 %v787
        %v964 = vunpack.c.h.b16 %v787
        %v965 = vunpack.c.l.b16 %v788
        %v966 = vunpack.c.h.b16 %v788
        %v967 = vunpack.c.l.b16 %v789
        %v968 = vunpack.c.h.b16 %v789
        %v969 = vunpack.c.l.b16 %v790
        %v970 = vunpack.c.h.b16 %v790
        %v971 = vunpack.c.l.b16 %v791
        %v972 = vunpack.c.h.b16 %v791
        %v973 = vunpack.c.l.b16 %v792
        %v974 = vunpack.c.h.b16 %v792
        %v975 = vunpack.c.l.b16 %v793
        %v976 = vunpack.c.h.b16 %v793
        %v977 = vunpack.c.l.b16 %v794
        %v978 = vunpack.c.h.b16 %v794
        %v979 = vunpack.c.l.b16 %v795
        %v980 = vunpack.c.h.b16 %v795
        %v981 = vunpack.c.l.b16 %v796
        %v982 = vunpack.c.h.b16 %v796
        %v983 = vunpack.c.l.b16 %v797
        %v984 = vunpack.c.h.b16 %v797
        %v985 = vunpack.c.l.b16 %v798
        %v986 = vunpack.c.h.b16 %v798
        %v987 = vunpack.c.l.b16 %v799
        %v988 = vunpack.c.h.b16 %v799
        %v989 = vunpack.c.l.b16 %v800
        %v990 = vunpack.c.h.b16 %v800
        %v991 = vunpack.c.l.b16 %v801
        %v992 = vunpack.c.h.b16 %v801
        %v993 = vunpack.c.l.b16 %v802
        %v994 = vunpack.c.h.b16 %v802
        %v995 = vunpack.c.l.b16 %v803
        %v996 = vunpack.c.h.b16 %v803
        %v997 = vunpack.c.l.b16 %v804
        %v998 = vunpack.c.h.b16 %v804
        %v999 = vunpack.c.l.b16 %v805
        %v1000 = vunpack.c.h.b16 %v805
        %v1001 = vunpack.c.l.b16 %v806
        %v1002 = vunpack.c.h.b16 %v806
        %v1003 = vunpack.c.l.b16 %v807
        %v1004 = vunpack.c.h.b16 %v807
        %v1005 = vunpack.c.l.b16 %v808
        %v1006 = vunpack.c.h.b16 %v808
        %v1007 = vunpack.c.l.b16 %v809
        %v1008 = vunpack.c.h.b16 %v809
        %v1009 = vunpack.c.l.b16 %v810
        %v1010 = vunpack.c.h.b16 %v810
        %v1011 = vunpack.c.l.b16 %v811
        %v1012 = vunpack.c.h.b16 %v811
        %v1013 = vunpack.c.l.b16 %v812
        %v1014 = vunpack.c.h.b16 %v812
        %v1015 = vunpack.c.l.b16 %v813
        %v1016 = vunpack.c.h.b16 %v813
        %v1017 = vunpack.c.l.b16 %v814
        %v1018 = vunpack.c.h.b16 %v814
        %v1019 = vpack.c.b16 %v893, %v891
        %v1020 = vpack.c.b16 %v894, %v892
        %v1021 = vpack.c.b16 %v897, %v895
        %v1022 = vpack.c.b16 %v898, %v896
        %v1023 = vpack.c.b16 %v901, %v899
        %v1024 = vpack.c.b16 %v902, %v900
        %v1025 = vpack.c.b16 %v905, %v903
        %v1026 = vpack.c.b16 %v906, %v904
        %v1027 = vpack.c.b16 %v909, %v907
        %v1028 = vpack.c.b16 %v910, %v908
        %v1029 = vpack.c.b16 %v913, %v911
        %v1030 = vpack.c.b16 %v914, %v912
        %v1031 = vpack.c.b16 %v917, %v915
        %v1032 = vpack.c.b16 %v918, %v916
        %v1033 = vpack.c.b16 %v921, %v919
        %v1034 = vpack.c.b16 %v922, %v920
        %v1035 = vpack.c.b16 %v925, %v923
        %v1036 = vpack.c.b16 %v926, %v924
        %v1037 = vpack.c.b16 %v929, %v927
        %v1038 = vpack.c.b16 %v930, %v928
        %v1039 = vpack.c.b16 %v933, %v931
        %v1040 = vpack.c.b16 %v934, %v932
        %v1041 = vpack.c.b16 %v937, %v935
        %v1042 = vpack.c.b16 %v938, %v936
        %v1043 = vpack.c.b16 %v941, %v939
        %v1044 = vpack.c.b16 %v942, %v940
        %v1045 = vpack.c.b16 %v945, %v943
        %v1046 = vpack.c.b16 %v946, %v944
        %v1047 = vpack.c.b16 %v949, %v947
        %v1048 = vpack.c.b16 %v950, %v948
        %v1049 = vpack.c.b16 %v953, %v951
        %v1050 = vpack.c.b16 %v954, %v952
        %v1051 = vpack.c.b16 %v957, %v955
        %v1052 = vpack.c.b16 %v958, %v956
        %v1053 = vpack.c.b16 %v961, %v959
        %v1054 = vpack.c.b16 %v962, %v960
        %v1055 = vpack.c.b16 %v965, %v963
        %v1056 = vpack.c.b16 %v966, %v964
        %v1057 = vpack.c.b16 %v969, %v967
        %v1058 = vpack.c.b16 %v970, %v968
        %v1059 = vpack.c.b16 %v973, %v971
        %v1060 = vpack.c.b16 %v974, %v972
        %v1061 = vpack.c.b16 %v977, %v975
        %v1062 = vpack.c.b16 %v978, %v976
        %v1063 = vpack.c.b16 %v981, %v979
        %v1064 = vpack.c.b16 %v982, %v980
        %v1065 = vpack.c.b16 %v985, %v983
        %v1066 = vpack.c.b16 %v986, %v984
        %v1067 = vpack.c.b16 %v989, %v987
        %v1068 = vpack.c.b16 %v990, %v988
        %v1069 = vpack.c.b16 %v993, %v991
        %v1070 = vpack.c.b16 %v994, %v992
        %v1071 = vpack.c.b16 %v997, %v995
        %v1072 = vpack.c.b16 %v998, %v996
        %v1073 = vpack.c.b16 %v1001, %v999
        %v1074 = vpack.c.b16 %v1002, %v1000
        %v1075 = vpack.c.b16 %v1005, %v1003
        %v1076 = vpack.c.b16 %v1006, %v1004
        %v1077 = vpack.c.b16 %v1009, %v1007
        %v1078 = vpack.c.b16 %v1010, %v1008
        %v1079 = vpack.c.b16 %v1013, %v1011
        %v1080 = vpack.c.b16 %v1014, %v1012
        %v1081 = vpack.c.b16 %v1017, %v1015
        %v1082 = vpack.c.b16 %v1018, %v1016
        %1147 = vmatprep.subr.bf16.mxu0 %v1020
        %1148 = vmatpush1.bf16.msra.mxu0 %v1019
        %1149 = vmatprep.subr.bf16.mxu0 %v1022
        %1150 = vmatpush1.bf16.msra.mxu0 %v1021
        %1151 = vmatprep.subr.bf16.mxu0 %v1024
        %1152 = vmatpush1.bf16.msra.mxu0 %v1023
        %1153 = vmatprep.subr.bf16.mxu0 %v1026
        %1154 = vmatpush1.bf16.msra.mxu0 %v1025
        %1155 = vmatprep.subr.bf16.mxu0 %v1028
        %1156 = vmatpush1.bf16.msra.mxu0 %v1027
        %1157 = vmatprep.subr.bf16.mxu0 %v1030
        %1158 = vmatpush1.bf16.msra.mxu0 %v1029
        %1159 = vmatprep.subr.bf16.mxu0 %v1032
        %1160 = vmatpush1.bf16.msra.mxu0 %v1031
        %1161 = vmatprep.subr.bf16.mxu0 %v1034
        %1162 = vmatpush1.bf16.msra.mxu0 %v1033
        %1163 = vmatprep.subr.bf16.mxu0 %v1036
        %1164 = vmatpush1.bf16.msra.mxu0 %v1035
        %1165 = vmatprep.subr.bf16.mxu0 %v1038
        %1166 = vmatpush1.bf16.msra.mxu0 %v1037
        %1167 = vmatprep.subr.bf16.mxu0 %v1040
        %1168 = vmatpush1.bf16.msra.mxu0 %v1039
        %1169 = vmatprep.subr.bf16.mxu0 %v1042
        %1170 = vmatpush1.bf16.msra.mxu0 %v1041
        %1171 = vmatprep.subr.bf16.mxu0 %v1044
        %1172 = vmatpush1.bf16.msra.mxu0 %v1043
        %1173 = vmatprep.subr.bf16.mxu0 %v1046
        %1174 = vmatpush1.bf16.msra.mxu0 %v1045
        %1175 = vmatprep.subr.bf16.mxu0 %v1048
        %1176 = vmatpush1.bf16.msra.mxu0 %v1047
        %1177 = vmatprep.subr.bf16.mxu0 %v1050
        %1178 = vmatpush1.bf16.msra.mxu0 %v1049
        %1179 = vmatprep.mubr.bf16.mxu0 %v748
        %1180 = vmatmul.mubr.bf16.gmra.mrb[0].mxu0 %v747
        %v1181 = vpop.f32.mrb[0].mxu0
        %v1182 = vadd.f32 %v820, %v1181
        %v1183 = vpop.f32.mrb[0].mxu0
        %v1184 = vadd.f32 %v824, %v1183
        %v1185 = vpop.f32.mrb[0].mxu0
        %v1186 = vadd.f32 %v820, %v1185
        %v1187 = vpop.f32.mrb[0].mxu0
        %v1188 = vadd.f32 %v824, %v1187
        %1189 = vdwg.mxu0
        %1190 = vmatprep.subr.bf16.mxu0 %v1052
        %1191 = vmatpush1.bf16.msra.mxu0 %v1051
        %1192 = vmatprep.subr.bf16.mxu0 %v1054
        %1193 = vmatpush1.bf16.msra.mxu0 %v1053
        %1194 = vmatprep.subr.bf16.mxu0 %v1056
        %1195 = vmatpush1.bf16.msra.mxu0 %v1055
        %1196 = vmatprep.subr.bf16.mxu0 %v1058
        %1197 = vmatpush1.bf16.msra.mxu0 %v1057
        %1198 = vmatprep.subr.bf16.mxu0 %v1060
        %1199 = vmatpush1.bf16.msra.mxu0 %v1059
        %1200 = vmatprep.subr.bf16.mxu0 %v1062
        %1201 = vmatpush1.bf16.msra.mxu0 %v1061
        %1202 = vmatprep.subr.bf16.mxu0 %v1064
        %1203 = vmatpush1.bf16.msra.mxu0 %v1063
        %1204 = vmatprep.subr.bf16.mxu0 %v1066
        %1205 = vmatpush1.bf16.msra.mxu0 %v1065
        %1206 = vmatprep.subr.bf16.mxu0 %v1068
        %1207 = vmatpush1.bf16.msra.mxu0 %v1067
        %1208 = vmatprep.subr.bf16.mxu0 %v1070
        %1209 = vmatpush1.bf16.msra.mxu0 %v1069
        %1210 = vmatprep.subr.bf16.mxu0 %v1072
        %1211 = vmatpush1.bf16.msra.mxu0 %v1071
        %1212 = vmatprep.subr.bf16.mxu0 %v1074
        %1213 = vmatpush1.bf16.msra.mxu0 %v1073
        %1214 = vmatprep.subr.bf16.mxu0 %v1076
        %1215 = vmatpush1.bf16.msra.mxu0 %v1075
        %1216 = vmatprep.subr.bf16.mxu0 %v1078
        %1217 = vmatpush1.bf16.msra.mxu0 %v1077
        %1218 = vmatprep.subr.bf16.mxu0 %v1080
        %1219 = vmatpush1.bf16.msra.mxu0 %v1079
        %1220 = vmatprep.subr.bf16.mxu0 %v1082
        %1221 = vmatpush1.bf16.msra.mxu0 %v1081
        %1222 = vmatprep.mubr.bf16.mxu0 %v750
        %1223 = vmatmul.mubr.bf16.gmra.mrb[0].mxu0 %v749
        %v1224 = vpop.f32.mrb[0].mxu0
        %v1225 = vadd.f32 %v1182, %v1224
        %v1226 = vpop.f32.mrb[0].mxu0
        %v1227 = vadd.f32 %v1184, %v1226
        %v1228 = vpop.f32.mrb[0].mxu0
        %v1229 = vadd.f32 %v1186, %v1228
        %v1230 = vpop.f32.mrb[0].mxu0
        %v1231 = vadd.f32 %v1188, %v1230
        %1232 = vdwg.mxu0
        %v1233 = vmax.f32 %v1225, 0.0
        %v1234 = vmax.f32 %v1227, 0.0
        %v1235 = vmax.f32 %v1229, 0.0
        %v1236 = vmax.f32 %v1231, 0.0
        %v1237 = vpack.c.bf16 %v1235, %v1233
        %v1238 = vpack.c.bf16 %v1236, %v1234
        %v1239 = vld [vmem:[#allocation8] sm:$0xff]
        %v1240 = vld [vmem:[#allocation8 + $0x8] sm:$0xff]
        %v1241 = vld [vmem:[#allocation8 + $0x10] sm:$0xf]
        %v1242 = vld [vmem:[#allocation8 + $0x14] sm:$0xff]
        %v1243 = vld [vmem:[#allocation8 + $0x1c] sm:$0xff]
        %v1244 = vld [vmem:[#allocation8 + $0x24] sm:$0xf]
        %v1245 = vld [vmem:[#allocation8 + $0x28] sm:$0xff]
        %v1246 = vld [vmem:[#allocation8 + $0x30] sm:$0xff]
        %v1247 = vld [vmem:[#allocation8 + $0x38] sm:$0xf]
        %v1248 = vld [vmem:[#allocation8 + $0x3c] sm:$0xff]
        %v1249 = vld [vmem:[#allocation8 + $0x44] sm:$0xff]
        %v1250 = vld [vmem:[#allocation8 + $0x4c] sm:$0xf]
        %v1251 = vld [vmem:[#allocation8 + $0x50] sm:$0xff]
        %v1252 = vld [vmem:[#allocation8 + $0x58] sm:$0xff]
        %v1253 = vld [vmem:[#allocation8 + $0x60] sm:$0xf]
        %v1254 = vld [vmem:[#allocation8 + $0x64] sm:$0xff]
        %v1255 = vld [vmem:[#allocation8 + $0x6c] sm:$0xff]
        %v1256 = vld [vmem:[#allocation8 + $0x74] sm:$0xf]
        %v1257 = vld [vmem:[#allocation8 + $0x78] sm:$0xff]
        %v1258 = vld [vmem:[#allocation8 + $0x80] sm:$0xff]
        %v1259 = vld [vmem:[#allocation8 + $0x88] sm:$0xf]
        %v1260 = vld [vmem:[#allocation8 + $0x8c] sm:$0xff]
        %v1261 = vld [vmem:[#allocation8 + $0x94] sm:$0xff]
        %v1262 = vld [vmem:[#allocation8 + $0x9c] sm:$0xf]
        %v1263 = vld [vmem:[#allocation8 + $0xa0] sm:$0xff]
        %v1264 = vld [vmem:[#allocation8 + $0xa8] sm:$0xff]
        %v1265 = vld [vmem:[#allocation8 + $0xb0] sm:$0xf]
        %v1266 = vld [vmem:[#allocation8 + $0xb4] sm:$0xff]
        %v1267 = vld [vmem:[#allocation8 + $0xbc] sm:$0xff]
        %v1268 = vld [vmem:[#allocation8 + $0xc4] sm:$0xf]
        %v1269 = vld [vmem:[#allocation8 + $0xc8] sm:$0xff]
        %v1270 = vld [vmem:[#allocation8 + $0xd0] sm:$0xff]
        %v1271 = vld [vmem:[#allocation8 + $0xd8] sm:$0xf]
        %v1272 = vld [vmem:[#allocation8 + $0xdc] sm:$0xff]
        %v1273 = vld [vmem:[#allocation8 + $0xe4] sm:$0xff]
        %v1274 = vld [vmem:[#allocation8 + $0xec] sm:$0xf]
        %v1275 = vld [vmem:[#allocation8 + $0xf0] sm:$0xff]
        %v1276 = vld [vmem:[#allocation8 + $0xf8] sm:$0xff]
        %v1277 = vld [vmem:[#allocation8 + $0x100] sm:$0xf]
        %v1278 = vld [vmem:[#allocation8 + $0x104] sm:$0xff]
        %v1279 = vld [vmem:[#allocation8 + $0x10c] sm:$0xff]
        %v1280 = vld [vmem:[#allocation8 + $0x114] sm:$0xf]
        %v1281 = vld [vmem:[#allocation8 + $0x118] sm:$0xff]
        %v1282 = vld [vmem:[#allocation8 + $0x120] sm:$0xff]
        %v1283 = vld [vmem:[#allocation8 + $0x128] sm:$0xf]
        %v1284 = vld [vmem:[#allocation8 + $0x12c] sm:$0xff]
        %v1285 = vld [vmem:[#allocation8 + $0x134] sm:$0xff]
        %v1286 = vld [vmem:[#allocation8 + $0x13c] sm:$0xf]
        %v1287 = vld [vmem:[#allocation8 + $0x140] sm:$0xff]
        %v1288 = vld [vmem:[#allocation8 + $0x148] sm:$0xff]
        %v1289 = vld [vmem:[#allocation8 + $0x150] sm:$0xf]
        %v1290 = vld [vmem:[#allocation8 + $0x154] sm:$0xff]
        %v1291 = vld [vmem:[#allocation8 + $0x15c] sm:$0xff]
        %v1292 = vld [vmem:[#allocation8 + $0x164] sm:$0xf]
        %v1293 = vld [vmem:[#allocation8 + $0x168] sm:$0xff]
        %v1294 = vld [vmem:[#allocation8 + $0x170] sm:$0xff]
        %v1295 = vld [vmem:[#allocation8 + $0x178] sm:$0xf]
        %v1296 = vld [vmem:[#allocation8 + $0x17c] sm:$0xff]
        %v1297 = vld [vmem:[#allocation8 + $0x184] sm:$0xff]
        %v1298 = vld [vmem:[#allocation8 + $0x18c] sm:$0xf]
        %v1299 = vld [vmem:[#allocation8 + $0x190] sm:$0xff]
        %v1300 = vld [vmem:[#allocation8 + $0x198] sm:$0xff]
        %v1301 = vld [vmem:[#allocation8 + $0x1a0] sm:$0xf]
        %v1302 = vld [vmem:[#allocation8 + $0x1a4] sm:$0xff]
        %v1303 = vld [vmem:[#allocation8 + $0x1ac] sm:$0xff]
        %v1304 = vld [vmem:[#allocation8 + $0x1b4] sm:$0xf]
        %v1305 = vld [vmem:[#allocation8 + $0x1b8] sm:$0xff]
        %v1306 = vld [vmem:[#allocation8 + $0x1c0] sm:$0xff]
        %v1307 = vld [vmem:[#allocation8 + $0x1c8] sm:$0xf]
        %v1308 = vld [vmem:[#allocation8 + $0x1cc] sm:$0xff]
        %v1309 = vld [vmem:[#allocation8 + $0x1d4] sm:$0xff]
        %v1310 = vld [vmem:[#allocation8 + $0x1dc] sm:$0xf]
        %v1311 = vld [vmem:[#allocation8 + $0x1e0] sm:$0xff]
        %v1312 = vld [vmem:[#allocation8 + $0x1e8] sm:$0xff]
        %v1313 = vld [vmem:[#allocation8 + $0x1f0] sm:$0xf]
        %v1314 = vld [vmem:[#allocation8 + $0x1f4] sm:$0xff]
        %v1315 = vld [vmem:[#allocation8 + $0x1fc] sm:$0xff]
        %v1316 = vld [vmem:[#allocation8 + $0x204] sm:$0xf]
        %v1317 = vld [vmem:[#allocation8 + $0x208] sm:$0xff]
        %v1318 = vld [vmem:[#allocation8 + $0x210] sm:$0xff]
        %v1319 = vld [vmem:[#allocation8 + $0x218] sm:$0xf]
        %v1320 = vld [vmem:[#allocation8 + $0x21c] sm:$0xff]
        %v1321 = vld [vmem:[#allocation8 + $0x224] sm:$0xff]
        %v1322 = vld [vmem:[#allocation8 + $0x22c] sm:$0xf]
        %v1323 = vld [vmem:[#allocation8 + $0x230] sm:$0xff]
        %v1324 = vld [vmem:[#allocation8 + $0x238] sm:$0xff]
        %v1325 = vld [vmem:[#allocation8 + $0x240] sm:$0xf]
        %v1326 = vld [vmem:[#allocation8 + $0x244] sm:$0xff]
        %v1327 = vld [vmem:[#allocation8 + $0x24c] sm:$0xff]
        %v1328 = vld [vmem:[#allocation8 + $0x254] sm:$0xf]
        %v1329 = vld [vmem:[#allocation8 + $0x258] sm:$0xff]
        %v1330 = vld [vmem:[#allocation8 + $0x260] sm:$0xff]
        %v1331 = vld [vmem:[#allocation8 + $0x268] sm:$0xf]
        %v1332 = vld [vmem:[#allocation8 + $0x26c] sm:$0xff]
        %v1333 = vld [vmem:[#allocation8 + $0x274] sm:$0xff]
        %v1334 = vld [vmem:[#allocation8 + $0x27c] sm:$0xf]
        %v1335 = vld [vmem:[%s4] sm:$0x1f]
        %v1337 = vlaneseq
        %v1338 = vshrl.u32 %v1337, 7
        %v1339 = vsub.s32 0, %v1338
        %v1340 = vrot.slane %v1335, %v1339
        %v1341 = vlaneseq
        %v1342 = vshrl.u32 %v1341, 7
        %v1343 = vsub.s32 1, %v1342
        %v1344 = vrot.slane %v1335, %v1343
        %v1345 = vlaneseq
        %v1346 = vshrl.u32 %v1345, 7
        %v1347 = vsub.s32 2, %v1346
        %v1348 = vrot.slane %v1335, %v1347
        %v1349 = vlaneseq
        %v1350 = vshrl.u32 %v1349, 7
        %v1351 = vsub.s32 3, %v1350
        %v1352 = vrot.slane %v1335, %v1351
        %v1353 = vlaneseq
        %v1354 = vshrl.u32 %v1353, 7
        %v1355 = vsub.s32 4, %v1354
        %v1356 = vrot.slane %v1335, %v1355
        %v1458 = vunpack.c.l.b16 %v1239
        %v1459 = vunpack.c.h.b16 %v1239
        %v1460 = vunpack.c.l.b16 %v1240
        %v1461 = vunpack.c.h.b16 %v1240
        %v1462 = vunpack.c.l.b16 %v1241
        %v1463 = vunpack.c.l.b16 %v1242
        %v1464 = vunpack.c.h.b16 %v1242
        %v1465 = vunpack.c.l.b16 %v1243
        %v1466 = vunpack.c.h.b16 %v1243
        %v1467 = vunpack.c.l.b16 %v1244
        %v1468 = vunpack.c.l.b16 %v1245
        %v1469 = vunpack.c.h.b16 %v1245
        %v1470 = vunpack.c.l.b16 %v1246
        %v1471 = vunpack.c.h.b16 %v1246
        %v1472 = vunpack.c.l.b16 %v1247
        %v1473 = vunpack.c.l.b16 %v1248
        %v1474 = vunpack.c.h.b16 %v1248
        %v1475 = vunpack.c.l.b16 %v1249
        %v1476 = vunpack.c.h.b16 %v1249
        %v1477 = vunpack.c.l.b16 %v1250
        %v1478 = vunpack.c.l.b16 %v1251
        %v1479 = vunpack.c.h.b16 %v1251
        %v1480 = vunpack.c.l.b16 %v1252
        %v1481 = vunpack.c.h.b16 %v1252
        %v1482 = vunpack.c.l.b16 %v1253
        %v1483 = vunpack.c.l.b16 %v1254
        %v1484 = vunpack.c.h.b16 %v1254
        %v1485 = vunpack.c.l.b16 %v1255
        %v1486 = vunpack.c.h.b16 %v1255
        %v1487 = vunpack.c.l.b16 %v1256
        %v1488 = vunpack.c.l.b16 %v1257
        %v1489 = vunpack.c.h.b16 %v1257
        %v1490 = vunpack.c.l.b16 %v1258
        %v1491 = vunpack.c.h.b16 %v1258
        %v1492 = vunpack.c.l.b16 %v1259
        %v1493 = vunpack.c.l.b16 %v1260
        %v1494 = vunpack.c.h.b16 %v1260
        %v1495 = vunpack.c.l.b16 %v1261
        %v1496 = vunpack.c.h.b16 %v1261
        %v1497 = vunpack.c.l.b16 %v1262
        %v1498 = vunpack.c.l.b16 %v1263
        %v1499 = vunpack.c.h.b16 %v1263
        %v1500 = vunpack.c.l.b16 %v1264
        %v1501 = vunpack.c.h.b16 %v1264
        %v1502 = vunpack.c.l.b16 %v1265
        %v1503 = vunpack.c.l.b16 %v1266
        %v1504 = vunpack.c.h.b16 %v1266
        %v1505 = vunpack.c.l.b16 %v1267
        %v1506 = vunpack.c.h.b16 %v1267
        %v1507 = vunpack.c.l.b16 %v1268
        %v1508 = vunpack.c.l.b16 %v1269
        %v1509 = vunpack.c.h.b16 %v1269
        %v1510 = vunpack.c.l.b16 %v1270
        %v1511 = vunpack.c.h.b16 %v1270
        %v1512 = vunpack.c.l.b16 %v1271
        %v1513 = vunpack.c.l.b16 %v1272
        %v1514 = vunpack.c.h.b16 %v1272
        %v1515 = vunpack.c.l.b16 %v1273
        %v1516 = vunpack.c.h.b16 %v1273
        %v1517 = vunpack.c.l.b16 %v1274
        %v1518 = vunpack.c.l.b16 %v1275
        %v1519 = vunpack.c.h.b16 %v1275
        %v1520 = vunpack.c.l.b16 %v1276
        %v1521 = vunpack.c.h.b16 %v1276
        %v1522 = vunpack.c.l.b16 %v1277
        %v1523 = vunpack.c.l.b16 %v1278
        %v1524 = vunpack.c.h.b16 %v1278
        %v1525 = vunpack.c.l.b16 %v1279
        %v1526 = vunpack.c.h.b16 %v1279
        %v1527 = vunpack.c.l.b16 %v1280
        %v1528 = vunpack.c.l.b16 %v1281
        %v1529 = vunpack.c.h.b16 %v1281
        %v1530 = vunpack.c.l.b16 %v1282
        %v1531 = vunpack.c.h.b16 %v1282
        %v1532 = vunpack.c.l.b16 %v1283
        %v1533 = vunpack.c.l.b16 %v1284
        %v1534 = vunpack.c.h.b16 %v1284
        %v1535 = vunpack.c.l.b16 %v1285
        %v1536 = vunpack.c.h.b16 %v1285
        %v1537 = vunpack.c.l.b16 %v1286
        %v1538 = vunpack.c.l.b16 %v1287
        %v1539 = vunpack.c.h.b16 %v1287
        %v1540 = vunpack.c.l.b16 %v1288
        %v1541 = vunpack.c.h.b16 %v1288
        %v1542 = vunpack.c.l.b16 %v1289
        %v1543 = vunpack.c.l.b16 %v1290
        %v1544 = vunpack.c.h.b16 %v1290
        %v1545 = vunpack.c.l.b16 %v1291
        %v1546 = vunpack.c.h.b16 %v1291
        %v1547 = vunpack.c.l.b16 %v1292
        %v1548 = vunpack.c.l.b16 %v1293
        %v1549 = vunpack.c.h.b16 %v1293
        %v1550 = vunpack.c.l.b16 %v1294
        %v1551 = vunpack.c.h.b16 %v1294
        %v1552 = vunpack.c.l.b16 %v1295
        %v1553 = vunpack.c.l.b16 %v1296
        %v1554 = vunpack.c.h.b16 %v1296
        %v1555 = vunpack.c.l.b16 %v1297
        %v1556 = vunpack.c.h.b16 %v1297
        %v1557 = vunpack.c.l.b16 %v1298
        %v1558 = vunpack.c.l.b16 %v1299
        %v1559 = vunpack.c.h.b16 %v1299
        %v1560 = vunpack.c.l.b16 %v1300
        %v1561 = vunpack.c.h.b16 %v1300
        %v1562 = vunpack.c.l.b16 %v1301
        %v1563 = vunpack.c.l.b16 %v1302
        %v1564 = vunpack.c.h.b16 %v1302
        %v1565 = vunpack.c.l.b16 %v1303
        %v1566 = vunpack.c.h.b16 %v1303
        %v1567 = vunpack.c.l.b16 %v1304
        %v1568 = vunpack.c.l.b16 %v1305
        %v1569 = vunpack.c.h.b16 %v1305
        %v1570 = vunpack.c.l.b16 %v1306
        %v1571 = vunpack.c.h.b16 %v1306
        %v1572 = vunpack.c.l.b16 %v1307
        %v1573 = vunpack.c.l.b16 %v1308
        %v1574 = vunpack.c.h.b16 %v1308
        %v1575 = vunpack.c.l.b16 %v1309
        %v1576 = vunpack.c.h.b16 %v1309
        %v1577 = vunpack.c.l.b16 %v1310
        %v1578 = vunpack.c.l.b16 %v1311
        %v1579 = vunpack.c.h.b16 %v1311
        %v1580 = vunpack.c.l.b16 %v1312
        %v1581 = vunpack.c.h.b16 %v1312
        %v1582 = vunpack.c.l.b16 %v1313
        %v1583 = vunpack.c.l.b16 %v1314
        %v1584 = vunpack.c.h.b16 %v1314
        %v1585 = vunpack.c.l.b16 %v1315
        %v1586 = vunpack.c.h.b16 %v1315
        %v1587 = vunpack.c.l.b16 %v1316
        %v1588 = vunpack.c.l.b16 %v1317
        %v1589 = vunpack.c.h.b16 %v1317
        %v1590 = vunpack.c.l.b16 %v1318
        %v1591 = vunpack.c.h.b16 %v1318
        %v1592 = vunpack.c.l.b16 %v1319
        %v1593 = vunpack.c.l.b16 %v1320
        %v1594 = vunpack.c.h.b16 %v1320
        %v1595 = vunpack.c.l.b16 %v1321
        %v1596 = vunpack.c.h.b16 %v1321
        %v1597 = vunpack.c.l.b16 %v1322
        %v1598 = vunpack.c.l.b16 %v1323
        %v1599 = vunpack.c.h.b16 %v1323
        %v1600 = vunpack.c.l.b16 %v1324
        %v1601 = vunpack.c.h.b16 %v1324
        %v1602 = vunpack.c.l.b16 %v1325
        %v1603 = vunpack.c.l.b16 %v1326
        %v1604 = vunpack.c.h.b16 %v1326
        %v1605 = vunpack.c.l.b16 %v1327
        %v1606 = vunpack.c.h.b16 %v1327
        %v1607 = vunpack.c.l.b16 %v1328
        %v1608 = vunpack.c.l.b16 %v1329
        %v1609 = vunpack.c.h.b16 %v1329
        %v1610 = vunpack.c.l.b16 %v1330
        %v1611 = vunpack.c.h.b16 %v1330
        %v1612 = vunpack.c.l.b16 %v1331
        %v1613 = vunpack.c.l.b16 %v1332
        %v1614 = vunpack.c.h.b16 %v1332
        %v1615 = vunpack.c.l.b16 %v1333
        %v1616 = vunpack.c.h.b16 %v1333
        %v1617 = vunpack.c.l.b16 %v1334
        %v1618 = vpack.c.b16 %v1463, %v1458
        %v1619 = vpack.c.b16 %v1464, %v1459
        %v1620 = vpack.c.b16 %v1465, %v1460
        %v1621 = vpack.c.b16 %v1466, %v1461
        %v1622 = vpack.c.b16 %v1467, %v1462
        %v1623 = vpack.c.b16 %v1473, %v1468
        %v1624 = vpack.c.b16 %v1474, %v1469
        %v1625 = vpack.c.b16 %v1475, %v1470
        %v1626 = vpack.c.b16 %v1476, %v1471
        %v1627 = vpack.c.b16 %v1477, %v1472
        %v1628 = vpack.c.b16 %v1483, %v1478
        %v1629 = vpack.c.b16 %v1484, %v1479
        %v1630 = vpack.c.b16 %v1485, %v1480
        %v1631 = vpack.c.b16 %v1486, %v1481
        %v1632 = vpack.c.b16 %v1487, %v1482
        %v1633 = vpack.c.b16 %v1493, %v1488
        %v1634 = vpack.c.b16 %v1494, %v1489
        %v1635 = vpack.c.b16 %v1495, %v1490
        %v1636 = vpack.c.b16 %v1496, %v1491
        %v1637 = vpack.c.b16 %v1497, %v1492
        %v1638 = vpack.c.b16 %v1503, %v1498
        %v1639 = vpack.c.b16 %v1504, %v1499
        %v1640 = vpack.c.b16 %v1505, %v1500
        %v1641 = vpack.c.b16 %v1506, %v1501
        %v1642 = vpack.c.b16 %v1507, %v1502
        %v1643 = vpack.c.b16 %v1513, %v1508
        %v1644 = vpack.c.b16 %v1514, %v1509
        %v1645 = vpack.c.b16 %v1515, %v1510
        %v1646 = vpack.c.b16 %v1516, %v1511
        %v1647 = vpack.c.b16 %v1517, %v1512
        %v1648 = vpack.c.b16 %v1523, %v1518
        %v1649 = vpack.c.b16 %v1524, %v1519
        %v1650 = vpack.c.b16 %v1525, %v1520
        %v1651 = vpack.c.b16 %v1526, %v1521
        %v1652 = vpack.c.b16 %v1527, %v1522
        %v1653 = vpack.c.b16 %v1533, %v1528
        %v1654 = vpack.c.b16 %v1534, %v1529
        %v1655 = vpack.c.b16 %v1535, %v1530
        %v1656 = vpack.c.b16 %v1536, %v1531
        %v1657 = vpack.c.b16 %v1537, %v1532
        %v1658 = vpack.c.b16 %v1543, %v1538
        %v1659 = vpack.c.b16 %v1544, %v1539
        %v1660 = vpack.c.b16 %v1545, %v1540
        %v1661 = vpack.c.b16 %v1546, %v1541
        %v1662 = vpack.c.b16 %v1547, %v1542
        %v1663 = vpack.c.b16 %v1553, %v1548
        %v1664 = vpack.c.b16 %v1554, %v1549
        %v1665 = vpack.c.b16 %v1555, %v1550
        %v1666 = vpack.c.b16 %v1556, %v1551
        %v1667 = vpack.c.b16 %v1557, %v1552
        %v1668 = vpack.c.b16 %v1563, %v1558
        %v1669 = vpack.c.b16 %v1564, %v1559
        %v1670 = vpack.c.b16 %v1565, %v1560
        %v1671 = vpack.c.b16 %v1566, %v1561
        %v1672 = vpack.c.b16 %v1567, %v1562
        %v1673 = vpack.c.b16 %v1573, %v1568
        %v1674 = vpack.c.b16 %v1574, %v1569
        %v1675 = vpack.c.b16 %v1575, %v1570
        %v1676 = vpack.c.b16 %v1576, %v1571
        %v1677 = vpack.c.b16 %v1577, %v1572
        %v1678 = vpack.c.b16 %v1583, %v1578
        %v1679 = vpack.c.b16 %v1584, %v1579
        %v1680 = vpack.c.b16 %v1585, %v1580
        %v1681 = vpack.c.b16 %v1586, %v1581
        %v1682 = vpack.c.b16 %v1587, %v1582
        %v1683 = vpack.c.b16 %v1593, %v1588
        %v1684 = vpack.c.b16 %v1594, %v1589
        %v1685 = vpack.c.b16 %v1595, %v1590
        %v1686 = vpack.c.b16 %v1596, %v1591
        %v1687 = vpack.c.b16 %v1597, %v1592
        %v1688 = vpack.c.b16 %v1603, %v1598
        %v1689 = vpack.c.b16 %v1604, %v1599
        %v1690 = vpack.c.b16 %v1605, %v1600
        %v1691 = vpack.c.b16 %v1606, %v1601
        %v1692 = vpack.c.b16 %v1607, %v1602
        %v1693 = vpack.c.b16 %v1613, %v1608
        %v1694 = vpack.c.b16 %v1614, %v1609
        %v1695 = vpack.c.b16 %v1615, %v1610
        %v1696 = vpack.c.b16 %v1616, %v1611
        %v1697 = vpack.c.b16 %v1617, %v1612
        %1778 = vmatprep.subr.bf16.mxu0 %v1619
        %1779 = vmatpush1.bf16.msra.mxu0 %v1618
        %1780 = vmatprep.subr.bf16.mxu0 %v1624
        %1781 = vmatpush1.bf16.msra.mxu0 %v1623
        %1782 = vmatprep.subr.bf16.mxu0 %v1629
        %1783 = vmatpush1.bf16.msra.mxu0 %v1628
        %1784 = vmatprep.subr.bf16.mxu0 %v1634
        %1785 = vmatpush1.bf16.msra.mxu0 %v1633
        %1786 = vmatprep.subr.bf16.mxu0 %v1639
        %1787 = vmatpush1.bf16.msra.mxu0 %v1638
        %1788 = vmatprep.subr.bf16.mxu0 %v1644
        %1789 = vmatpush1.bf16.msra.mxu0 %v1643
        %1790 = vmatprep.subr.bf16.mxu0 %v1649
        %1791 = vmatpush1.bf16.msra.mxu0 %v1648
        %1792 = vmatprep.subr.bf16.mxu0 %v1654
        %1793 = vmatpush1.bf16.msra.mxu0 %v1653
        %1794 = vmatprep.subr.bf16.mxu0 %v1659
        %1795 = vmatpush1.bf16.msra.mxu0 %v1658
        %1796 = vmatprep.subr.bf16.mxu0 %v1664
        %1797 = vmatpush1.bf16.msra.mxu0 %v1663
        %1798 = vmatprep.subr.bf16.mxu0 %v1669
        %1799 = vmatpush1.bf16.msra.mxu0 %v1668
        %1800 = vmatprep.subr.bf16.mxu0 %v1674
        %1801 = vmatpush1.bf16.msra.mxu0 %v1673
        %1802 = vmatprep.subr.bf16.mxu0 %v1679
        %1803 = vmatpush1.bf16.msra.mxu0 %v1678
        %1804 = vmatprep.subr.bf16.mxu0 %v1684
        %1805 = vmatpush1.bf16.msra.mxu0 %v1683
        %1806 = vmatprep.subr.bf16.mxu0 %v1689
        %1807 = vmatpush1.bf16.msra.mxu0 %v1688
        %1808 = vmatprep.subr.bf16.mxu0 %v1694
        %1809 = vmatpush1.bf16.msra.mxu0 %v1693
        %1810 = vmatprep.mubr.bf16.mxu0 %v1238
        %1811 = vmatmul.mubr.bf16.gmra.mrb[0].mxu0 %v1237
        %v1812 = vpop.f32.mrb[0].mxu0
        %v1813 = vadd.f32 %v1340, %v1812
        %v1814 = vpop.f32.mrb[0].mxu0
        %v1815 = vadd.f32 %v1344, %v1814
        %v1816 = vpop.f32.mrb[0].mxu0
        %v1817 = vadd.f32 %v1340, %v1816
        %v1818 = vpop.f32.mrb[0].mxu0
        %v1819 = vadd.f32 %v1344, %v1818
        %1820 = vdwg.mxu0
        %1821 = vmatprep.subr.bf16.mxu0 %v1621
        %1822 = vmatpush1.bf16.msra.mxu0 %v1620
        %1823 = vmatprep.subr.bf16.mxu0 %v1626
        %1824 = vmatpush1.bf16.msra.mxu0 %v1625
        %1825 = vmatprep.subr.bf16.mxu0 %v1631
        %1826 = vmatpush1.bf16.msra.mxu0 %v1630
        %1827 = vmatprep.subr.bf16.mxu0 %v1636
        %1828 = vmatpush1.bf16.msra.mxu0 %v1635
        %1829 = vmatprep.subr.bf16.mxu0 %v1641
        %1830 = vmatpush1.bf16.msra.mxu0 %v1640
        %1831 = vmatprep.subr.bf16.mxu0 %v1646
        %1832 = vmatpush1.bf16.msra.mxu0 %v1645
        %1833 = vmatprep.subr.bf16.mxu0 %v1651
        %1834 = vmatpush1.bf16.msra.mxu0 %v1650
        %1835 = vmatprep.subr.bf16.mxu0 %v1656
        %1836 = vmatpush1.bf16.msra.mxu0 %v1655
        %1837 = vmatprep.subr.bf16.mxu0 %v1661
        %1838 = vmatpush1.bf16.msra.mxu0 %v1660
        %1839 = vmatprep.subr.bf16.mxu0 %v1666
        %1840 = vmatpush1.bf16.msra.mxu0 %v1665
        %1841 = vmatprep.subr.bf16.mxu0 %v1671
        %1842 = vmatpush1.bf16.msra.mxu0 %v1670
        %1843 = vmatprep.subr.bf16.mxu0 %v1676
        %1844 = vmatpush1.bf16.msra.mxu0 %v1675
        %1845 = vmatprep.subr.bf16.mxu0 %v1681
        %1846 = vmatpush1.bf16.msra.mxu0 %v1680
        %1847 = vmatprep.subr.bf16.mxu0 %v1686
        %1848 = vmatpush1.bf16.msra.mxu0 %v1685
        %1849 = vmatprep.subr.bf16.mxu0 %v1691
        %1850 = vmatpush1.bf16.msra.mxu0 %v1690
        %1851 = vmatprep.subr.bf16.mxu0 %v1696
        %1852 = vmatpush1.bf16.msra.mxu0 %v1695
        %1853 = vmatprep.mubr.bf16.mxu0 %v1238
        %1854 = vmatmul.mubr.bf16.gmra.mrb[0].mxu0 %v1237
        %v1855 = vpop.f32.mrb[0].mxu0
        %v1856 = vadd.f32 %v1348, %v1855
        %v1857 = vpop.f32.mrb[0].mxu0
        %v1858 = vadd.f32 %v1352, %v1857
        %v1859 = vpop.f32.mrb[0].mxu0
        %v1860 = vadd.f32 %v1348, %v1859
        %v1861 = vpop.f32.mrb[0].mxu0
        %v1862 = vadd.f32 %v1352, %v1861
        %1863 = vdwg.mxu0
        %1864 = vmatprep.subr.bf16.mxu0 0
        %1865 = vmatpush1.bf16.msra.mxu0 %v1622
        %1866 = vmatprep.subr.bf16.mxu0 0
        %1867 = vmatpush1.bf16.msra.mxu0 %v1627
        %1868 = vmatprep.subr.bf16.mxu0 0
        %1869 = vmatpush1.bf16.msra.mxu0 %v1632
        %1870 = vmatprep.subr.bf16.mxu0 0
        %1871 = vmatpush1.bf16.msra.mxu0 %v1637
        %1872 = vmatprep.subr.bf16.mxu0 0
        %1873 = vmatpush1.bf16.msra.mxu0 %v1642
        %1874 = vmatprep.subr.bf16.mxu0 0
        %1875 = vmatpush1.bf16.msra.mxu0 %v1647
        %1876 = vmatprep.subr.bf16.mxu0 0
        %1877 = vmatpush1.bf16.msra.mxu0 %v1652
        %1878 = vmatprep.subr.bf16.mxu0 0
        %1879 = vmatpush1.bf16.msra.mxu0 %v1657
        %1880 = vmatprep.subr.bf16.mxu0 0
        %1881 = vmatpush1.bf16.msra.mxu0 %v1662
        %1882 = vmatprep.subr.bf16.mxu0 0
        %1883 = vmatpush1.bf16.msra.mxu0 %v1667
        %1884 = vmatprep.subr.bf16.mxu0 0
        %1885 = vmatpush1.bf16.msra.mxu0 %v1672
        %1886 = vmatprep.subr.bf16.mxu0 0
        %1887 = vmatpush1.bf16.msra.mxu0 %v1677
        %1888 = vmatprep.subr.bf16.mxu0 0
        %1889 = vmatpush1.bf16.msra.mxu0 %v1682
        %1890 = vmatprep.subr.bf16.mxu0 0
        %1891 = vmatpush1.bf16.msra.mxu0 %v1687
        %1892 = vmatprep.subr.bf16.mxu0 0
        %1893 = vmatpush1.bf16.msra.mxu0 %v1692
        %1894 = vmatprep.subr.bf16.mxu0 0
        %1895 = vmatpush1.bf16.msra.mxu0 %v1697
        %1896 = vmatprep.mubr.bf16.mxu0 %v1238
        %1897 = vmatmul.mubr.bf16.gmra.mrb[0].mxu0 %v1237
        %v1898 = vpop.f32.mrb[0].mxu0
        %v1899 = vadd.f32 %v1356, %v1898
        %v1900 = vpop.f32.mrb[0].mxu0
        %v1901 = vpop.f32.mrb[0].mxu0
        %v1902 = vadd.f32 %v1356, %v1901
        %v1903 = vpop.f32.mrb[0].mxu0
        %1904 = vdwg.mxu0
        %v1905 = vmax.f32 %v1813, 0.0
        %v1906 = vmax.f32 %v1815, 0.0
        %v1907 = vmax.f32 %v1856, 0.0
        %v1908 = vmax.f32 %v1858, 0.0
        %v1909 = vmax.f32 %v1899, 0.0
        %v1910 = vmax.f32 %v1817, 0.0
        %v1911 = vmax.f32 %v1819, 0.0
        %v1912 = vmax.f32 %v1860, 0.0
        %v1913 = vmax.f32 %v1862, 0.0
        %v1914 = vmax.f32 %v1902, 0.0
        %v1915 = vpack.c.bf16 %v1910, %v1905
        %v1916 = vpack.c.bf16 %v1911, %v1906
        %v1917 = vpack.c.bf16 %v1912, %v1907
        %v1918 = vpack.c.bf16 %v1913, %v1908
        %v1919 = vpack.c.bf16 %v1914, %v1909
        %v1920 = vld [vmem:[#allocation10] sm:$0xf]
        %v1921 = vld [vmem:[#allocation10 + $0x4] sm:$0xf]
        %v1922 = vld [vmem:[#allocation10 + $0x8] sm:$0xf]
        %v1923 = vld [vmem:[#allocation10 + $0xc] sm:$0xf]
        %v1924 = vld [vmem:[#allocation10 + $0x10] sm:$0xf]
        %v1925 = vld [vmem:[#allocation10 + $0x14] sm:$0xf]
        %v1926 = vld [vmem:[#allocation10 + $0x18] sm:$0xf]
        %v1927 = vld [vmem:[#allocation10 + $0x1c] sm:$0xf]
        %v1928 = vld [vmem:[#allocation10 + $0x20] sm:$0xf]
        %v1929 = vld [vmem:[#allocation10 + $0x24] sm:$0xf]
        %v1930 = vld [vmem:[#allocation10 + $0x28] sm:$0xf]
        %v1931 = vld [vmem:[#allocation10 + $0x2c] sm:$0xf]
        %v1932 = vld [vmem:[#allocation10 + $0x30] sm:$0xf]
        %v1933 = vld [vmem:[#allocation10 + $0x34] sm:$0xf]
        %v1934 = vld [vmem:[#allocation10 + $0x38] sm:$0xf]
        %v1935 = vld [vmem:[#allocation10 + $0x3c] sm:$0xf]
        %v1936 = vld [vmem:[#allocation10 + $0x40] sm:$0xf]
        %v1937 = vld [vmem:[#allocation10 + $0x44] sm:$0xf]
        %v1938 = vld [vmem:[#allocation10 + $0x48] sm:$0xf]
        %v1939 = vld [vmem:[#allocation10 + $0x4c] sm:$0xf]
        %v1940 = vld [vmem:[#allocation10 + $0x50] sm:$0xf]
        %v1941 = vld [vmem:[#allocation10 + $0x54] sm:$0xf]
        %v1942 = vld [vmem:[#allocation10 + $0x58] sm:$0xf]
        %v1943 = vld [vmem:[#allocation10 + $0x5c] sm:$0xf]
        %v1944 = vld [vmem:[#allocation10 + $0x60] sm:$0xf]
        %v1945 = vld [vmem:[#allocation10 + $0x64] sm:$0xf]
        %v1946 = vld [vmem:[#allocation10 + $0x68] sm:$0xf]
        %v1947 = vld [vmem:[#allocation10 + $0x6c] sm:$0xf]
        %v1948 = vld [vmem:[#allocation10 + $0x70] sm:$0xf]
        %v1949 = vld [vmem:[#allocation10 + $0x74] sm:$0xf]
        %v1950 = vld [vmem:[#allocation10 + $0x78] sm:$0xf]
        %v1951 = vld [vmem:[#allocation10 + $0x7c] sm:$0xf]
        %v1952 = vld [vmem:[#allocation10 + $0x80] sm:$0xf]
        %v1953 = vld [vmem:[#allocation10 + $0x84] sm:$0xf]
        %v1954 = vld [vmem:[#allocation10 + $0x88] sm:$0xf]
        %v1955 = vld [vmem:[#allocation10 + $0x8c] sm:$0xf]
        %v1956 = vld [vmem:[#allocation10 + $0x90] sm:$0xf]
        %v1957 = vld [vmem:[#allocation10 + $0x94] sm:$0xf]
        %v1958 = vld [vmem:[#allocation10 + $0x98] sm:$0xf]
        %v1959 = vld [vmem:[#allocation10 + $0x9c] sm:$0xf]
        %v1960 = vld [vmem:[#allocation10 + $0xa0] sm:$0xf]
        %v1961 = vld [vmem:[#allocation10 + $0xa4] sm:$0xf]
        %v1962 = vld [vmem:[#allocation10 + $0xa8] sm:$0xf]
        %v1963 = vld [vmem:[#allocation10 + $0xac] sm:$0xf]
        %v1964 = vld [vmem:[#allocation10 + $0xb0] sm:$0xf]
        %v1965 = vld [vmem:[#allocation10 + $0xb4] sm:$0xf]
        %v1966 = vld [vmem:[#allocation10 + $0xb8] sm:$0xf]
        %v1967 = vld [vmem:[#allocation10 + $0xbc] sm:$0xf]
        %v1968 = vld [vmem:[#allocation10 + $0xc0] sm:$0xf]
        %v1969 = vld [vmem:[#allocation10 + $0xc4] sm:$0xf]
        %v1970 = vld [vmem:[#allocation10 + $0xc8] sm:$0xf]
        %v1971 = vld [vmem:[#allocation10 + $0xcc] sm:$0xf]
        %v1972 = vld [vmem:[#allocation10 + $0xd0] sm:$0xf]
        %v1973 = vld [vmem:[#allocation10 + $0xd4] sm:$0xf]
        %v1974 = vld [vmem:[#allocation10 + $0xd8] sm:$0xf]
        %v1975 = vld [vmem:[#allocation10 + $0xdc] sm:$0xf]
        %v1976 = vld [vmem:[#allocation10 + $0xe0] sm:$0xf]
        %v1977 = vld [vmem:[#allocation10 + $0xe4] sm:$0xf]
        %v1978 = vld [vmem:[#allocation10 + $0xe8] sm:$0xf]
        %v1979 = vld [vmem:[#allocation10 + $0xec] sm:$0xf]
        %v1980 = vld [vmem:[#allocation10 + $0xf0] sm:$0xf]
        %v1981 = vld [vmem:[#allocation10 + $0xf4] sm:$0xf]
        %v1982 = vld [vmem:[#allocation10 + $0xf8] sm:$0xf]
        %v1983 = vld [vmem:[#allocation10 + $0xfc] sm:$0xf]
        %v1984 = vld [vmem:[#allocation10 + $0x100] sm:$0xf]
        %v1985 = vld [vmem:[#allocation10 + $0x104] sm:$0xf]
        %v1986 = vld [vmem:[#allocation10 + $0x108] sm:$0xf]
        %v1987 = vld [vmem:[#allocation10 + $0x10c] sm:$0xf]
        %v1988 = vld [vmem:[#allocation10 + $0x110] sm:$0xf]
        %v1989 = vld [vmem:[#allocation10 + $0x114] sm:$0xf]
        %v1990 = vld [vmem:[#allocation10 + $0x118] sm:$0xf]
        %v1991 = vld [vmem:[#allocation10 + $0x11c] sm:$0xf]
        %v1992 = vld [vmem:[#allocation10 + $0x120] sm:$0xf]
        %v1993 = vld [vmem:[#allocation10 + $0x124] sm:$0xf]
        %v1994 = vld [vmem:[#allocation10 + $0x128] sm:$0xf]
        %v1995 = vld [vmem:[#allocation10 + $0x12c] sm:$0xf]
        %v1996 = vld [vmem:[#allocation10 + $0x130] sm:$0xf]
        %v1997 = vld [vmem:[#allocation10 + $0x134] sm:$0xf]
        %v1998 = vld [vmem:[#allocation10 + $0x138] sm:$0xf]
        %v1999 = vld [vmem:[#allocation10 + $0x13c] sm:$0xf]
        %v2000 = vld [vmem:[%s6] sm:$0x1]
        %v2002 = vlaneseq
        %v2003 = vshrl.u32 %v2002, 7
        %v2004 = vsub.s32 0, %v2003
        %v2005 = vrot.slane %v2000, %v2004
        %v2087 = vunpack.c.l.b16 %v1920
        %v2088 = vunpack.c.l.b16 %v1921
        %v2089 = vunpack.c.l.b16 %v1922
        %v2090 = vunpack.c.l.b16 %v1923
        %v2091 = vunpack.c.l.b16 %v1924
        %v2092 = vunpack.c.l.b16 %v1925
        %v2093 = vunpack.c.l.b16 %v1926
        %v2094 = vunpack.c.l.b16 %v1927
        %v2095 = vunpack.c.l.b16 %v1928
        %v2096 = vunpack.c.l.b16 %v1929
        %v2097 = vunpack.c.l.b16 %v1930
        %v2098 = vunpack.c.l.b16 %v1931
        %v2099 = vunpack.c.l.b16 %v1932
        %v2100 = vunpack.c.l.b16 %v1933
        %v2101 = vunpack.c.l.b16 %v1934
        %v2102 = vunpack.c.l.b16 %v1935
        %v2103 = vunpack.c.l.b16 %v1936
        %v2104 = vunpack.c.l.b16 %v1937
        %v2105 = vunpack.c.l.b16 %v1938
        %v2106 = vunpack.c.l.b16 %v1939
        %v2107 = vunpack.c.l.b16 %v1940
        %v2108 = vunpack.c.l.b16 %v1941
        %v2109 = vunpack.c.l.b16 %v1942
        %v2110 = vunpack.c.l.b16 %v1943
        %v2111 = vunpack.c.l.b16 %v1944
        %v2112 = vunpack.c.l.b16 %v1945
        %v2113 = vunpack.c.l.b16 %v1946
        %v2114 = vunpack.c.l.b16 %v1947
        %v2115 = vunpack.c.l.b16 %v1948
        %v2116 = vunpack.c.l.b16 %v1949
        %v2117 = vunpack.c.l.b16 %v1950
        %v2118 = vunpack.c.l.b16 %v1951
        %v2119 = vunpack.c.l.b16 %v1952
        %v2120 = vunpack.c.l.b16 %v1953
        %v2121 = vunpack.c.l.b16 %v1954
        %v2122 = vunpack.c.l.b16 %v1955
        %v2123 = vunpack.c.l.b16 %v1956
        %v2124 = vunpack.c.l.b16 %v1957
        %v2125 = vunpack.c.l.b16 %v1958
        %v2126 = vunpack.c.l.b16 %v1959
        %v2127 = vunpack.c.l.b16 %v1960
        %v2128 = vunpack.c.l.b16 %v1961
        %v2129 = vunpack.c.l.b16 %v1962
        %v2130 = vunpack.c.l.b16 %v1963
        %v2131 = vunpack.c.l.b16 %v1964
        %v2132 = vunpack.c.l.b16 %v1965
        %v2133 = vunpack.c.l.b16 %v1966
        %v2134 = vunpack.c.l.b16 %v1967
        %v2135 = vunpack.c.l.b16 %v1968
        %v2136 = vunpack.c.l.b16 %v1969
        %v2137 = vunpack.c.l.b16 %v1970
        %v2138 = vunpack.c.l.b16 %v1971
        %v2139 = vunpack.c.l.b16 %v1972
        %v2140 = vunpack.c.l.b16 %v1973
        %v2141 = vunpack.c.l.b16 %v1974
        %v2142 = vunpack.c.l.b16 %v1975
        %v2143 = vunpack.c.l.b16 %v1976
        %v2144 = vunpack.c.l.b16 %v1977
        %v2145 = vunpack.c.l.b16 %v1978
        %v2146 = vunpack.c.l.b16 %v1979
        %v2147 = vunpack.c.l.b16 %v1980
        %v2148 = vunpack.c.l.b16 %v1981
        %v2149 = vunpack.c.l.b16 %v1982
        %v2150 = vunpack.c.l.b16 %v1983
        %v2151 = vunpack.c.l.b16 %v1984
        %v2152 = vunpack.c.l.b16 %v1985
        %v2153 = vunpack.c.l.b16 %v1986
        %v2154 = vunpack.c.l.b16 %v1987
        %v2155 = vunpack.c.l.b16 %v1988
        %v2156 = vunpack.c.l.b16 %v1989
        %v2157 = vunpack.c.l.b16 %v1990
        %v2158 = vunpack.c.l.b16 %v1991
        %v2159 = vunpack.c.l.b16 %v1992
        %v2160 = vunpack.c.l.b16 %v1993
        %v2161 = vunpack.c.l.b16 %v1994
        %v2162 = vunpack.c.l.b16 %v1995
        %v2163 = vunpack.c.l.b16 %v1996
        %v2164 = vunpack.c.l.b16 %v1997
        %v2165 = vunpack.c.l.b16 %v1998
        %v2166 = vunpack.c.l.b16 %v1999
        %v2167 = vpack.c.b16 %v2088, %v2087
        %v2168 = vpack.c.b16 %v2090, %v2089
        %v2169 = vpack.c.b16 %v2092, %v2091
        %v2170 = vpack.c.b16 %v2094, %v2093
        %v2171 = vpack.c.b16 %v2096, %v2095
        %v2172 = vpack.c.b16 %v2098, %v2097
        %v2173 = vpack.c.b16 %v2100, %v2099
        %v2174 = vpack.c.b16 %v2102, %v2101
        %v2175 = vpack.c.b16 %v2104, %v2103
        %v2176 = vpack.c.b16 %v2106, %v2105
        %v2177 = vpack.c.b16 %v2108, %v2107
        %v2178 = vpack.c.b16 %v2110, %v2109
        %v2179 = vpack.c.b16 %v2112, %v2111
        %v2180 = vpack.c.b16 %v2114, %v2113
        %v2181 = vpack.c.b16 %v2116, %v2115
        %v2182 = vpack.c.b16 %v2118, %v2117
        %v2183 = vpack.c.b16 %v2120, %v2119
        %v2184 = vpack.c.b16 %v2122, %v2121
        %v2185 = vpack.c.b16 %v2124, %v2123
        %v2186 = vpack.c.b16 %v2126, %v2125
        %v2187 = vpack.c.b16 %v2128, %v2127
        %v2188 = vpack.c.b16 %v2130, %v2129
        %v2189 = vpack.c.b16 %v2132, %v2131
        %v2190 = vpack.c.b16 %v2134, %v2133
        %v2191 = vpack.c.b16 %v2136, %v2135
        %v2192 = vpack.c.b16 %v2138, %v2137
        %v2193 = vpack.c.b16 %v2140, %v2139
        %v2194 = vpack.c.b16 %v2142, %v2141
        %v2195 = vpack.c.b16 %v2144, %v2143
        %v2196 = vpack.c.b16 %v2146, %v2145
        %v2197 = vpack.c.b16 %v2148, %v2147
        %v2198 = vpack.c.b16 %v2150, %v2149
        %v2199 = vpack.c.b16 %v2152, %v2151
        %v2200 = vpack.c.b16 %v2154, %v2153
        %v2201 = vpack.c.b16 %v2156, %v2155
        %v2202 = vpack.c.b16 %v2158, %v2157
        %v2203 = vpack.c.b16 %v2160, %v2159
        %v2204 = vpack.c.b16 %v2162, %v2161
        %v2205 = vpack.c.b16 %v2164, %v2163
        %v2206 = vpack.c.b16 %v2166, %v2165
        %2247 = vmatprep.subr.bf16.mxu0 0
        %2248 = vmatpush1.bf16.msra.mxu0 %v2167
        %2249 = vmatprep.subr.bf16.mxu0 0
        %2250 = vmatpush1.bf16.msra.mxu0 %v2168
        %2251 = vmatprep.subr.bf16.mxu0 0
        %2252 = vmatpush1.bf16.msra.mxu0 %v2169
        %2253 = vmatprep.subr.bf16.mxu0 0
        %2254 = vmatpush1.bf16.msra.mxu0 %v2170
        %2255 = vmatprep.subr.bf16.mxu0 0
        %2256 = vmatpush1.bf16.msra.mxu0 %v2171
        %2257 = vmatprep.subr.bf16.mxu0 0
        %2258 = vmatpush1.bf16.msra.mxu0 %v2172
        %2259 = vmatprep.subr.bf16.mxu0 0
        %2260 = vmatpush1.bf16.msra.mxu0 %v2173
        %2261 = vmatprep.subr.bf16.mxu0 0
        %2262 = vmatpush1.bf16.msra.mxu0 %v2174
        %2263 = vmatprep.subr.bf16.mxu0 0
        %2264 = vmatpush1.bf16.msra.mxu0 %v2175
        %2265 = vmatprep.subr.bf16.mxu0 0
        %2266 = vmatpush1.bf16.msra.mxu0 %v2176
        %2267 = vmatprep.subr.bf16.mxu0 0
        %2268 = vmatpush1.bf16.msra.mxu0 %v2177
        %2269 = vmatprep.subr.bf16.mxu0 0
        %2270 = vmatpush1.bf16.msra.mxu0 %v2178
        %2271 = vmatprep.subr.bf16.mxu0 0
        %2272 = vmatpush1.bf16.msra.mxu0 %v2179
        %2273 = vmatprep.subr.bf16.mxu0 0
        %2274 = vmatpush1.bf16.msra.mxu0 %v2180
        %2275 = vmatprep.subr.bf16.mxu0 0
        %2276 = vmatpush1.bf16.msra.mxu0 %v2181
        %2277 = vmatprep.subr.bf16.mxu0 0
        %2278 = vmatpush1.bf16.msra.mxu0 %v2182
        %2279 = vmatprep.mubr.bf16.mxu0 %v1916
        %2280 = vmatmul.mubr.bf16.gmra.mrb[0].mxu0 %v1915
        %v2281 = vpop.f32.mrb[0].mxu0
        %v2282 = vadd.f32 %v2005, %v2281
        %v2283 = vpop.f32.mrb[0].mxu0
        %v2284 = vpop.f32.mrb[0].mxu0
        %v2285 = vadd.f32 %v2005, %v2284
        %v2286 = vpop.f32.mrb[0].mxu0
        %2287 = vdwg.mxu0
        %2288 = vmatprep.subr.bf16.mxu0 0
        %2289 = vmatpush1.bf16.msra.mxu0 %v2183
        %2290 = vmatprep.subr.bf16.mxu0 0
        %2291 = vmatpush1.bf16.msra.mxu0 %v2184
        %2292 = vmatprep.subr.bf16.mxu0 0
        %2293 = vmatpush1.bf16.msra.mxu0 %v2185
        %2294 = vmatprep.subr.bf16.mxu0 0
        %2295 = vmatpush1.bf16.msra.mxu0 %v2186
        %2296 = vmatprep.subr.bf16.mxu0 0
        %2297 = vmatpush1.bf16.msra.mxu0 %v2187
        %2298 = vmatprep.subr.bf16.mxu0 0
        %2299 = vmatpush1.bf16.msra.mxu0 %v2188
        %2300 = vmatprep.subr.bf16.mxu0 0
        %2301 = vmatpush1.bf16.msra.mxu0 %v2189
        %2302 = vmatprep.subr.bf16.mxu0 0
        %2303 = vmatpush1.bf16.msra.mxu0 %v2190
        %2304 = vmatprep.subr.bf16.mxu0 0
        %2305 = vmatpush1.bf16.msra.mxu0 %v2191
        %2306 = vmatprep.subr.bf16.mxu0 0
        %2307 = vmatpush1.bf16.msra.mxu0 %v2192
        %2308 = vmatprep.subr.bf16.mxu0 0
        %2309 = vmatpush1.bf16.msra.mxu0 %v2193
        %2310 = vmatprep.subr.bf16.mxu0 0
        %2311 = vmatpush1.bf16.msra.mxu0 %v2194
        %2312 = vmatprep.subr.bf16.mxu0 0
        %2313 = vmatpush1.bf16.msra.mxu0 %v2195
        %2314 = vmatprep.subr.bf16.mxu0 0
        %2315 = vmatpush1.bf16.msra.mxu0 %v2196
        %2316 = vmatprep.subr.bf16.mxu0 0
        %2317 = vmatpush1.bf16.msra.mxu0 %v2197
        %2318 = vmatprep.subr.bf16.mxu0 0
        %2319 = vmatpush1.bf16.msra.mxu0 %v2198
        %2320 = vmatprep.mubr.bf16.mxu0 %v1918
        %2321 = vmatmul.mubr.bf16.gmra.mrb[0].mxu0 %v1917
        %v2322 = vpop.f32.mrb[0].mxu0
        %v2323 = vadd.f32 %v2282, %v2322
        %v2324 = vpop.f32.mrb[0].mxu0
        %v2325 = vpop.f32.mrb[0].mxu0
        %v2326 = vadd.f32 %v2285, %v2325
        %v2327 = vpop.f32.mrb[0].mxu0
        %2328 = vdwg.mxu0
        %2329 = vmatprep.subr.bf16.mxu0 0
        %2330 = vmatpush1.bf16.msra.mxu0 %v2199
        %2331 = vmatprep.subr.bf16.mxu0 0
        %2332 = vmatpush1.bf16.msra.mxu0 %v2200
        %2333 = vmatprep.subr.bf16.mxu0 0
        %2334 = vmatpush1.bf16.msra.mxu0 %v2201
        %2335 = vmatprep.subr.bf16.mxu0 0
        %2336 = vmatpush1.bf16.msra.mxu0 %v2202
        %2337 = vmatprep.subr.bf16.mxu0 0
        %2338 = vmatpush1.bf16.msra.mxu0 %v2203
        %2339 = vmatprep.subr.bf16.mxu0 0
        %2340 = vmatpush1.bf16.msra.mxu0 %v2204
        %2341 = vmatprep.subr.bf16.mxu0 0
        %2342 = vmatpush1.bf16.msra.mxu0 %v2205
        %2343 = vmatprep.subr.bf16.mxu0 0
        %2344 = vmatpush1.bf16.msra.mxu0 %v2206
        %2345 = vmatprep.subr.bf16.mxu0 0
        %2346 = vmatpush1.bf16.msra.mxu0 0
        %2347 = vmatprep.subr.bf16.mxu0 0
        %2348 = vmatpush1.bf16.msra.mxu0 0
        %2349 = vmatprep.subr.bf16.mxu0 0
        %2350 = vmatpush1.bf16.msra.mxu0 0
        %2351 = vmatprep.subr.bf16.mxu0 0
        %2352 = vmatpush1.bf16.msra.mxu0 0
        %2353 = vmatprep.subr.bf16.mxu0 0
        %2354 = vmatpush1.bf16.msra.mxu0 0
        %2355 = vmatprep.subr.bf16.mxu0 0
        %2356 = vmatpush1.bf16.msra.mxu0 0
        %2357 = vmatprep.subr.bf16.mxu0 0
        %2358 = vmatpush1.bf16.msra.mxu0 0
        %2359 = vmatprep.subr.bf16.mxu0 0
        %2360 = vmatpush1.bf16.msra.mxu0 0
        %2361 = vmatprep.mubr.bf16.mxu0 0
        %2362 = vmatmul.mubr.bf16.gmra.mrb[0].mxu0 %v1919
        %v2363 = vpop.f32.mrb[0].mxu0
        %v2364 = vadd.f32 %v2323, %v2363
        %v2365 = vpop.f32.mrb[0].mxu0
        %v2366 = vpop.f32.mrb[0].mxu0
        %v2367 = vadd.f32 %v2326, %v2366
        %v2368 = vpop.f32.mrb[0].mxu0
        %2369 = vdwg.mxu0
        %v2370 = vpack.c.bf16 %v2367, %v2364
        %v2371 = vmax.f32 %v2364, 0.0
        %v2372 = vmax.f32 %v2367, 0.0
        %v2373 = vpack.c.bf16 %v2372, %v2371
        %v2374 = vld [vmem:[#allocation11] sm:$0xff]
        %v2375 = vld [vmem:[#allocation11 + $0x8] sm:$0xff]
        %v2376 = vld [vmem:[#allocation11 + $0x10] sm:$0xf]
        %v2377 = vld [vmem:[#allocation11 + $0x14] sm:$0xff]
        %v2378 = vld [vmem:[#allocation11 + $0x1c] sm:$0xff]
        %v2379 = vld [vmem:[#allocation11 + $0x24] sm:$0xf]
        %v2380 = vld [vmem:[#allocation11 + $0x28] sm:$0xff]
        %v2381 = vld [vmem:[#allocation11 + $0x30] sm:$0xff]
        %v2382 = vld [vmem:[#allocation11 + $0x38] sm:$0xf]
        %v2383 = vld [vmem:[#allocation11 + $0x3c] sm:$0xff]
        %v2384 = vld [vmem:[#allocation11 + $0x44] sm:$0xff]
        %v2385 = vld [vmem:[#allocation11 + $0x4c] sm:$0xf]
        %v2386 = vld [vmem:[#allocation11 + $0x50] sm:$0xff]
        %v2387 = vld [vmem:[#allocation11 + $0x58] sm:$0xff]
        %v2388 = vld [vmem:[#allocation11 + $0x60] sm:$0xf]
        %v2389 = vld [vmem:[#allocation11 + $0x64] sm:$0xff]
        %v2390 = vld [vmem:[#allocation11 + $0x6c] sm:$0xff]
        %v2391 = vld [vmem:[#allocation11 + $0x74] sm:$0xf]
        %v2392 = vld [vmem:[#allocation11 + $0x78] sm:$0xff]
        %v2393 = vld [vmem:[#allocation11 + $0x80] sm:$0xff]
        %v2394 = vld [vmem:[#allocation11 + $0x88] sm:$0xf]
        %v2395 = vld [vmem:[#allocation11 + $0x8c] sm:$0xff]
        %v2396 = vld [vmem:[#allocation11 + $0x94] sm:$0xff]
        %v2397 = vld [vmem:[#allocation11 + $0x9c] sm:$0xf]
        %v2398 = vld [vmem:[#allocation11 + $0xa0] sm:$0xff]
        %v2399 = vld [vmem:[#allocation11 + $0xa8] sm:$0xff]
        %v2400 = vld [vmem:[#allocation11 + $0xb0] sm:$0xf]
        %v2401 = vld [vmem:[#allocation11 + $0xb4] sm:$0xff]
        %v2402 = vld [vmem:[#allocation11 + $0xbc] sm:$0xff]
        %v2403 = vld [vmem:[#allocation11 + $0xc4] sm:$0xf]
        %v2404 = vld [vmem:[#allocation11 + $0xc8] sm:$0xff]
        %v2405 = vld [vmem:[#allocation11 + $0xd0] sm:$0xff]
        %v2406 = vld [vmem:[#allocation11 + $0xd8] sm:$0xf]
        %v2407 = vld [vmem:[#allocation11 + $0xdc] sm:$0xff]
        %v2408 = vld [vmem:[#allocation11 + $0xe4] sm:$0xff]
        %v2409 = vld [vmem:[#allocation11 + $0xec] sm:$0xf]
        %v2410 = vld [vmem:[#allocation11 + $0xf0] sm:$0xff]
        %v2411 = vld [vmem:[#allocation11 + $0xf8] sm:$0xff]
        %v2412 = vld [vmem:[#allocation11 + $0x100] sm:$0xf]
        %v2413 = vld [vmem:[#allocation11 + $0x104] sm:$0xff]
        %v2414 = vld [vmem:[#allocation11 + $0x10c] sm:$0xff]
        %v2415 = vld [vmem:[#allocation11 + $0x114] sm:$0xf]
        %v2416 = vld [vmem:[#allocation11 + $0x118] sm:$0xff]
        %v2417 = vld [vmem:[#allocation11 + $0x120] sm:$0xff]
        %v2418 = vld [vmem:[#allocation11 + $0x128] sm:$0xf]
        %v2419 = vld [vmem:[#allocation11 + $0x12c] sm:$0xff]
        %v2420 = vld [vmem:[#allocation11 + $0x134] sm:$0xff]
        %v2421 = vld [vmem:[#allocation11 + $0x13c] sm:$0xf]
        %v2422 = vld [vmem:[%s8] sm:$0x1f]
        %v2424 = vlaneseq
        %v2425 = vshrl.u32 %v2424, 7
        %v2426 = vsub.s32 0, %v2425
        %v2427 = vrot.slane %v2422, %v2426
        %v2428 = vlaneseq
        %v2429 = vshrl.u32 %v2428, 7
        %v2430 = vsub.s32 1, %v2429
        %v2431 = vrot.slane %v2422, %v2430
        %v2432 = vlaneseq
        %v2433 = vshrl.u32 %v2432, 7
        %v2434 = vsub.s32 2, %v2433
        %v2435 = vrot.slane %v2422, %v2434
        %v2436 = vlaneseq
        %v2437 = vshrl.u32 %v2436, 7
        %v2438 = vsub.s32 3, %v2437
        %v2439 = vrot.slane %v2422, %v2438
        %v2440 = vlaneseq
        %v2441 = vshrl.u32 %v2440, 7
        %v2442 = vsub.s32 4, %v2441
        %v2443 = vrot.slane %v2422, %v2442
        %v2497 = vunpack.c.l.b16 %v2374
        %v2498 = vunpack.c.h.b16 %v2374
        %v2499 = vunpack.c.l.b16 %v2375
        %v2500 = vunpack.c.h.b16 %v2375
        %v2501 = vunpack.c.l.b16 %v2376
        %v2502 = vunpack.c.l.b16 %v2377
        %v2503 = vunpack.c.h.b16 %v2377
        %v2504 = vunpack.c.l.b16 %v2378
        %v2505 = vunpack.c.h.b16 %v2378
        %v2506 = vunpack.c.l.b16 %v2379
        %v2507 = vunpack.c.l.b16 %v2380
        %v2508 = vunpack.c.h.b16 %v2380
        %v2509 = vunpack.c.l.b16 %v2381
        %v2510 = vunpack.c.h.b16 %v2381
        %v2511 = vunpack.c.l.b16 %v2382
        %v2512 = vunpack.c.l.b16 %v2383
        %v2513 = vunpack.c.h.b16 %v2383
        %v2514 = vunpack.c.l.b16 %v2384
        %v2515 = vunpack.c.h.b16 %v2384
        %v2516 = vunpack.c.l.b16 %v2385
        %v2517 = vunpack.c.l.b16 %v2386
        %v2518 = vunpack.c.h.b16 %v2386
        %v2519 = vunpack.c.l.b16 %v2387
        %v2520 = vunpack.c.h.b16 %v2387
        %v2521 = vunpack.c.l.b16 %v2388
        %v2522 = vunpack.c.l.b16 %v2389
        %v2523 = vunpack.c.h.b16 %v2389
        %v2524 = vunpack.c.l.b16 %v2390
        %v2525 = vunpack.c.h.b16 %v2390
        %v2526 = vunpack.c.l.b16 %v2391
        %v2527 = vunpack.c.l.b16 %v2392
        %v2528 = vunpack.c.h.b16 %v2392
        %v2529 = vunpack.c.l.b16 %v2393
        %v2530 = vunpack.c.h.b16 %v2393
        %v2531 = vunpack.c.l.b16 %v2394
        %v2532 = vunpack.c.l.b16 %v2395
        %v2533 = vunpack.c.h.b16 %v2395
        %v2534 = vunpack.c.l.b16 %v2396
        %v2535 = vunpack.c.h.b16 %v2396
        %v2536 = vunpack.c.l.b16 %v2397
        %v2537 = vunpack.c.l.b16 %v2398
        %v2538 = vunpack.c.h.b16 %v2398
        %v2539 = vunpack.c.l.b16 %v2399
        %v2540 = vunpack.c.h.b16 %v2399
        %v2541 = vunpack.c.l.b16 %v2400
        %v2542 = vunpack.c.l.b16 %v2401
        %v2543 = vunpack.c.h.b16 %v2401
        %v2544 = vunpack.c.l.b16 %v2402
        %v2545 = vunpack.c.h.b16 %v2402
        %v2546 = vunpack.c.l.b16 %v2403
        %v2547 = vunpack.c.l.b16 %v2404
        %v2548 = vunpack.c.h.b16 %v2404
        %v2549 = vunpack.c.l.b16 %v2405
        %v2550 = vunpack.c.h.b16 %v2405
        %v2551 = vunpack.c.l.b16 %v2406
        %v2552 = vunpack.c.l.b16 %v2407
        %v2553 = vunpack.c.h.b16 %v2407
        %v2554 = vunpack.c.l.b16 %v2408
        %v2555 = vunpack.c.h.b16 %v2408
        %v2556 = vunpack.c.l.b16 %v2409
        %v2557 = vunpack.c.l.b16 %v2410
        %v2558 = vunpack.c.h.b16 %v2410
        %v2559 = vunpack.c.l.b16 %v2411
        %v2560 = vunpack.c.h.b16 %v2411
        %v2561 = vunpack.c.l.b16 %v2412
        %v2562 = vunpack.c.l.b16 %v2413
        %v2563 = vunpack.c.h.b16 %v2413
        %v2564 = vunpack.c.l.b16 %v2414
        %v2565 = vunpack.c.h.b16 %v2414
        %v2566 = vunpack.c.l.b16 %v2415
        %v2567 = vunpack.c.l.b16 %v2416
        %v2568 = vunpack.c.h.b16 %v2416
        %v2569 = vunpack.c.l.b16 %v2417
        %v2570 = vunpack.c.h.b16 %v2417
        %v2571 = vunpack.c.l.b16 %v2418
        %v2572 = vunpack.c.l.b16 %v2419
        %v2573 = vunpack.c.h.b16 %v2419
        %v2574 = vunpack.c.l.b16 %v2420
        %v2575 = vunpack.c.h.b16 %v2420
        %v2576 = vunpack.c.l.b16 %v2421
        %v2577 = vpack.c.b16 %v2502, %v2497
        %v2578 = vpack.c.b16 %v2503, %v2498
        %v2579 = vpack.c.b16 %v2504, %v2499
        %v2580 = vpack.c.b16 %v2505, %v2500
        %v2581 = vpack.c.b16 %v2506, %v2501
        %v2582 = vpack.c.b16 %v2512, %v2507
        %v2583 = vpack.c.b16 %v2513, %v2508
        %v2584 = vpack.c.b16 %v2514, %v2509
        %v2585 = vpack.c.b16 %v2515, %v2510
        %v2586 = vpack.c.b16 %v2516, %v2511
        %v2587 = vpack.c.b16 %v2522, %v2517
        %v2588 = vpack.c.b16 %v2523, %v2518
        %v2589 = vpack.c.b16 %v2524, %v2519
        %v2590 = vpack.c.b16 %v2525, %v2520
        %v2591 = vpack.c.b16 %v2526, %v2521
        %v2592 = vpack.c.b16 %v2532, %v2527
        %v2593 = vpack.c.b16 %v2533, %v2528
        %v2594 = vpack.c.b16 %v2534, %v2529
        %v2595 = vpack.c.b16 %v2535, %v2530
        %v2596 = vpack.c.b16 %v2536, %v2531
        %v2597 = vpack.c.b16 %v2542, %v2537
        %v2598 = vpack.c.b16 %v2543, %v2538
        %v2599 = vpack.c.b16 %v2544, %v2539
        %v2600 = vpack.c.b16 %v2545, %v2540
        %v2601 = vpack.c.b16 %v2546, %v2541
        %v2602 = vpack.c.b16 %v2552, %v2547
        %v2603 = vpack.c.b16 %v2553, %v2548
        %v2604 = vpack.c.b16 %v2554, %v2549
        %v2605 = vpack.c.b16 %v2555, %v2550
        %v2606 = vpack.c.b16 %v2556, %v2551
        %v2607 = vpack.c.b16 %v2562, %v2557
        %v2608 = vpack.c.b16 %v2563, %v2558
        %v2609 = vpack.c.b16 %v2564, %v2559
        %v2610 = vpack.c.b16 %v2565, %v2560
        %v2611 = vpack.c.b16 %v2566, %v2561
        %v2612 = vpack.c.b16 %v2572, %v2567
        %v2613 = vpack.c.b16 %v2573, %v2568
        %v2614 = vpack.c.b16 %v2574, %v2569
        %v2615 = vpack.c.b16 %v2575, %v2570
        %v2616 = vpack.c.b16 %v2576, %v2571
        %2657 = vmatprep.subr.bf16.mxu0 %v2578
        %2658 = vmatpush1.bf16.msra.mxu0 %v2577
        %2659 = vmatprep.subr.bf16.mxu0 %v2583
        %2660 = vmatpush1.bf16.msra.mxu0 %v2582
        %2661 = vmatprep.subr.bf16.mxu0 %v2588
        %2662 = vmatpush1.bf16.msra.mxu0 %v2587
        %2663 = vmatprep.subr.bf16.mxu0 %v2593
        %2664 = vmatpush1.bf16.msra.mxu0 %v2592
        %2665 = vmatprep.subr.bf16.mxu0 %v2598
        %2666 = vmatpush1.bf16.msra.mxu0 %v2597
        %2667 = vmatprep.subr.bf16.mxu0 %v2603
        %2668 = vmatpush1.bf16.msra.mxu0 %v2602
        %2669 = vmatprep.subr.bf16.mxu0 %v2608
        %2670 = vmatpush1.bf16.msra.mxu0 %v2607
        %2671 = vmatprep.subr.bf16.mxu0 %v2613
        %2672 = vmatpush1.bf16.msra.mxu0 %v2612
        %2673 = vmatprep.subr.bf16.mxu0 0
        %2674 = vmatpush1.bf16.msra.mxu0 0
        %2675 = vmatprep.subr.bf16.mxu0 0
        %2676 = vmatpush1.bf16.msra.mxu0 0
        %2677 = vmatprep.subr.bf16.mxu0 0
        %2678 = vmatpush1.bf16.msra.mxu0 0
        %2679 = vmatprep.subr.bf16.mxu0 0
        %2680 = vmatpush1.bf16.msra.mxu0 0
        %2681 = vmatprep.subr.bf16.mxu0 0
        %2682 = vmatpush1.bf16.msra.mxu0 0
        %2683 = vmatprep.subr.bf16.mxu0 0
        %2684 = vmatpush1.bf16.msra.mxu0 0
        %2685 = vmatprep.subr.bf16.mxu0 0
        %2686 = vmatpush1.bf16.msra.mxu0 0
        %2687 = vmatprep.subr.bf16.mxu0 0
        %2688 = vmatpush1.bf16.msra.mxu0 0
        %2689 = vmatprep.mubr.bf16.mxu0 0
        %2690 = vmatmul.mubr.bf16.gmra.mrb[0].mxu0 %v2373
        %v2691 = vpop.f32.mrb[0].mxu0
        %v2692 = vadd.f32 %v2427, %v2691
        %v2693 = vpop.f32.mrb[0].mxu0
        %v2694 = vadd.f32 %v2431, %v2693
        %v2695 = vpop.f32.mrb[0].mxu0
        %v2696 = vadd.f32 %v2427, %v2695
        %v2697 = vpop.f32.mrb[0].mxu0
        %v2698 = vadd.f32 %v2431, %v2697
        %2699 = vdwg.mxu0
        %2700 = vmatprep.subr.bf16.mxu0 %v2580
        %2701 = vmatpush1.bf16.msra.mxu0 %v2579
        %2702 = vmatprep.subr.bf16.mxu0 %v2585
        %2703 = vmatpush1.bf16.msra.mxu0 %v2584
        %2704 = vmatprep.subr.bf16.mxu0 %v2590
        %2705 = vmatpush1.bf16.msra.mxu0 %v2589
        %2706 = vmatprep.subr.bf16.mxu0 %v2595
        %2707 = vmatpush1.bf16.msra.mxu0 %v2594
        %2708 = vmatprep.subr.bf16.mxu0 %v2600
        %2709 = vmatpush1.bf16.msra.mxu0 %v2599
        %2710 = vmatprep.subr.bf16.mxu0 %v2605
        %2711 = vmatpush1.bf16.msra.mxu0 %v2604
        %2712 = vmatprep.subr.bf16.mxu0 %v2610
        %2713 = vmatpush1.bf16.msra.mxu0 %v2609
        %2714 = vmatprep.subr.bf16.mxu0 %v2615
        %2715 = vmatpush1.bf16.msra.mxu0 %v2614
        %2716 = vmatprep.subr.bf16.mxu0 0
        %2717 = vmatpush1.bf16.msra.mxu0 0
        %2718 = vmatprep.subr.bf16.mxu0 0
        %2719 = vmatpush1.bf16.msra.mxu0 0
        %2720 = vmatprep.subr.bf16.mxu0 0
        %2721 = vmatpush1.bf16.msra.mxu0 0
        %2722 = vmatprep.subr.bf16.mxu0 0
        %2723 = vmatpush1.bf16.msra.mxu0 0
        %2724 = vmatprep.subr.bf16.mxu0 0
        %2725 = vmatpush1.bf16.msra.mxu0 0
        %2726 = vmatprep.subr.bf16.mxu0 0
        %2727 = vmatpush1.bf16.msra.mxu0 0
        %2728 = vmatprep.subr.bf16.mxu0 0
        %2729 = vmatpush1.bf16.msra.mxu0 0
        %2730 = vmatprep.subr.bf16.mxu0 0
        %2731 = vmatpush1.bf16.msra.mxu0 0
        %2732 = vmatprep.mubr.bf16.mxu0 0
        %2733 = vmatmul.mubr.bf16.gmra.mrb[0].mxu0 %v2373
        %v2734 = vpop.f32.mrb[0].mxu0
        %v2735 = vadd.f32 %v2435, %v2734
        %v2736 = vpop.f32.mrb[0].mxu0
        %v2737 = vadd.f32 %v2439, %v2736
        %v2738 = vpop.f32.mrb[0].mxu0
        %v2739 = vadd.f32 %v2435, %v2738
        %v2740 = vpop.f32.mrb[0].mxu0
        %v2741 = vadd.f32 %v2439, %v2740
        %2742 = vdwg.mxu0
        %2743 = vmatprep.subr.bf16.mxu0 0
        %2744 = vmatpush1.bf16.msra.mxu0 %v2581
        %2745 = vmatprep.subr.bf16.mxu0 0
        %2746 = vmatpush1.bf16.msra.mxu0 %v2586
        %2747 = vmatprep.subr.bf16.mxu0 0
        %2748 = vmatpush1.bf16.msra.mxu0 %v2591
        %2749 = vmatprep.subr.bf16.mxu0 0
        %2750 = vmatpush1.bf16.msra.mxu0 %v2596
        %2751 = vmatprep.subr.bf16.mxu0 0
        %2752 = vmatpush1.bf16.msra.mxu0 %v2601
        %2753 = vmatprep.subr.bf16.mxu0 0
        %2754 = vmatpush1.bf16.msra.mxu0 %v2606
        %2755 = vmatprep.subr.bf16.mxu0 0
        %2756 = vmatpush1.bf16.msra.mxu0 %v2611
        %2757 = vmatprep.subr.bf16.mxu0 0
        %2758 = vmatpush1.bf16.msra.mxu0 %v2616
        %2759 = vmatprep.subr.bf16.mxu0 0
        %2760 = vmatpush1.bf16.msra.mxu0 0
        %2761 = vmatprep.subr.bf16.mxu0 0
        %2762 = vmatpush1.bf16.msra.mxu0 0
        %2763 = vmatprep.subr.bf16.mxu0 0
        %2764 = vmatpush1.bf16.msra.mxu0 0
        %2765 = vmatprep.subr.bf16.mxu0 0
        %2766 = vmatpush1.bf16.msra.mxu0 0
        %2767 = vmatprep.subr.bf16.mxu0 0
        %2768 = vmatpush1.bf16.msra.mxu0 0
        %2769 = vmatprep.subr.bf16.mxu0 0
        %2770 = vmatpush1.bf16.msra.mxu0 0
        %2771 = vmatprep.subr.bf16.mxu0 0
        %2772 = vmatpush1.bf16.msra.mxu0 0
        %2773 = vmatprep.subr.bf16.mxu0 0
        %2774 = vmatpush1.bf16.msra.mxu0 0
        %2775 = vmatprep.mubr.bf16.mxu0 0
        %2776 = vmatmul.mubr.bf16.gmra.mrb[0].mxu0 %v2373
        %v2777 = vpop.f32.mrb[0].mxu0
        %v2778 = vadd.f32 %v2443, %v2777
        %v2779 = vpop.f32.mrb[0].mxu0
        %v2780 = vpop.f32.mrb[0].mxu0
        %v2781 = vadd.f32 %v2443, %v2780
        %v2782 = vpop.f32.mrb[0].mxu0
        %2783 = vdwg.mxu0
        %v2784 = vmax.f32 %v2692, 0.0
        %v2785 = vmax.f32 %v2694, 0.0
        %v2786 = vmax.f32 %v2735, 0.0
        %v2787 = vmax.f32 %v2737, 0.0
        %v2788 = vmax.f32 %v2778, 0.0
        %v2789 = vmax.f32 %v2696, 0.0
        %v2790 = vmax.f32 %v2698, 0.0
        %v2791 = vmax.f32 %v2739, 0.0
        %v2792 = vmax.f32 %v2741, 0.0
        %v2793 = vmax.f32 %v2781, 0.0
        %v2794 = vpack.c.bf16 %v2789, %v2784
        %v2795 = vpack.c.bf16 %v2790, %v2785
        %v2796 = vpack.c.bf16 %v2791, %v2786
        %v2797 = vpack.c.bf16 %v2792, %v2787
        %v2798 = vpack.c.bf16 %v2793, %v2788
        %v2799 = vld [vmem:[#allocation13] sm:$0xff]
        %v2800 = vld [vmem:[#allocation13 + $0x8] sm:$0xff]
        %v2801 = vld [vmem:[#allocation13 + $0x10] sm:$0xff]
        %v2802 = vld [vmem:[#allocation13 + $0x18] sm:$0xff]
        %v2803 = vld [vmem:[#allocation13 + $0x20] sm:$0xff]
        %v2804 = vld [vmem:[#allocation13 + $0x28] sm:$0xff]
        %v2805 = vld [vmem:[#allocation13 + $0x30] sm:$0xff]
        %v2806 = vld [vmem:[#allocation13 + $0x38] sm:$0xff]
        %v2807 = vld [vmem:[#allocation13 + $0x40] sm:$0xff]
        %v2808 = vld [vmem:[#allocation13 + $0x48] sm:$0xff]
        %v2809 = vld [vmem:[#allocation13 + $0x50] sm:$0xff]
        %v2810 = vld [vmem:[#allocation13 + $0x58] sm:$0xff]
        %v2811 = vld [vmem:[#allocation13 + $0x60] sm:$0xff]
        %v2812 = vld [vmem:[#allocation13 + $0x68] sm:$0xff]
        %v2813 = vld [vmem:[#allocation13 + $0x70] sm:$0xff]
        %v2814 = vld [vmem:[#allocation13 + $0x78] sm:$0xff]
        %v2815 = vld [vmem:[#allocation13 + $0x80] sm:$0xff]
        %v2816 = vld [vmem:[#allocation13 + $0x88] sm:$0xff]
        %v2817 = vld [vmem:[#allocation13 + $0x90] sm:$0xff]
        %v2818 = vld [vmem:[#allocation13 + $0x98] sm:$0xff]
        %v2819 = vld [vmem:[#allocation13 + $0xa0] sm:$0xff]
        %v2820 = vld [vmem:[#allocation13 + $0xa8] sm:$0xff]
        %v2821 = vld [vmem:[#allocation13 + $0xb0] sm:$0xff]
        %v2822 = vld [vmem:[#allocation13 + $0xb8] sm:$0xff]
        %v2823 = vld [vmem:[#allocation13 + $0xc0] sm:$0xff]
        %v2824 = vld [vmem:[#allocation13 + $0xc8] sm:$0xff]
        %v2825 = vld [vmem:[#allocation13 + $0xd0] sm:$0xff]
        %v2826 = vld [vmem:[#allocation13 + $0xd8] sm:$0xff]
        %v2827 = vld [vmem:[#allocation13 + $0xe0] sm:$0xff]
        %v2828 = vld [vmem:[#allocation13 + $0xe8] sm:$0xff]
        %v2829 = vld [vmem:[#allocation13 + $0xf0] sm:$0xff]
        %v2830 = vld [vmem:[#allocation13 + $0xf8] sm:$0xff]
        %v2831 = vld [vmem:[#allocation13 + $0x100] sm:$0xff]
        %v2832 = vld [vmem:[#allocation13 + $0x108] sm:$0xff]
        %v2833 = vld [vmem:[#allocation13 + $0x110] sm:$0xff]
        %v2834 = vld [vmem:[#allocation13 + $0x118] sm:$0xff]
        %v2835 = vld [vmem:[#allocation13 + $0x120] sm:$0xff]
        %v2836 = vld [vmem:[#allocation13 + $0x128] sm:$0xff]
        %v2837 = vld [vmem:[#allocation13 + $0x130] sm:$0xff]
        %v2838 = vld [vmem:[#allocation13 + $0x138] sm:$0xff]
        %v2839 = vld [vmem:[#allocation13 + $0x140] sm:$0xff]
        %v2840 = vld [vmem:[#allocation13 + $0x148] sm:$0xff]
        %v2841 = vld [vmem:[#allocation13 + $0x150] sm:$0xff]
        %v2842 = vld [vmem:[#allocation13 + $0x158] sm:$0xff]
        %v2843 = vld [vmem:[#allocation13 + $0x160] sm:$0xff]
        %v2844 = vld [vmem:[#allocation13 + $0x168] sm:$0xff]
        %v2845 = vld [vmem:[#allocation13 + $0x170] sm:$0xff]
        %v2846 = vld [vmem:[#allocation13 + $0x178] sm:$0xff]
        %v2847 = vld [vmem:[#allocation13 + $0x180] sm:$0xff]
        %v2848 = vld [vmem:[#allocation13 + $0x188] sm:$0xff]
        %v2849 = vld [vmem:[#allocation13 + $0x190] sm:$0xff]
        %v2850 = vld [vmem:[#allocation13 + $0x198] sm:$0xff]
        %v2851 = vld [vmem:[#allocation13 + $0x1a0] sm:$0xff]
        %v2852 = vld [vmem:[#allocation13 + $0x1a8] sm:$0xff]
        %v2853 = vld [vmem:[#allocation13 + $0x1b0] sm:$0xff]
        %v2854 = vld [vmem:[#allocation13 + $0x1b8] sm:$0xff]
        %v2855 = vld [vmem:[#allocation13 + $0x1c0] sm:$0xff]
        %v2856 = vld [vmem:[#allocation13 + $0x1c8] sm:$0xff]
        %v2857 = vld [vmem:[#allocation13 + $0x1d0] sm:$0xff]
        %v2858 = vld [vmem:[#allocation13 + $0x1d8] sm:$0xff]
        %v2859 = vld [vmem:[#allocation13 + $0x1e0] sm:$0xff]
        %v2860 = vld [vmem:[#allocation13 + $0x1e8] sm:$0xff]
        %v2861 = vld [vmem:[#allocation13 + $0x1f0] sm:$0xff]
        %v2862 = vld [vmem:[#allocation13 + $0x1f8] sm:$0xff]
        %v2863 = vld [vmem:[#allocation13 + $0x200] sm:$0xff]
        %v2864 = vld [vmem:[#allocation13 + $0x208] sm:$0xff]
        %v2865 = vld [vmem:[#allocation13 + $0x210] sm:$0xff]
        %v2866 = vld [vmem:[#allocation13 + $0x218] sm:$0xff]
        %v2867 = vld [vmem:[#allocation13 + $0x220] sm:$0xff]
        %v2868 = vld [vmem:[#allocation13 + $0x228] sm:$0xff]
        %v2869 = vld [vmem:[#allocation13 + $0x230] sm:$0xff]
        %v2870 = vld [vmem:[#allocation13 + $0x238] sm:$0xff]
        %v2871 = vld [vmem:[#allocation13 + $0x240] sm:$0xff]
        %v2872 = vld [vmem:[#allocation13 + $0x248] sm:$0xff]
        %v2873 = vld [vmem:[#allocation13 + $0x250] sm:$0xff]
        %v2874 = vld [vmem:[#allocation13 + $0x258] sm:$0xff]
        %v2875 = vld [vmem:[#allocation13 + $0x260] sm:$0xff]
        %v2876 = vld [vmem:[#allocation13 + $0x268] sm:$0xff]
        %v2877 = vld [vmem:[#allocation13 + $0x270] sm:$0xff]
        %v2878 = vld [vmem:[#allocation13 + $0x278] sm:$0xff]
        %v2879 = vld [vmem:[%s10] sm:$0x3]
        %v2881 = vlaneseq
        %v2882 = vshrl.u32 %v2881, 7
        %v2883 = vsub.s32 0, %v2882
        %v2884 = vrot.slane %v2879, %v2883
        %v2885 = vlaneseq
        %v2886 = vshrl.u32 %v2885, 7
        %v2887 = vsub.s32 1, %v2886
        %v2888 = vrot.slane %v2879, %v2887
        %v2971 = vunpack.c.l.b16 %v2799
        %v2972 = vunpack.c.h.b16 %v2799
        %v2973 = vunpack.c.l.b16 %v2800
        %v2974 = vunpack.c.h.b16 %v2800
        %v2975 = vunpack.c.l.b16 %v2801
        %v2976 = vunpack.c.h.b16 %v2801
        %v2977 = vunpack.c.l.b16 %v2802
        %v2978 = vunpack.c.h.b16 %v2802
        %v2979 = vunpack.c.l.b16 %v2803
        %v2980 = vunpack.c.h.b16 %v2803
        %v2981 = vunpack.c.l.b16 %v2804
        %v2982 = vunpack.c.h.b16 %v2804
        %v2983 = vunpack.c.l.b16 %v2805
        %v2984 = vunpack.c.h.b16 %v2805
        %v2985 = vunpack.c.l.b16 %v2806
        %v2986 = vunpack.c.h.b16 %v2806
        %v2987 = vunpack.c.l.b16 %v2807
        %v2988 = vunpack.c.h.b16 %v2807
        %v2989 = vunpack.c.l.b16 %v2808
        %v2990 = vunpack.c.h.b16 %v2808
        %v2991 = vunpack.c.l.b16 %v2809
        %v2992 = vunpack.c.h.b16 %v2809
        %v2993 = vunpack.c.l.b16 %v2810
        %v2994 = vunpack.c.h.b16 %v2810
        %v2995 = vunpack.c.l.b16 %v2811
        %v2996 = vunpack.c.h.b16 %v2811
        %v2997 = vunpack.c.l.b16 %v2812
        %v2998 = vunpack.c.h.b16 %v2812
        %v2999 = vunpack.c.l.b16 %v2813
        %v3000 = vunpack.c.h.b16 %v2813
        %v3001 = vunpack.c.l.b16 %v2814
        %v3002 = vunpack.c.h.b16 %v2814
        %v3003 = vunpack.c.l.b16 %v2815
        %v3004 = vunpack.c.h.b16 %v2815
        %v3005 = vunpack.c.l.b16 %v2816
        %v3006 = vunpack.c.h.b16 %v2816
        %v3007 = vunpack.c.l.b16 %v2817
        %v3008 = vunpack.c.h.b16 %v2817
        %v3009 = vunpack.c.l.b16 %v2818
        %v3010 = vunpack.c.h.b16 %v2818
        %v3011 = vunpack.c.l.b16 %v2819
        %v3012 = vunpack.c.h.b16 %v2819
        %v3013 = vunpack.c.l.b16 %v2820
        %v3014 = vunpack.c.h.b16 %v2820
        %v3015 = vunpack.c.l.b16 %v2821
        %v3016 = vunpack.c.h.b16 %v2821
        %v3017 = vunpack.c.l.b16 %v2822
        %v3018 = vunpack.c.h.b16 %v2822
        %v3019 = vunpack.c.l.b16 %v2823
        %v3020 = vunpack.c.h.b16 %v2823
        %v3021 = vunpack.c.l.b16 %v2824
        %v3022 = vunpack.c.h.b16 %v2824
        %v3023 = vunpack.c.l.b16 %v2825
        %v3024 = vunpack.c.h.b16 %v2825
        %v3025 = vunpack.c.l.b16 %v2826
        %v3026 = vunpack.c.h.b16 %v2826
        %v3027 = vunpack.c.l.b16 %v2827
        %v3028 = vunpack.c.h.b16 %v2827
        %v3029 = vunpack.c.l.b16 %v2828
        %v3030 = vunpack.c.h.b16 %v2828
        %v3031 = vunpack.c.l.b16 %v2829
        %v3032 = vunpack.c.h.b16 %v2829
        %v3033 = vunpack.c.l.b16 %v2830
        %v3034 = vunpack.c.h.b16 %v2830
        %v3035 = vunpack.c.l.b16 %v2831
        %v3036 = vunpack.c.h.b16 %v2831
        %v3037 = vunpack.c.l.b16 %v2832
        %v3038 = vunpack.c.h.b16 %v2832
        %v3039 = vunpack.c.l.b16 %v2833
        %v3040 = vunpack.c.h.b16 %v2833
        %v3041 = vunpack.c.l.b16 %v2834
        %v3042 = vunpack.c.h.b16 %v2834
        %v3043 = vunpack.c.l.b16 %v2835
        %v3044 = vunpack.c.h.b16 %v2835
        %v3045 = vunpack.c.l.b16 %v2836
        %v3046 = vunpack.c.h.b16 %v2836
        %v3047 = vunpack.c.l.b16 %v2837
        %v3048 = vunpack.c.h.b16 %v2837
        %v3049 = vunpack.c.l.b16 %v2838
        %v3050 = vunpack.c.h.b16 %v2838
        %v3051 = vunpack.c.l.b16 %v2839
        %v3052 = vunpack.c.h.b16 %v2839
        %v3053 = vunpack.c.l.b16 %v2840
        %v3054 = vunpack.c.h.b16 %v2840
        %v3055 = vunpack.c.l.b16 %v2841
        %v3056 = vunpack.c.h.b16 %v2841
        %v3057 = vunpack.c.l.b16 %v2842
        %v3058 = vunpack.c.h.b16 %v2842
        %v3059 = vunpack.c.l.b16 %v2843
        %v3060 = vunpack.c.h.b16 %v2843
        %v3061 = vunpack.c.l.b16 %v2844
        %v3062 = vunpack.c.h.b16 %v2844
        %v3063 = vunpack.c.l.b16 %v2845
        %v3064 = vunpack.c.h.b16 %v2845
        %v3065 = vunpack.c.l.b16 %v2846
        %v3066 = vunpack.c.h.b16 %v2846
        %v3067 = vunpack.c.l.b16 %v2847
        %v3068 = vunpack.c.h.b16 %v2847
        %v3069 = vunpack.c.l.b16 %v2848
        %v3070 = vunpack.c.h.b16 %v2848
        %v3071 = vunpack.c.l.b16 %v2849
        %v3072 = vunpack.c.h.b16 %v2849
        %v3073 = vunpack.c.l.b16 %v2850
        %v3074 = vunpack.c.h.b16 %v2850
        %v3075 = vunpack.c.l.b16 %v2851
        %v3076 = vunpack.c.h.b16 %v2851
        %v3077 = vunpack.c.l.b16 %v2852
        %v3078 = vunpack.c.h.b16 %v2852
        %v3079 = vunpack.c.l.b16 %v2853
        %v3080 = vunpack.c.h.b16 %v2853
        %v3081 = vunpack.c.l.b16 %v2854
        %v3082 = vunpack.c.h.b16 %v2854
        %v3083 = vunpack.c.l.b16 %v2855
        %v3084 = vunpack.c.h.b16 %v2855
        %v3085 = vunpack.c.l.b16 %v2856
        %v3086 = vunpack.c.h.b16 %v2856
        %v3087 = vunpack.c.l.b16 %v2857
        %v3088 = vunpack.c.h.b16 %v2857
        %v3089 = vunpack.c.l.b16 %v2858
        %v3090 = vunpack.c.h.b16 %v2858
        %v3091 = vunpack.c.l.b16 %v2859
        %v3092 = vunpack.c.h.b16 %v2859
        %v3093 = vunpack.c.l.b16 %v2860
        %v3094 = vunpack.c.h.b16 %v2860
        %v3095 = vunpack.c.l.b16 %v2861
        %v3096 = vunpack.c.h.b16 %v2861
        %v3097 = vunpack.c.l.b16 %v2862
        %v3098 = vunpack.c.h.b16 %v2862
        %v3099 = vunpack.c.l.b16 %v2863
        %v3100 = vunpack.c.h.b16 %v2863
        %v3101 = vunpack.c.l.b16 %v2864
        %v3102 = vunpack.c.h.b16 %v2864
        %v3103 = vunpack.c.l.b16 %v2865
        %v3104 = vunpack.c.h.b16 %v2865
        %v3105 = vunpack.c.l.b16 %v2866
        %v3106 = vunpack.c.h.b16 %v2866
        %v3107 = vunpack.c.l.b16 %v2867
        %v3108 = vunpack.c.h.b16 %v2867
        %v3109 = vunpack.c.l.b16 %v2868
        %v3110 = vunpack.c.h.b16 %v2868
        %v3111 = vunpack.c.l.b16 %v2869
        %v3112 = vunpack.c.h.b16 %v2869
        %v3113 = vunpack.c.l.b16 %v2870
        %v3114 = vunpack.c.h.b16 %v2870
        %v3115 = vunpack.c.l.b16 %v2871
        %v3116 = vunpack.c.h.b16 %v2871
        %v3117 = vunpack.c.l.b16 %v2872
        %v3118 = vunpack.c.h.b16 %v2872
        %v3119 = vunpack.c.l.b16 %v2873
        %v3120 = vunpack.c.h.b16 %v2873
        %v3121 = vunpack.c.l.b16 %v2874
        %v3122 = vunpack.c.h.b16 %v2874
        %v3123 = vunpack.c.l.b16 %v2875
        %v3124 = vunpack.c.h.b16 %v2875
        %v3125 = vunpack.c.l.b16 %v2876
        %v3126 = vunpack.c.h.b16 %v2876
        %v3127 = vunpack.c.l.b16 %v2877
        %v3128 = vunpack.c.h.b16 %v2877
        %v3129 = vunpack.c.l.b16 %v2878
        %v3130 = vunpack.c.h.b16 %v2878
        %v3131 = vpack.c.b16 %v2973, %v2971
        %v3132 = vpack.c.b16 %v2974, %v2972
        %v3133 = vpack.c.b16 %v2977, %v2975
        %v3134 = vpack.c.b16 %v2978, %v2976
        %v3135 = vpack.c.b16 %v2981, %v2979
        %v3136 = vpack.c.b16 %v2982, %v2980
        %v3137 = vpack.c.b16 %v2985, %v2983
        %v3138 = vpack.c.b16 %v2986, %v2984
        %v3139 = vpack.c.b16 %v2989, %v2987
        %v3140 = vpack.c.b16 %v2990, %v2988
        %v3141 = vpack.c.b16 %v2993, %v2991
        %v3142 = vpack.c.b16 %v2994, %v2992
        %v3143 = vpack.c.b16 %v2997, %v2995
        %v3144 = vpack.c.b16 %v2998, %v2996
        %v3145 = vpack.c.b16 %v3001, %v2999
        %v3146 = vpack.c.b16 %v3002, %v3000
        %v3147 = vpack.c.b16 %v3005, %v3003
        %v3148 = vpack.c.b16 %v3006, %v3004
        %v3149 = vpack.c.b16 %v3009, %v3007
        %v3150 = vpack.c.b16 %v3010, %v3008
        %v3151 = vpack.c.b16 %v3013, %v3011
        %v3152 = vpack.c.b16 %v3014, %v3012
        %v3153 = vpack.c.b16 %v3017, %v3015
        %v3154 = vpack.c.b16 %v3018, %v3016
        %v3155 = vpack.c.b16 %v3021, %v3019
        %v3156 = vpack.c.b16 %v3022, %v3020
        %v3157 = vpack.c.b16 %v3025, %v3023
        %v3158 = vpack.c.b16 %v3026, %v3024
        %v3159 = vpack.c.b16 %v3029, %v3027
        %v3160 = vpack.c.b16 %v3030, %v3028
        %v3161 = vpack.c.b16 %v3033, %v3031
        %v3162 = vpack.c.b16 %v3034, %v3032
        %v3163 = vpack.c.b16 %v3037, %v3035
        %v3164 = vpack.c.b16 %v3038, %v3036
        %v3165 = vpack.c.b16 %v3041, %v3039
        %v3166 = vpack.c.b16 %v3042, %v3040
        %v3167 = vpack.c.b16 %v3045, %v3043
        %v3168 = vpack.c.b16 %v3046, %v3044
        %v3169 = vpack.c.b16 %v3049, %v3047
        %v3170 = vpack.c.b16 %v3050, %v3048
        %v3171 = vpack.c.b16 %v3053, %v3051
        %v3172 = vpack.c.b16 %v3054, %v3052
        %v3173 = vpack.c.b16 %v3057, %v3055
        %v3174 = vpack.c.b16 %v3058, %v3056
        %v3175 = vpack.c.b16 %v3061, %v3059
        %v3176 = vpack.c.b16 %v3062, %v3060
        %v3177 = vpack.c.b16 %v3065, %v3063
        %v3178 = vpack.c.b16 %v3066, %v3064
        %v3179 = vpack.c.b16 %v3069, %v3067
        %v3180 = vpack.c.b16 %v3070, %v3068
        %v3181 = vpack.c.b16 %v3073, %v3071
        %v3182 = vpack.c.b16 %v3074, %v3072
        %v3183 = vpack.c.b16 %v3077, %v3075
        %v3184 = vpack.c.b16 %v3078, %v3076
        %v3185 = vpack.c.b16 %v3081, %v3079
        %v3186 = vpack.c.b16 %v3082, %v3080
        %v3187 = vpack.c.b16 %v3085, %v3083
        %v3188 = vpack.c.b16 %v3086, %v3084
        %v3189 = vpack.c.b16 %v3089, %v3087
        %v3190 = vpack.c.b16 %v3090, %v3088
        %v3191 = vpack.c.b16 %v3093, %v3091
        %v3192 = vpack.c.b16 %v3094, %v3092
        %v3193 = vpack.c.b16 %v3097, %v3095
        %v3194 = vpack.c.b16 %v3098, %v3096
        %v3195 = vpack.c.b16 %v3101, %v3099
        %v3196 = vpack.c.b16 %v3102, %v3100
        %v3197 = vpack.c.b16 %v3105, %v3103
        %v3198 = vpack.c.b16 %v3106, %v3104
        %v3199 = vpack.c.b16 %v3109, %v3107
        %v3200 = vpack.c.b16 %v3110, %v3108
        %v3201 = vpack.c.b16 %v3113, %v3111
        %v3202 = vpack.c.b16 %v3114, %v3112
        %v3203 = vpack.c.b16 %v3117, %v3115
        %v3204 = vpack.c.b16 %v3118, %v3116
        %v3205 = vpack.c.b16 %v3121, %v3119
        %v3206 = vpack.c.b16 %v3122, %v3120
        %v3207 = vpack.c.b16 %v3125, %v3123
        %v3208 = vpack.c.b16 %v3126, %v3124
        %v3209 = vpack.c.b16 %v3129, %v3127
        %v3210 = vpack.c.b16 %v3130, %v3128
        %3291 = vmatprep.subr.bf16.mxu0 %v3132
        %3292 = vmatpush1.bf16.msra.mxu0 %v3131
        %3293 = vmatprep.subr.bf16.mxu0 %v3134
        %3294 = vmatpush1.bf16.msra.mxu0 %v3133
        %3295 = vmatprep.subr.bf16.mxu0 %v3136
        %3296 = vmatpush1.bf16.msra.mxu0 %v3135
        %3297 = vmatprep.subr.bf16.mxu0 %v3138
        %3298 = vmatpush1.bf16.msra.mxu0 %v3137
        %3299 = vmatprep.subr.bf16.mxu0 %v3140
        %3300 = vmatpush1.bf16.msra.mxu0 %v3139
        %3301 = vmatprep.subr.bf16.mxu0 %v3142
        %3302 = vmatpush1.bf16.msra.mxu0 %v3141
        %3303 = vmatprep.subr.bf16.mxu0 %v3144
        %3304 = vmatpush1.bf16.msra.mxu0 %v3143
        %3305 = vmatprep.subr.bf16.mxu0 %v3146
        %3306 = vmatpush1.bf16.msra.mxu0 %v3145
        %3307 = vmatprep.subr.bf16.mxu0 %v3148
        %3308 = vmatpush1.bf16.msra.mxu0 %v3147
        %3309 = vmatprep.subr.bf16.mxu0 %v3150
        %3310 = vmatpush1.bf16.msra.mxu0 %v3149
        %3311 = vmatprep.subr.bf16.mxu0 %v3152
        %3312 = vmatpush1.bf16.msra.mxu0 %v3151
        %3313 = vmatprep.subr.bf16.mxu0 %v3154
        %3314 = vmatpush1.bf16.msra.mxu0 %v3153
        %3315 = vmatprep.subr.bf16.mxu0 %v3156
        %3316 = vmatpush1.bf16.msra.mxu0 %v3155
        %3317 = vmatprep.subr.bf16.mxu0 %v3158
        %3318 = vmatpush1.bf16.msra.mxu0 %v3157
        %3319 = vmatprep.subr.bf16.mxu0 %v3160
        %3320 = vmatpush1.bf16.msra.mxu0 %v3159
        %3321 = vmatprep.subr.bf16.mxu0 %v3162
        %3322 = vmatpush1.bf16.msra.mxu0 %v3161
        %3323 = vmatprep.mubr.bf16.mxu0 %v2795
        %3324 = vmatmul.mubr.bf16.gmra.mrb[0].mxu0 %v2794
        %v3325 = vpop.f32.mrb[0].mxu0
        %v3326 = vadd.f32 %v2884, %v3325
        %v3327 = vpop.f32.mrb[0].mxu0
        %v3328 = vadd.f32 %v2888, %v3327
        %v3329 = vpop.f32.mrb[0].mxu0
        %v3330 = vadd.f32 %v2884, %v3329
        %v3331 = vpop.f32.mrb[0].mxu0
        %v3332 = vadd.f32 %v2888, %v3331
        %3333 = vdwg.mxu0
        %3334 = vmatprep.subr.bf16.mxu0 %v3164
        %3335 = vmatpush1.bf16.msra.mxu0 %v3163
        %3336 = vmatprep.subr.bf16.mxu0 %v3166
        %3337 = vmatpush1.bf16.msra.mxu0 %v3165
        %3338 = vmatprep.subr.bf16.mxu0 %v3168
        %3339 = vmatpush1.bf16.msra.mxu0 %v3167
        %3340 = vmatprep.subr.bf16.mxu0 %v3170
        %3341 = vmatpush1.bf16.msra.mxu0 %v3169
        %3342 = vmatprep.subr.bf16.mxu0 %v3172
        %3343 = vmatpush1.bf16.msra.mxu0 %v3171
        %3344 = vmatprep.subr.bf16.mxu0 %v3174
        %3345 = vmatpush1.bf16.msra.mxu0 %v3173
        %3346 = vmatprep.subr.bf16.mxu0 %v3176
        %3347 = vmatpush1.bf16.msra.mxu0 %v3175
        %3348 = vmatprep.subr.bf16.mxu0 %v3178
        %3349 = vmatpush1.bf16.msra.mxu0 %v3177
        %3350 = vmatprep.subr.bf16.mxu0 %v3180
        %3351 = vmatpush1.bf16.msra.mxu0 %v3179
        %3352 = vmatprep.subr.bf16.mxu0 %v3182
        %3353 = vmatpush1.bf16.msra.mxu0 %v3181
        %3354 = vmatprep.subr.bf16.mxu0 %v3184
        %3355 = vmatpush1.bf16.msra.mxu0 %v3183
        %3356 = vmatprep.subr.bf16.mxu0 %v3186
        %3357 = vmatpush1.bf16.msra.mxu0 %v3185
        %3358 = vmatprep.subr.bf16.mxu0 %v3188
        %3359 = vmatpush1.bf16.msra.mxu0 %v3187
        %3360 = vmatprep.subr.bf16.mxu0 %v3190
        %3361 = vmatpush1.bf16.msra.mxu0 %v3189
        %3362 = vmatprep.subr.bf16.mxu0 %v3192
        %3363 = vmatpush1.bf16.msra.mxu0 %v3191
        %3364 = vmatprep.subr.bf16.mxu0 %v3194
        %3365 = vmatpush1.bf16.msra.mxu0 %v3193
        %3366 = vmatprep.mubr.bf16.mxu0 %v2797
        %3367 = vmatmul.mubr.bf16.gmra.mrb[0].mxu0 %v2796
        %v3368 = vpop.f32.mrb[0].mxu0
        %v3369 = vadd.f32 %v3326, %v3368
        %v3370 = vpop.f32.mrb[0].mxu0
        %v3371 = vadd.f32 %v3328, %v3370
        %v3372 = vpop.f32.mrb[0].mxu0
        %v3373 = vadd.f32 %v3330, %v3372
        %v3374 = vpop.f32.mrb[0].mxu0
        %v3375 = vadd.f32 %v3332, %v3374
        %3376 = vdwg.mxu0
        %3377 = vmatprep.subr.bf16.mxu0 %v3196
        %3378 = vmatpush1.bf16.msra.mxu0 %v3195
        %3379 = vmatprep.subr.bf16.mxu0 %v3198
        %3380 = vmatpush1.bf16.msra.mxu0 %v3197
        %3381 = vmatprep.subr.bf16.mxu0 %v3200
        %3382 = vmatpush1.bf16.msra.mxu0 %v3199
        %3383 = vmatprep.subr.bf16.mxu0 %v3202
        %3384 = vmatpush1.bf16.msra.mxu0 %v3201
        %3385 = vmatprep.subr.bf16.mxu0 %v3204
        %3386 = vmatpush1.bf16.msra.mxu0 %v3203
        %3387 = vmatprep.subr.bf16.mxu0 %v3206
        %3388 = vmatpush1.bf16.msra.mxu0 %v3205
        %3389 = vmatprep.subr.bf16.mxu0 %v3208
        %3390 = vmatpush1.bf16.msra.mxu0 %v3207
        %3391 = vmatprep.subr.bf16.mxu0 %v3210
        %3392 = vmatpush1.bf16.msra.mxu0 %v3209
        %3393 = vmatprep.subr.bf16.mxu0 0
        %3394 = vmatpush1.bf16.msra.mxu0 0
        %3395 = vmatprep.subr.bf16.mxu0 0
        %3396 = vmatpush1.bf16.msra.mxu0 0
        %3397 = vmatprep.subr.bf16.mxu0 0
        %3398 = vmatpush1.bf16.msra.mxu0 0
        %3399 = vmatprep.subr.bf16.mxu0 0
        %3400 = vmatpush1.bf16.msra.mxu0 0
        %3401 = vmatprep.subr.bf16.mxu0 0
        %3402 = vmatpush1.bf16.msra.mxu0 0
        %3403 = vmatprep.subr.bf16.mxu0 0
        %3404 = vmatpush1.bf16.msra.mxu0 0
        %3405 = vmatprep.subr.bf16.mxu0 0
        %3406 = vmatpush1.bf16.msra.mxu0 0
        %3407 = vmatprep.subr.bf16.mxu0 0
        %3408 = vmatpush1.bf16.msra.mxu0 0
        %3409 = vmatprep.mubr.bf16.mxu0 0
        %3410 = vmatmul.mubr.bf16.gmra.mrb[0].mxu0 %v2798
        %v3411 = vpop.f32.mrb[0].mxu0
        %v3412 = vadd.f32 %v3369, %v3411
        %v3413 = vpop.f32.mrb[0].mxu0
        %v3414 = vadd.f32 %v3371, %v3413
        %v3415 = vpop.f32.mrb[0].mxu0
        %v3416 = vadd.f32 %v3373, %v3415
        %v3417 = vpop.f32.mrb[0].mxu0
        %v3418 = vadd.f32 %v3375, %v3417
        %3419 = vdwg.mxu0
        %v3420 = vmax.f32 %v3412, 0.0
        %v3421 = vmax.f32 %v3414, 0.0
        %v3422 = vmax.f32 %v3416, 0.0
        %v3423 = vmax.f32 %v3418, 0.0
        %v3424 = vpack.c.bf16 %v3422, %v3420
        %v3425 = vpack.c.bf16 %v3423, %v3421
        %v3426 = vld [vmem:[#allocation14] sm:$0xff]
        %v3427 = vld [vmem:[#allocation14 + $0x8] sm:$0xff]
        %v3428 = vld [vmem:[#allocation14 + $0x10] sm:$0xff]
        %v3429 = vld [vmem:[#allocation14 + $0x18] sm:$0xff]
        %v3430 = vld [vmem:[#allocation14 + $0x20] sm:$0xff]
        %v3431 = vld [vmem:[#allocation14 + $0x28] sm:$0xff]
        %v3432 = vld [vmem:[#allocation14 + $0x30] sm:$0xff]
        %v3433 = vld [vmem:[#allocation14 + $0x38] sm:$0xff]
        %v3434 = vld [vmem:[#allocation14 + $0x40] sm:$0xff]
        %v3435 = vld [vmem:[#allocation14 + $0x48] sm:$0xff]
        %v3436 = vld [vmem:[#allocation14 + $0x50] sm:$0xff]
        %v3437 = vld [vmem:[#allocation14 + $0x58] sm:$0xff]
        %v3438 = vld [vmem:[#allocation14 + $0x60] sm:$0xff]
        %v3439 = vld [vmem:[#allocation14 + $0x68] sm:$0xff]
        %v3440 = vld [vmem:[#allocation14 + $0x70] sm:$0xff]
        %v3441 = vld [vmem:[#allocation14 + $0x78] sm:$0xff]
        %v3442 = vld [vmem:[#allocation14 + $0x80] sm:$0xff]
        %v3443 = vld [vmem:[#allocation14 + $0x88] sm:$0xff]
        %v3444 = vld [vmem:[#allocation14 + $0x90] sm:$0xff]
        %v3445 = vld [vmem:[#allocation14 + $0x98] sm:$0xff]
        %v3446 = vld [vmem:[#allocation14 + $0xa0] sm:$0xff]
        %v3447 = vld [vmem:[#allocation14 + $0xa8] sm:$0xff]
        %v3448 = vld [vmem:[#allocation14 + $0xb0] sm:$0xff]
        %v3449 = vld [vmem:[#allocation14 + $0xb8] sm:$0xff]
        %v3450 = vld [vmem:[#allocation14 + $0xc0] sm:$0xff]
        %v3451 = vld [vmem:[#allocation14 + $0xc8] sm:$0xff]
        %v3452 = vld [vmem:[#allocation14 + $0xd0] sm:$0xff]
        %v3453 = vld [vmem:[#allocation14 + $0xd8] sm:$0xff]
        %v3454 = vld [vmem:[#allocation14 + $0xe0] sm:$0xff]
        %v3455 = vld [vmem:[#allocation14 + $0xe8] sm:$0xff]
        %v3456 = vld [vmem:[#allocation14 + $0xf0] sm:$0xff]
        %v3457 = vld [vmem:[#allocation14 + $0xf8] sm:$0xff]
        %v3458 = vld [vmem:[#allocation14 + $0x100] sm:$0xff]
        %v3459 = vld [vmem:[#allocation14 + $0x108] sm:$0xff]
        %v3460 = vld [vmem:[#allocation14 + $0x110] sm:$0xff]
        %v3461 = vld [vmem:[#allocation14 + $0x118] sm:$0xff]
        %v3462 = vld [vmem:[#allocation14 + $0x120] sm:$0xff]
        %v3463 = vld [vmem:[#allocation14 + $0x128] sm:$0xff]
        %v3464 = vld [vmem:[#allocation14 + $0x130] sm:$0xff]
        %v3465 = vld [vmem:[#allocation14 + $0x138] sm:$0xff]
        %v3466 = vld [vmem:[#allocation14 + $0x140] sm:$0xff]
        %v3467 = vld [vmem:[#allocation14 + $0x148] sm:$0xff]
        %v3468 = vld [vmem:[#allocation14 + $0x150] sm:$0xff]
        %v3469 = vld [vmem:[#allocation14 + $0x158] sm:$0xff]
        %v3470 = vld [vmem:[#allocation14 + $0x160] sm:$0xff]
        %v3471 = vld [vmem:[#allocation14 + $0x168] sm:$0xff]
        %v3472 = vld [vmem:[#allocation14 + $0x170] sm:$0xff]
        %v3473 = vld [vmem:[#allocation14 + $0x178] sm:$0xff]
        %v3474 = vld [vmem:[#allocation14 + $0x180] sm:$0xff]
        %v3475 = vld [vmem:[#allocation14 + $0x188] sm:$0xff]
        %v3476 = vld [vmem:[#allocation14 + $0x190] sm:$0xff]
        %v3477 = vld [vmem:[#allocation14 + $0x198] sm:$0xff]
        %v3478 = vld [vmem:[#allocation14 + $0x1a0] sm:$0xff]
        %v3479 = vld [vmem:[#allocation14 + $0x1a8] sm:$0xff]
        %v3480 = vld [vmem:[#allocation14 + $0x1b0] sm:$0xff]
        %v3481 = vld [vmem:[#allocation14 + $0x1b8] sm:$0xff]
        %v3482 = vld [vmem:[#allocation14 + $0x1c0] sm:$0xff]
        %v3483 = vld [vmem:[#allocation14 + $0x1c8] sm:$0xff]
        %v3484 = vld [vmem:[#allocation14 + $0x1d0] sm:$0xff]
        %v3485 = vld [vmem:[#allocation14 + $0x1d8] sm:$0xff]
        %v3486 = vld [vmem:[#allocation14 + $0x1e0] sm:$0xff]
        %v3487 = vld [vmem:[#allocation14 + $0x1e8] sm:$0xff]
        %v3488 = vld [vmem:[#allocation14 + $0x1f0] sm:$0xff]
        %v3489 = vld [vmem:[#allocation14 + $0x1f8] sm:$0xff]
        %v3490 = vld [vmem:[%s12] sm:$0xf]
        %v3492 = vlaneseq
        %v3493 = vshrl.u32 %v3492, 7
        %v3494 = vsub.s32 0, %v3493
        %v3495 = vrot.slane %v3490, %v3494
        %v3496 = vlaneseq
        %v3497 = vshrl.u32 %v3496, 7
        %v3498 = vsub.s32 1, %v3497
        %v3499 = vrot.slane %v3490, %v3498
        %v3500 = vlaneseq
        %v3501 = vshrl.u32 %v3500, 7
        %v3502 = vsub.s32 2, %v3501
        %v3503 = vrot.slane %v3490, %v3502
        %v3504 = vlaneseq
        %v3505 = vshrl.u32 %v3504, 7
        %v3506 = vsub.s32 3, %v3505
        %v3507 = vrot.slane %v3490, %v3506
        %v3576 = vunpack.c.l.b16 %v3426
        %v3577 = vunpack.c.h.b16 %v3426
        %v3578 = vunpack.c.l.b16 %v3427
        %v3579 = vunpack.c.h.b16 %v3427
        %v3580 = vunpack.c.l.b16 %v3428
        %v3581 = vunpack.c.h.b16 %v3428
        %v3582 = vunpack.c.l.b16 %v3429
        %v3583 = vunpack.c.h.b16 %v3429
        %v3584 = vunpack.c.l.b16 %v3430
        %v3585 = vunpack.c.h.b16 %v3430
        %v3586 = vunpack.c.l.b16 %v3431
        %v3587 = vunpack.c.h.b16 %v3431
        %v3588 = vunpack.c.l.b16 %v3432
        %v3589 = vunpack.c.h.b16 %v3432
        %v3590 = vunpack.c.l.b16 %v3433
        %v3591 = vunpack.c.h.b16 %v3433
        %v3592 = vunpack.c.l.b16 %v3434
        %v3593 = vunpack.c.h.b16 %v3434
        %v3594 = vunpack.c.l.b16 %v3435
        %v3595 = vunpack.c.h.b16 %v3435
        %v3596 = vunpack.c.l.b16 %v3436
        %v3597 = vunpack.c.h.b16 %v3436
        %v3598 = vunpack.c.l.b16 %v3437
        %v3599 = vunpack.c.h.b16 %v3437
        %v3600 = vunpack.c.l.b16 %v3438
        %v3601 = vunpack.c.h.b16 %v3438
        %v3602 = vunpack.c.l.b16 %v3439
        %v3603 = vunpack.c.h.b16 %v3439
        %v3604 = vunpack.c.l.b16 %v3440
        %v3605 = vunpack.c.h.b16 %v3440
        %v3606 = vunpack.c.l.b16 %v3441
        %v3607 = vunpack.c.h.b16 %v3441
        %v3608 = vunpack.c.l.b16 %v3442
        %v3609 = vunpack.c.h.b16 %v3442
        %v3610 = vunpack.c.l.b16 %v3443
        %v3611 = vunpack.c.h.b16 %v3443
        %v3612 = vunpack.c.l.b16 %v3444
        %v3613 = vunpack.c.h.b16 %v3444
        %v3614 = vunpack.c.l.b16 %v3445
        %v3615 = vunpack.c.h.b16 %v3445
        %v3616 = vunpack.c.l.b16 %v3446
        %v3617 = vunpack.c.h.b16 %v3446
        %v3618 = vunpack.c.l.b16 %v3447
        %v3619 = vunpack.c.h.b16 %v3447
        %v3620 = vunpack.c.l.b16 %v3448
        %v3621 = vunpack.c.h.b16 %v3448
        %v3622 = vunpack.c.l.b16 %v3449
        %v3623 = vunpack.c.h.b16 %v3449
        %v3624 = vunpack.c.l.b16 %v3450
        %v3625 = vunpack.c.h.b16 %v3450
        %v3626 = vunpack.c.l.b16 %v3451
        %v3627 = vunpack.c.h.b16 %v3451
        %v3628 = vunpack.c.l.b16 %v3452
        %v3629 = vunpack.c.h.b16 %v3452
        %v3630 = vunpack.c.l.b16 %v3453
        %v3631 = vunpack.c.h.b16 %v3453
        %v3632 = vunpack.c.l.b16 %v3454
        %v3633 = vunpack.c.h.b16 %v3454
        %v3634 = vunpack.c.l.b16 %v3455
        %v3635 = vunpack.c.h.b16 %v3455
        %v3636 = vunpack.c.l.b16 %v3456
        %v3637 = vunpack.c.h.b16 %v3456
        %v3638 = vunpack.c.l.b16 %v3457
        %v3639 = vunpack.c.h.b16 %v3457
        %v3640 = vunpack.c.l.b16 %v3458
        %v3641 = vunpack.c.h.b16 %v3458
        %v3642 = vunpack.c.l.b16 %v3459
        %v3643 = vunpack.c.h.b16 %v3459
        %v3644 = vunpack.c.l.b16 %v3460
        %v3645 = vunpack.c.h.b16 %v3460
        %v3646 = vunpack.c.l.b16 %v3461
        %v3647 = vunpack.c.h.b16 %v3461
        %v3648 = vunpack.c.l.b16 %v3462
        %v3649 = vunpack.c.h.b16 %v3462
        %v3650 = vunpack.c.l.b16 %v3463
        %v3651 = vunpack.c.h.b16 %v3463
        %v3652 = vunpack.c.l.b16 %v3464
        %v3653 = vunpack.c.h.b16 %v3464
        %v3654 = vunpack.c.l.b16 %v3465
        %v3655 = vunpack.c.h.b16 %v3465
        %v3656 = vunpack.c.l.b16 %v3466
        %v3657 = vunpack.c.h.b16 %v3466
        %v3658 = vunpack.c.l.b16 %v3467
        %v3659 = vunpack.c.h.b16 %v3467
        %v3660 = vunpack.c.l.b16 %v3468
        %v3661 = vunpack.c.h.b16 %v3468
        %v3662 = vunpack.c.l.b16 %v3469
        %v3663 = vunpack.c.h.b16 %v3469
        %v3664 = vunpack.c.l.b16 %v3470
        %v3665 = vunpack.c.h.b16 %v3470
        %v3666 = vunpack.c.l.b16 %v3471
        %v3667 = vunpack.c.h.b16 %v3471
        %v3668 = vunpack.c.l.b16 %v3472
        %v3669 = vunpack.c.h.b16 %v3472
        %v3670 = vunpack.c.l.b16 %v3473
        %v3671 = vunpack.c.h.b16 %v3473
        %v3672 = vunpack.c.l.b16 %v3474
        %v3673 = vunpack.c.h.b16 %v3474
        %v3674 = vunpack.c.l.b16 %v3475
        %v3675 = vunpack.c.h.b16 %v3475
        %v3676 = vunpack.c.l.b16 %v3476
        %v3677 = vunpack.c.h.b16 %v3476
        %v3678 = vunpack.c.l.b16 %v3477
        %v3679 = vunpack.c.h.b16 %v3477
        %v3680 = vunpack.c.l.b16 %v3478
        %v3681 = vunpack.c.h.b16 %v3478
        %v3682 = vunpack.c.l.b16 %v3479
        %v3683 = vunpack.c.h.b16 %v3479
        %v3684 = vunpack.c.l.b16 %v3480
        %v3685 = vunpack.c.h.b16 %v3480
        %v3686 = vunpack.c.l.b16 %v3481
        %v3687 = vunpack.c.h.b16 %v3481
        %v3688 = vunpack.c.l.b16 %v3482
        %v3689 = vunpack.c.h.b16 %v3482
        %v3690 = vunpack.c.l.b16 %v3483
        %v3691 = vunpack.c.h.b16 %v3483
        %v3692 = vunpack.c.l.b16 %v3484
        %v3693 = vunpack.c.h.b16 %v3484
        %v3694 = vunpack.c.l.b16 %v3485
        %v3695 = vunpack.c.h.b16 %v3485
        %v3696 = vunpack.c.l.b16 %v3486
        %v3697 = vunpack.c.h.b16 %v3486
        %v3698 = vunpack.c.l.b16 %v3487
        %v3699 = vunpack.c.h.b16 %v3487
        %v3700 = vunpack.c.l.b16 %v3488
        %v3701 = vunpack.c.h.b16 %v3488
        %v3702 = vunpack.c.l.b16 %v3489
        %v3703 = vunpack.c.h.b16 %v3489
        %v3704 = vpack.c.b16 %v3580, %v3576
        %v3705 = vpack.c.b16 %v3581, %v3577
        %v3706 = vpack.c.b16 %v3582, %v3578
        %v3707 = vpack.c.b16 %v3583, %v3579
        %v3708 = vpack.c.b16 %v3588, %v3584
        %v3709 = vpack.c.b16 %v3589, %v3585
        %v3710 = vpack.c.b16 %v3590, %v3586
        %v3711 = vpack.c.b16 %v3591, %v3587
        %v3712 = vpack.c.b16 %v3596, %v3592
        %v3713 = vpack.c.b16 %v3597, %v3593
        %v3714 = vpack.c.b16 %v3598, %v3594
        %v3715 = vpack.c.b16 %v3599, %v3595
        %v3716 = vpack.c.b16 %v3604, %v3600
        %v3717 = vpack.c.b16 %v3605, %v3601
        %v3718 = vpack.c.b16 %v3606, %v3602
        %v3719 = vpack.c.b16 %v3607, %v3603
        %v3720 = vpack.c.b16 %v3612, %v3608
        %v3721 = vpack.c.b16 %v3613, %v3609
        %v3722 = vpack.c.b16 %v3614, %v3610
        %v3723 = vpack.c.b16 %v3615, %v3611
        %v3724 = vpack.c.b16 %v3620, %v3616
        %v3725 = vpack.c.b16 %v3621, %v3617
        %v3726 = vpack.c.b16 %v3622, %v3618
        %v3727 = vpack.c.b16 %v3623, %v3619
        %v3728 = vpack.c.b16 %v3628, %v3624
        %v3729 = vpack.c.b16 %v3629, %v3625
        %v3730 = vpack.c.b16 %v3630, %v3626
        %v3731 = vpack.c.b16 %v3631, %v3627
        %v3732 = vpack.c.b16 %v3636, %v3632
        %v3733 = vpack.c.b16 %v3637, %v3633
        %v3734 = vpack.c.b16 %v3638, %v3634
        %v3735 = vpack.c.b16 %v3639, %v3635
        %v3736 = vpack.c.b16 %v3644, %v3640
        %v3737 = vpack.c.b16 %v3645, %v3641
        %v3738 = vpack.c.b16 %v3646, %v3642
        %v3739 = vpack.c.b16 %v3647, %v3643
        %v3740 = vpack.c.b16 %v3652, %v3648
        %v3741 = vpack.c.b16 %v3653, %v3649
        %v3742 = vpack.c.b16 %v3654, %v3650
        %v3743 = vpack.c.b16 %v3655, %v3651
        %v3744 = vpack.c.b16 %v3660, %v3656
        %v3745 = vpack.c.b16 %v3661, %v3657
        %v3746 = vpack.c.b16 %v3662, %v3658
        %v3747 = vpack.c.b16 %v3663, %v3659
        %v3748 = vpack.c.b16 %v3668, %v3664
        %v3749 = vpack.c.b16 %v3669, %v3665
        %v3750 = vpack.c.b16 %v3670, %v3666
        %v3751 = vpack.c.b16 %v3671, %v3667
        %v3752 = vpack.c.b16 %v3676, %v3672
        %v3753 = vpack.c.b16 %v3677, %v3673
        %v3754 = vpack.c.b16 %v3678, %v3674
        %v3755 = vpack.c.b16 %v3679, %v3675
        %v3756 = vpack.c.b16 %v3684, %v3680
        %v3757 = vpack.c.b16 %v3685, %v3681
        %v3758 = vpack.c.b16 %v3686, %v3682
        %v3759 = vpack.c.b16 %v3687, %v3683
        %v3760 = vpack.c.b16 %v3692, %v3688
        %v3761 = vpack.c.b16 %v3693, %v3689
        %v3762 = vpack.c.b16 %v3694, %v3690
        %v3763 = vpack.c.b16 %v3695, %v3691
        %v3764 = vpack.c.b16 %v3700, %v3696
        %v3765 = vpack.c.b16 %v3701, %v3697
        %v3766 = vpack.c.b16 %v3702, %v3698
        %v3767 = vpack.c.b16 %v3703, %v3699
        %3832 = vmatprep.subr.bf16.mxu0 %v3705
        %3833 = vmatpush1.bf16.msra.mxu0 %v3704
        %3834 = vmatprep.subr.bf16.mxu0 %v3709
        %3835 = vmatpush1.bf16.msra.mxu0 %v3708
        %3836 = vmatprep.subr.bf16.mxu0 %v3713
        %3837 = vmatpush1.bf16.msra.mxu0 %v3712
        %3838 = vmatprep.subr.bf16.mxu0 %v3717
        %3839 = vmatpush1.bf16.msra.mxu0 %v3716
        %3840 = vmatprep.subr.bf16.mxu0 %v3721
        %3841 = vmatpush1.bf16.msra.mxu0 %v3720
        %3842 = vmatprep.subr.bf16.mxu0 %v3725
        %3843 = vmatpush1.bf16.msra.mxu0 %v3724
        %3844 = vmatprep.subr.bf16.mxu0 %v3729
        %3845 = vmatpush1.bf16.msra.mxu0 %v3728
        %3846 = vmatprep.subr.bf16.mxu0 %v3733
        %3847 = vmatpush1.bf16.msra.mxu0 %v3732
        %3848 = vmatprep.subr.bf16.mxu0 %v3737
        %3849 = vmatpush1.bf16.msra.mxu0 %v3736
        %3850 = vmatprep.subr.bf16.mxu0 %v3741
        %3851 = vmatpush1.bf16.msra.mxu0 %v3740
        %3852 = vmatprep.subr.bf16.mxu0 %v3745
        %3853 = vmatpush1.bf16.msra.mxu0 %v3744
        %3854 = vmatprep.subr.bf16.mxu0 %v3749
        %3855 = vmatpush1.bf16.msra.mxu0 %v3748
        %3856 = vmatprep.subr.bf16.mxu0 %v3753
        %3857 = vmatpush1.bf16.msra.mxu0 %v3752
        %3858 = vmatprep.subr.bf16.mxu0 %v3757
        %3859 = vmatpush1.bf16.msra.mxu0 %v3756
        %3860 = vmatprep.subr.bf16.mxu0 %v3761
        %3861 = vmatpush1.bf16.msra.mxu0 %v3760
        %3862 = vmatprep.subr.bf16.mxu0 %v3765
        %3863 = vmatpush1.bf16.msra.mxu0 %v3764
        %3864 = vmatprep.mubr.bf16.mxu0 %v3425
        %3865 = vmatmul.mubr.bf16.gmra.mrb[0].mxu0 %v3424
        %v3866 = vpop.f32.mrb[0].mxu0
        %v3867 = vadd.f32 %v3495, %v3866
        %v3868 = vpop.f32.mrb[0].mxu0
        %v3869 = vadd.f32 %v3499, %v3868
        %v3870 = vpop.f32.mrb[0].mxu0
        %v3871 = vadd.f32 %v3495, %v3870
        %v3872 = vpop.f32.mrb[0].mxu0
        %v3873 = vadd.f32 %v3499, %v3872
        %3874 = vdwg.mxu0
        %3875 = vmatprep.subr.bf16.mxu0 %v3707
        %3876 = vmatpush1.bf16.msra.mxu0 %v3706
        %3877 = vmatprep.subr.bf16.mxu0 %v3711
        %3878 = vmatpush1.bf16.msra.mxu0 %v3710
        %3879 = vmatprep.subr.bf16.mxu0 %v3715
        %3880 = vmatpush1.bf16.msra.mxu0 %v3714
        %3881 = vmatprep.subr.bf16.mxu0 %v3719
        %3882 = vmatpush1.bf16.msra.mxu0 %v3718
        %3883 = vmatprep.subr.bf16.mxu0 %v3723
        %3884 = vmatpush1.bf16.msra.mxu0 %v3722
        %3885 = vmatprep.subr.bf16.mxu0 %v3727
        %3886 = vmatpush1.bf16.msra.mxu0 %v3726
        %3887 = vmatprep.subr.bf16.mxu0 %v3731
        %3888 = vmatpush1.bf16.msra.mxu0 %v3730
        %3889 = vmatprep.subr.bf16.mxu0 %v3735
        %3890 = vmatpush1.bf16.msra.mxu0 %v3734
        %3891 = vmatprep.subr.bf16.mxu0 %v3739
        %3892 = vmatpush1.bf16.msra.mxu0 %v3738
        %3893 = vmatprep.subr.bf16.mxu0 %v3743
        %3894 = vmatpush1.bf16.msra.mxu0 %v3742
        %3895 = vmatprep.subr.bf16.mxu0 %v3747
        %3896 = vmatpush1.bf16.msra.mxu0 %v3746
        %3897 = vmatprep.subr.bf16.mxu0 %v3751
        %3898 = vmatpush1.bf16.msra.mxu0 %v3750
        %3899 = vmatprep.subr.bf16.mxu0 %v3755
        %3900 = vmatpush1.bf16.msra.mxu0 %v3754
        %3901 = vmatprep.subr.bf16.mxu0 %v3759
        %3902 = vmatpush1.bf16.msra.mxu0 %v3758
        %3903 = vmatprep.subr.bf16.mxu0 %v3763
        %3904 = vmatpush1.bf16.msra.mxu0 %v3762
        %3905 = vmatprep.subr.bf16.mxu0 %v3767
        %3906 = vmatpush1.bf16.msra.mxu0 %v3766
        %3907 = vmatprep.mubr.bf16.mxu0 %v3425
        %3908 = vmatmul.mubr.bf16.gmra.mrb[0].mxu0 %v3424
        %v3909 = vpop.f32.mrb[0].mxu0
        %v3910 = vadd.f32 %v3503, %v3909
        %v3911 = vpop.f32.mrb[0].mxu0
        %v3912 = vadd.f32 %v3507, %v3911
        %v3913 = vpop.f32.mrb[0].mxu0
        %v3914 = vadd.f32 %v3503, %v3913
        %v3915 = vpop.f32.mrb[0].mxu0
        %v3916 = vadd.f32 %v3507, %v3915
        %3917 = vdwg.mxu0
        %v3918 = vld [vmem:[#allocation16] sm:$0xf]
        %v3919 = vld [vmem:[#allocation16 + $0x4] sm:$0xf]
        %v3920 = vld [vmem:[#allocation16 + $0x8] sm:$0xf]
        %v3921 = vld [vmem:[#allocation16 + $0xc] sm:$0xf]
        %v3922 = vld [vmem:[#allocation16 + $0x10] sm:$0xf]
        %v3923 = vld [vmem:[#allocation16 + $0x14] sm:$0xf]
        %v3924 = vld [vmem:[#allocation16 + $0x18] sm:$0xf]
        %v3925 = vld [vmem:[#allocation16 + $0x1c] sm:$0xf]
        %v3926 = vld [vmem:[#allocation16 + $0x20] sm:$0xf]
        %v3927 = vld [vmem:[#allocation16 + $0x24] sm:$0xf]
        %v3928 = vld [vmem:[#allocation16 + $0x28] sm:$0xf]
        %v3929 = vld [vmem:[#allocation16 + $0x2c] sm:$0xf]
        %v3930 = vld [vmem:[#allocation16 + $0x30] sm:$0xf]
        %v3931 = vld [vmem:[#allocation16 + $0x34] sm:$0xf]
        %v3932 = vld [vmem:[#allocation16 + $0x38] sm:$0xf]
        %v3933 = vld [vmem:[#allocation16 + $0x3c] sm:$0xf]
        %v3934 = vld [vmem:[%s14] sm:$0x1]
        %v3936 = vlaneseq
        %v3937 = vshrl.u32 %v3936, 7
        %v3938 = vsub.s32 0, %v3937
        %v3939 = vrot.slane %v3934, %v3938
        %v3957 = vunpack.c.l.b16 %v3918
        %v3958 = vunpack.c.l.b16 %v3919
        %v3959 = vunpack.c.l.b16 %v3920
        %v3960 = vunpack.c.l.b16 %v3921
        %v3961 = vunpack.c.l.b16 %v3922
        %v3962 = vunpack.c.l.b16 %v3923
        %v3963 = vunpack.c.l.b16 %v3924
        %v3964 = vunpack.c.l.b16 %v3925
        %v3965 = vunpack.c.l.b16 %v3926
        %v3966 = vunpack.c.l.b16 %v3927
        %v3967 = vunpack.c.l.b16 %v3928
        %v3968 = vunpack.c.l.b16 %v3929
        %v3969 = vunpack.c.l.b16 %v3930
        %v3970 = vunpack.c.l.b16 %v3931
        %v3971 = vunpack.c.l.b16 %v3932
        %v3972 = vunpack.c.l.b16 %v3933
        %v3973 = vpack.c.b16 %v3958, %v3957
        %v3974 = vpack.c.b16 %v3960, %v3959
        %v3975 = vpack.c.b16 %v3962, %v3961
        %v3976 = vpack.c.b16 %v3964, %v3963
        %v3977 = vpack.c.b16 %v3966, %v3965
        %v3978 = vpack.c.b16 %v3968, %v3967
        %v3979 = vpack.c.b16 %v3970, %v3969
        %v3980 = vpack.c.b16 %v3972, %v3971
        %3989 = vmatprep.subr.bf16.mxu0 0
        %3990 = vmatpush1.bf16.msra.mxu0 %v3973
        %3991 = vmatprep.subr.bf16.mxu0 0
        %3992 = vmatpush1.bf16.msra.mxu0 %v3974
        %3993 = vmatprep.subr.bf16.mxu0 0
        %3994 = vmatpush1.bf16.msra.mxu0 %v3975
        %3995 = vmatprep.subr.bf16.mxu0 0
        %3996 = vmatpush1.bf16.msra.mxu0 %v3976
        %3997 = vmatprep.subr.bf16.mxu0 0
        %3998 = vmatpush1.bf16.msra.mxu0 %v3977
        %3999 = vmatprep.subr.bf16.mxu0 0
        %4000 = vmatpush1.bf16.msra.mxu0 %v3978
        %4001 = vmatprep.subr.bf16.mxu0 0
        %4002 = vmatpush1.bf16.msra.mxu0 %v3979
        %4003 = vmatprep.subr.bf16.mxu0 0
        %4004 = vmatpush1.bf16.msra.mxu0 %v3980
        %4005 = vmatprep.subr.bf16.mxu0 0
        %4006 = vmatpush1.bf16.msra.mxu0 0
        %4007 = vmatprep.subr.bf16.mxu0 0
        %4008 = vmatpush1.bf16.msra.mxu0 0
        %4009 = vmatprep.subr.bf16.mxu0 0
        %4010 = vmatpush1.bf16.msra.mxu0 0
        %4011 = vmatprep.subr.bf16.mxu0 0
        %4012 = vmatpush1.bf16.msra.mxu0 0
        %4013 = vmatprep.subr.bf16.mxu0 0
        %4014 = vmatpush1.bf16.msra.mxu0 0
        %4015 = vmatprep.subr.bf16.mxu0 0
        %4016 = vmatpush1.bf16.msra.mxu0 0
        %4017 = vmatprep.subr.bf16.mxu0 0
        %4018 = vmatpush1.bf16.msra.mxu0 0
        %4019 = vmatprep.subr.bf16.mxu0 0
        %4020 = vmatpush1.bf16.msra.mxu0 0
        %4021 = vmatprep.mubr.bf16.mxu0 0
        %4022 = vmatmul.mubr.bf16.gmra.mrb[0].mxu0 %v2370
        %v4023 = vpop.f32.mrb[0].mxu0
        %v4024 = vadd.f32 %v3939, %v4023
        %v4025 = vpop.f32.mrb[0].mxu0
        %v4026 = vpop.f32.mrb[0].mxu0
        %v4027 = vadd.f32 %v3939, %v4026
        %v4028 = vpop.f32.mrb[0].mxu0
        %4029 = vdwg.mxu0
        %v4030 = vmax.f32 %v4024, 0.0
        %v4031 = vmax.f32 %v4027, 0.0
        %v4032 = vpack.c.bf16 %v4031, %v4030
        %v4033 = vld [vmem:[#allocation17] sm:$0xf]
        %v4034 = vld [vmem:[#allocation17 + $0x4] sm:$0xf]
        %v4035 = vld [vmem:[#allocation17 + $0x8] sm:$0xf]
        %v4036 = vld [vmem:[#allocation17 + $0xc] sm:$0xf]
        %v4037 = vld [vmem:[#allocation17 + $0x10] sm:$0xf]
        %v4038 = vld [vmem:[#allocation17 + $0x14] sm:$0xf]
        %v4039 = vld [vmem:[#allocation17 + $0x18] sm:$0xf]
        %v4040 = vld [vmem:[#allocation17 + $0x1c] sm:$0xf]
        %v4041 = vld [vmem:[#allocation17 + $0x20] sm:$0xf]
        %v4042 = vld [vmem:[#allocation17 + $0x24] sm:$0xf]
        %v4043 = vld [vmem:[#allocation17 + $0x28] sm:$0xf]
        %v4044 = vld [vmem:[#allocation17 + $0x2c] sm:$0xf]
        %v4045 = vld [vmem:[#allocation17 + $0x30] sm:$0xf]
        %v4046 = vld [vmem:[#allocation17 + $0x34] sm:$0xf]
        %v4047 = vld [vmem:[#allocation17 + $0x38] sm:$0xf]
        %v4048 = vld [vmem:[#allocation17 + $0x3c] sm:$0xf]
        %v4049 = vld [vmem:[%s16] sm:$0x1]
        %v4051 = vlaneseq
        %v4052 = vshrl.u32 %v4051, 7
        %v4053 = vsub.s32 0, %v4052
        %v4054 = vrot.slane %v4049, %v4053
        %v4072 = vunpack.c.l.b16 %v4033
        %v4073 = vunpack.c.l.b16 %v4034
        %v4074 = vunpack.c.l.b16 %v4035
        %v4075 = vunpack.c.l.b16 %v4036
        %v4076 = vunpack.c.l.b16 %v4037
        %v4077 = vunpack.c.l.b16 %v4038
        %v4078 = vunpack.c.l.b16 %v4039
        %v4079 = vunpack.c.l.b16 %v4040
        %v4080 = vunpack.c.l.b16 %v4041
        %v4081 = vunpack.c.l.b16 %v4042
        %v4082 = vunpack.c.l.b16 %v4043
        %v4083 = vunpack.c.l.b16 %v4044
        %v4084 = vunpack.c.l.b16 %v4045
        %v4085 = vunpack.c.l.b16 %v4046
        %v4086 = vunpack.c.l.b16 %v4047
        %v4087 = vunpack.c.l.b16 %v4048
        %v4088 = vpack.c.b16 %v4073, %v4072
        %v4089 = vpack.c.b16 %v4075, %v4074
        %v4090 = vpack.c.b16 %v4077, %v4076
        %v4091 = vpack.c.b16 %v4079, %v4078
        %v4092 = vpack.c.b16 %v4081, %v4080
        %v4093 = vpack.c.b16 %v4083, %v4082
        %v4094 = vpack.c.b16 %v4085, %v4084
        %v4095 = vpack.c.b16 %v4087, %v4086
        %4104 = vmatprep.subr.bf16.mxu0 0
        %4105 = vmatpush1.bf16.msra.mxu0 %v4088
        %4106 = vmatprep.subr.bf16.mxu0 0
        %4107 = vmatpush1.bf16.msra.mxu0 %v4089
        %4108 = vmatprep.subr.bf16.mxu0 0
        %4109 = vmatpush1.bf16.msra.mxu0 %v4090
        %4110 = vmatprep.subr.bf16.mxu0 0
        %4111 = vmatpush1.bf16.msra.mxu0 %v4091
        %4112 = vmatprep.subr.bf16.mxu0 0
        %4113 = vmatpush1.bf16.msra.mxu0 %v4092
        %4114 = vmatprep.subr.bf16.mxu0 0
        %4115 = vmatpush1.bf16.msra.mxu0 %v4093
        %4116 = vmatprep.subr.bf16.mxu0 0
        %4117 = vmatpush1.bf16.msra.mxu0 %v4094
        %4118 = vmatprep.subr.bf16.mxu0 0
        %4119 = vmatpush1.bf16.msra.mxu0 %v4095
        %4120 = vmatprep.subr.bf16.mxu0 0
        %4121 = vmatpush1.bf16.msra.mxu0 0
        %4122 = vmatprep.subr.bf16.mxu0 0
        %4123 = vmatpush1.bf16.msra.mxu0 0
        %4124 = vmatprep.subr.bf16.mxu0 0
        %4125 = vmatpush1.bf16.msra.mxu0 0
        %4126 = vmatprep.subr.bf16.mxu0 0
        %4127 = vmatpush1.bf16.msra.mxu0 0
        %4128 = vmatprep.subr.bf16.mxu0 0
        %4129 = vmatpush1.bf16.msra.mxu0 0
        %4130 = vmatprep.subr.bf16.mxu0 0
        %4131 = vmatpush1.bf16.msra.mxu0 0
        %4132 = vmatprep.subr.bf16.mxu0 0
        %4133 = vmatpush1.bf16.msra.mxu0 0
        %4134 = vmatprep.subr.bf16.mxu0 0
        %4135 = vmatpush1.bf16.msra.mxu0 0
        %4136 = vmatprep.mubr.bf16.mxu0 0
        %4137 = vmatmul.mubr.bf16.gmra.mrb[0].mxu0 %v4032
        %v4138 = vpop.f32.mrb[0].mxu0
        %v4139 = vadd.f32 %v4054, %v4138
        %v4140 = vpop.f32.mrb[0].mxu0
        %v4141 = vpop.f32.mrb[0].mxu0
        %v4142 = vadd.f32 %v4054, %v4141
        %v4143 = vpop.f32.mrb[0].mxu0
        %4144 = vdwg.mxu0
        %v4145 = vpack.c.bf16 %v3871, %v3867
        %v4146 = vpack.c.bf16 %v3873, %v3869
        %v4147 = vpack.c.bf16 %v3914, %v3910
        %v4148 = vpack.c.bf16 %v3916, %v3912
        %v4153 = vunpack.c.l.b16 %v4145
        %v4154 = vunpack.c.l.b16 %v4146
        %v4155 = vunpack.c.l.b16 %v4147
        %v4156 = vunpack.c.l.b16 %v4148
        %v4157 = vunpack.c.h.b16 %v4145
        %v4158 = vunpack.c.h.b16 %v4146
        %v4159 = vunpack.c.h.b16 %v4147
        %v4160 = vunpack.c.h.b16 %v4148
        %v4161 = vpack.c.b16 %v4154, %v4153
        %v4162 = vpack.c.b16 %v4156, %v4155
        %v4163 = vpack.c.b16 %v4158, %v4157
        %v4164 = vpack.c.b16 %v4160, %v4159
        %4169 = vst [vmem:[%s727] sm:$0xff] %v4161
        %4170 = vst [vmem:[%s727 + $0x8] sm:$0xff] %v4162
        %4171 = vst [vmem:[%s727 + $0x10] sm:$0xff] %v4163
        %4172 = vst [vmem:[%s727 + $0x18] sm:$0xff] %v4164
        %4173 = vst [vmem:[%s734] sm:$0xff] %v4139
        %4174 = vst [vmem:[%s734 + $0x8] sm:$0xff] %v4142
        %s4175 = sand.u32 %s414, 1
        %s4176 = scalar_lea.sflag [#allocation4], %s4175
        %s4177 = sand.u32 %s414, 1
        %s4178 = smul.addr %s4177, 32
        %s4179 = scalar_lea.vmem [#allocation19], %s4178
        %s4180 = sand.u32 %s440, 1
        %s4181 = scalar_lea.sflag [#allocation21], %s4180
        %s4182 = sand.u32 %s440, 1
        %s4183 = smul.addr %s4182, 16
        %s4184 = scalar_lea.vmem [#allocation20], %s4183
        // Predicated region
        $region129: #{tpu_custom_call.1} parent=87 // pred_check
          %p4185 = pneg %p424
        $region130: #{tpu_custom_call.1} parent=87 // pred_check_branch
          %4187 = sbr.rel (%p4185) target = $region132
        $region131: #{tpu_custom_call.1} parent=87 // pred_region
          %s4188 = smul.u32 2, %s44
          %s4190 = ssub.s32 512, 512
          %4191 = vsyncadd %s4176, %s4190
          %s4192 = smul.addr %s4188, 4
          %s4193 = smul.addr %s4192, 64
          %s4194 = scalar_lea.hbm %s17, %s4193
          %s4195 = sshll.u32 %s4179, 4
          %s4196 = int_to_ptr.vmem [resolvable:$true] %s4195
          %4201 = dma.vmem_to_hbm [thread:$0]  %s4196, 512, %s4194, %s4176, 256, 256, 16
        $region132: #{tpu_custom_call.1} parent=87 // pred_fallthru
          _
        // Predicated region
        $region133: #{tpu_custom_call.1} parent=87 // pred_check
          %p4202 = pneg %p450
        $region134: #{tpu_custom_call.1} parent=87 // pred_check_branch
          %4204 = sbr.rel (%p4202) target = $region136
        $region135: #{tpu_custom_call.1} parent=87 // pred_region
          %s4205 = smul.u32 2, %s44
          %s4207 = ssub.s32 256, 256
          %4208 = vsyncadd %s4181, %s4207
          %s4209 = smul.addr %s4205, 128
          %s4210 = scalar_lea.hbm %s18, %s4209
          %s4211 = sshll.u32 %s4184, 4
          %s4212 = int_to_ptr.vmem [resolvable:$true] %s4211
          %4217 = dma.vmem_to_hbm [thread:$0]  %s4212, 256, %s4210, %s4181, 128, 128, 8
        $region136: #{tpu_custom_call.1} parent=87 // pred_fallthru
          _
      $region88: #{tpu_custom_call.1} parent=5 // pred_fallthru
        _
      %p4218 = scmp.le.s32.totalorder 2, %s39
      // Predicated region
      $region137: #{tpu_custom_call.1} parent=5 // pred_check
        %p4219 = pneg %p4218
      $region138: #{tpu_custom_call.1} parent=5 // pred_check_branch
        %4221 = sbr.rel (%p4219) target = $region140
      $region139: #{tpu_custom_call.1} parent=5 // pred_region
        %s4222 = ssub.s32 %s39, 2
        // Predicated region
        $region141: #{tpu_custom_call.1} parent=139 // pred_check
          %p4223 = pneg %p430
        $region142: #{tpu_custom_call.1} parent=139 // pred_check_branch
          %4225 = sbr.rel (%p4223) target = $region144
        $region143: #{tpu_custom_call.1} parent=139 // pred_region
          %s4226 = sand.u32 %s415, 1
          %s4227 = scalar_lea.sflag [#allocation4], %s4226
          %s4228 = sand.u32 %s415, 1
          %s4229 = smul.addr %s4228, 32
          %s4230 = scalar_lea.vmem [#allocation19], %s4229
          %4231 = dma.done %s4227, 512
        $region144: #{tpu_custom_call.1} parent=139 // pred_fallthru
          _
        // Predicated region
        $region145: #{tpu_custom_call.1} parent=139 // pred_check
          %p4232 = pneg %p456
        $region146: #{tpu_custom_call.1} parent=139 // pred_check_branch
          %4234 = sbr.rel (%p4232) target = $region148
        $region147: #{tpu_custom_call.1} parent=139 // pred_region
          %s4235 = sand.u32 %s441, 1
          %s4236 = scalar_lea.sflag [#allocation21], %s4235
          %s4237 = sand.u32 %s441, 1
          %s4238 = smul.addr %s4237, 16
          %s4239 = scalar_lea.vmem [#allocation20], %s4238
          %4240 = dma.done %s4236, 256
        $region148: #{tpu_custom_call.1} parent=139 // pred_fallthru
          _
      $region140: #{tpu_custom_call.1} parent=5 // pred_fallthru
        _
    $region6: #{tpu_custom_call.1} parent=1 // loop_footer
      %s43 = sadd.s32 1, %s39
    $region7: #{tpu_custom_call.1} parent=1 // loop_footer_branch
      %38 = sbr.rel target = $region3
    $region8: #{tpu_custom_call.1} parent=1 // loop_exit
      _
    %4241 = vsyncpa [#allocation3], 1
    %s4242 = scalar_lea.sflag [#allocation3], 1
    %4243 = vsyncpa %s4242, 1
    %4244 = vsyncpa [#allocation6], 1
    %4245 = vsyncpa [#allocation9], 1
    %4246 = vsyncpa [#allocation12], 1
    %4247 = vsyncpa [#allocation15], 1
    %4248 = vsyncpa [#allocation18], 1
    %4249 = vsyncpa [#allocation4], 1
    %s4250 = scalar_lea.sflag [#allocation4], 1
    %4251 = vsyncpa %s4250, 1
    %4252 = vsyncpa [#allocation21], 1
    %s4253 = scalar_lea.sflag [#allocation21], 1
    %4254 = vsyncpa %s4253, 1

</llo_original>
